<compile_context>
chip_gen: v6e
topology: v6e:2x2x1
jax: 0.10.0
libtpu: 0.0.40
codegen_flags: <defaults>
</compile_context>

<pallas_src>
import functools

import jax
import jax.numpy as jnp
from jax import lax
from jax.experimental import pallas as pl
from jax.experimental.pallas import tpu as pltpu

PAD_IDX, SOS_IDX, EOS_IDX = 0, 1, 2
LANE = 128


def _round_up(x, m):
    return ((x + m - 1) // m) * m


# ----------------------------------------------------------------------------
# Pallas kernel #1: row-tiled linear layer  y = x @ W + b   (encoder side, runs once)
# ----------------------------------------------------------------------------
def _linear_kernel(x_ref, w_ref, b_ref, o_ref):
    o_ref[...] = (
        jnp.dot(x_ref[...], w_ref[...], preferred_element_type=jnp.float32)
        + b_ref[...]
    )


def linear(x, w, b, *, row_tile=512):
    """x: (..., Din), w: (Din, Dout), b: (1, Dout). Dout should be a multiple of 128."""
    orig_shape = x.shape
    din, dout = w.shape
    x2 = x.reshape(-1, din).astype(jnp.float32)
    rows = x2.shape[0]
    tile = min(row_tile, _round_up(rows, 8))
    rows_pad = _round_up(rows, tile)
    x2 = jnp.pad(x2, ((0, rows_pad - rows), (0, 0)))
    out = pl.pallas_call(
        _linear_kernel,
        out_shape=jax.ShapeDtypeStruct((rows_pad, dout), jnp.float32),
        grid=(rows_pad // tile,),
        in_specs=[
            pl.BlockSpec((tile, din), lambda i: (i, 0)),
            pl.BlockSpec((din, dout), lambda i: (0, 0)),
            pl.BlockSpec((1, dout), lambda i: (0, 0)),
        ],
        out_specs=pl.BlockSpec((tile, dout), lambda i: (i, 0)),
        compiler_params=pltpu.CompilerParams(dimension_semantics=("parallel",)),
    )(x2, w.astype(jnp.float32), b.astype(jnp.float32))
    return out[:rows].reshape(orig_shape[:-1] + (dout,))


# ----------------------------------------------------------------------------
# Pallas kernel #2: one fused decoder step
#   textual attention + visual attention (MXU) -> fused LSTM gate matmul ->
#   output projection (+ baked-in special-token mask) -> log-softmax
# ----------------------------------------------------------------------------
def _decode_step_kernel(
    emb_ref, h_ref, c_ref, ktxt_ref, tbias_ref, kvis_ref,
    wcat_ref, bcat_ref, wout_ref, bout_ref,
    logp_ref, hout_ref, cout_ref, *, hidden_dim: int,
):
    H = hidden_dim
    h = h_ref[...]                                   # (Bb, H) f32
    c = c_ref[...]                                   # (Bb, H) f32
    emb = emb_ref[...]                               # (Bb, H) f32
    ktxt = ktxt_ref[...]                             # (Bb, S, H) bf16
    kvis = kvis_ref[...]                             # (Bb, R, H) bf16
    h_b = h.astype(jnp.bfloat16)[:, None, :]         # (Bb, 1, H)

    # ---- textual attention (keys double as values) — MXU batched contractions ----
    s_txt = jnp.einsum("bqh,bsh->bqs", h_b, ktxt,
                       preferred_element_type=jnp.float32)[:, 0, :]        # (Bb, S)
    s_txt = s_txt + tbias_ref[...]                   # additive mask (0 / -1e30)
    s_txt = s_txt - jnp.max(s_txt, axis=-1, keepdims=True)
    e_txt = jnp.exp(s_txt)
    a_txt = e_txt * pl.reciprocal(jnp.sum(e_txt, axis=-1, keepdims=True), approx=True)
    ctx_txt = jnp.einsum("bqs,bsh->bqh", a_txt[:, None, :].astype(jnp.bfloat16),
                         ktxt, preferred_element_type=jnp.float32)[:, 0, :]  # (Bb, H)

    # ---- visual attention ----
    s_vis = jnp.einsum("bqh,brh->bqr", h_b, kvis,
                       preferred_element_type=jnp.float32)[:, 0, :]        # (Bb, R)
    s_vis = s_vis - jnp.max(s_vis, axis=-1, keepdims=True)
    e_vis = jnp.exp(s_vis)
    a_vis = e_vis * pl.reciprocal(jnp.sum(e_vis, axis=-1, keepdims=True), approx=True)
    ctx_vis = jnp.einsum("bqr,brh->bqh", a_vis[:, None, :].astype(jnp.bfloat16),
                         kvis, preferred_element_type=jnp.float32)[:, 0, :]  # (Bb, H)

    # ---- fused LSTM cell: x_cat = [emb ; ctx_txt ; ctx_vis ; h], one MXU pass ----
    x_cat = jnp.concatenate([emb, ctx_txt, ctx_vis, h], axis=-1).astype(jnp.bfloat16)
    gates = (
        jnp.dot(x_cat, wcat_ref[...], preferred_element_type=jnp.float32)
        + bcat_ref[...]
    )                                                # (Bb, 4H), 128-aligned gate slices
    i_g = jax.nn.sigmoid(gates[:, 0 * H:1 * H])
    f_g = jax.nn.sigmoid(gates[:, 1 * H:2 * H])
    g_g = jnp.tanh(gates[:, 2 * H:3 * H])
    o_g = jax.nn.sigmoid(gates[:, 3 * H:4 * H])
    c_new = f_g * c + i_g * g_g
    h_new = o_g * jnp.tanh(c_new)

    # ---- output projection (special-token + vocab-pad mask baked into bias) ----
    logits = (
        jnp.dot(h_new.astype(jnp.bfloat16), wout_ref[...],
                preferred_element_type=jnp.float32)
        + bout_ref[...]
    )                                                # (Bb, Vp)
    m = jnp.max(logits, axis=-1, keepdims=True)
    lse = m + jnp.log(jnp.sum(jnp.exp(logits - m), axis=-1, keepdims=True))

    logp_ref[...] = logits - lse
    hout_ref[...] = h_new
    cout_ref[...] = c_new


def decode_step(emb_tok, h, c, keys_txt, tbias, keys_vis, w_cat, b_cat, w_out, b_out):
    Bb_pad, H_pad = h.shape
    V_pad = w_out.shape[1]
    vmem = pl.BlockSpec(memory_space=pltpu.MemorySpace.VMEM)
    kern = functools.partial(_decode_step_kernel, hidden_dim=H_pad)
    out_shapes = (
        jax.ShapeDtypeStruct((Bb_pad, V_pad), jnp.float32),   # log-probs
        jax.ShapeDtypeStruct((Bb_pad, H_pad), jnp.float32),   # new h
        jax.ShapeDtypeStruct((Bb_pad, H_pad), jnp.float32),   # new c
    )
    return pl.pallas_call(
        kern,
        out_shape=out_shapes,
        in_specs=[vmem] * 10,
        out_specs=(vmem,) * 3,
    )(emb_tok, h, c, keys_txt, tbias, keys_vis, w_cat, b_cat, w_out, b_out)


# ----------------------------------------------------------------------------
# Deterministic synthetic "model" (encoder side) — plain JAX glue.
# TODO(synk): the wrapped model (CNN situation encoder + BiLSTM command encoder)
#             is external to SequenceGeneratorV2; replaced here by a deterministic
#             synthetic encoder with the same output interface.
# ----------------------------------------------------------------------------
def init_params(key, vocab, hidden, d_vis):
    ks = jax.random.split(key, 10)

    def w(k, shape, scale=0.15):
        return jax.random.normal(k, shape, jnp.float32) * scale

    return dict(
        emb=w(ks[0], (vocab, hidden)),
        w_enc=w(ks[1], (hidden, hidden)), b_enc=jnp.zeros((1, hidden), jnp.float32),
        w_vk=w(ks[2], (d_vis, hidden)), b_vk=jnp.zeros((1, hidden), jnp.float32),
        w_tk=w(ks[3], (hidden, hidden)), b_tk=jnp.zeros((1, hidden), jnp.float32),
        w_h2d=w(ks[4], (hidden, hidden)), b_h2d=jnp.zeros((1, hidden), jnp.float32),
        wih_e=w(ks[5], (hidden, 4 * hidden)),
        wih_t=w(ks[6], (hidden, 4 * hidden)),
        wih_v=w(ks[7], (hidden, 4 * hidden)),
        b_ih=jnp.zeros((1, 4 * hidden), jnp.float32),
        whh=w(ks[8], (hidden, 4 * hidden)),
        b_hh=jnp.zeros((1, 4 * hidden), jnp.float32),
        w_out=w(ks[9], (hidden, vocab)),
        b_out=jnp.zeros((1, vocab), jnp.float32),
    )


def prepare_params(raw):
    """Pad all dims to lane width, fuse the four LSTM gate matrices, cast decode weights to bf16."""
    V, H = raw["emb"].shape
    Dvis = raw["w_vk"].shape[0]
    Hp = _round_up(H, LANE)
    Vp = _round_up(V, LANE)
    G = 4 * Hp

    def pad2(a, r, c):
        return jnp.pad(a, ((0, r - a.shape[0]), (0, c - a.shape[1])))

    # fused LSTM gate weights: input = [emb ; ctx_txt ; ctx_vis ; h], gates [i,f,g,o]
    w_cat = jnp.zeros((G, G), jnp.float32)
    for r, wb in enumerate([raw["wih_e"], raw["wih_t"], raw["wih_v"], raw["whh"]]):
        for g in range(4):
            w_cat = w_cat.at[r * Hp:r * Hp + H, g * Hp:g * Hp + H].set(
                wb[:, g * H:(g + 1) * H])
    b_sum = raw["b_ih"] + raw["b_hh"]
    b_cat = jnp.zeros((1, G), jnp.float32)
    for g in range(4):
        b_cat = b_cat.at[:, g * Hp:g * Hp + H].set(b_sum[:, g * H:(g + 1) * H])

    return dict(
        emb=pad2(raw["emb"], V, Hp),                                  # (V, Hp) f32
        w_enc=pad2(raw["w_enc"], Hp, Hp), b_enc=pad2(raw["b_enc"], 1, Hp),
        w_tk=pad2(raw["w_tk"], Hp, Hp), b_tk=pad2(raw["b_tk"], 1, Hp),
        w_vk=pad2(raw["w_vk"], Dvis, Hp), b_vk=pad2(raw["b_vk"], 1, Hp),
        w_h2d=pad2(raw["w_h2d"], Hp, Hp), b_h2d=pad2(raw["b_h2d"], 1, Hp),
        w_cat=w_cat.astype(jnp.bfloat16),                             # (4Hp, 4Hp) bf16
        b_cat=b_cat,                                                  # (1, 4Hp) f32
        w_out=pad2(raw["w_out"], Hp, Vp).astype(jnp.bfloat16),        # (Hp, Vp) bf16
        b_out=pad2(raw["b_out"], 1, Vp),                              # (1, Vp) f32
    )


def encode_input(pp, commands_input, commands_lengths, situations_input):
    B, S = commands_input.shape
    emb = pp["emb"][commands_input]                                   # (B, S, Hp)
    enc = jnp.tanh(linear(emb, pp["w_enc"], pp["b_enc"]))             # (B, S, Hp)
    mask = (jnp.arange(S)[None, :] < commands_lengths[:, None]).astype(jnp.float32)
    hidden_states = jnp.sum(enc * mask[:, :, None], axis=1) / jnp.maximum(
        commands_lengths[:, None].astype(jnp.float32), 1.0)           # (B, Hp)
    encoder_outputs = jnp.transpose(enc, (1, 0, 2))                   # (S, B, Hp)
    return dict(
        encoded_situations=situations_input,
        encoded_commands=dict(encoder_outputs=encoder_outputs),
        hidden_states=hidden_states,
    )


# ----------------------------------------------------------------------------
# Fully jitted forward: encoder + on-device lax.while_loop over decode positions.
# ----------------------------------------------------------------------------
@functools.partial(
    jax.jit,
    static_argnames=("beam", "times", "max_length", "force_align",
                     "required_lengths", "pad_idx", "sos_idx", "eos_idx"))
def _forward_impl(pp, input_sequence, input_lengths, situation, *, beam, times,
                  max_length, force_align, required_lengths,
                  pad_idx, sos_idx, eos_idx):
    B, S = input_sequence.shape
    V, Hp = pp["emb"].shape
    Vp = pp["w_out"].shape[1]
    L = max_length
    Bb = B * beam
    Bb_pad = _round_up(Bb, 8)

    # ---- encoder + key projections (run once, f32) ----
    encoded = encode_input(pp, input_sequence, input_lengths, situation)
    proj_keys_visual = linear(encoded["encoded_situations"], pp["w_vk"], pp["b_vk"])
    proj_keys_textual = linear(
        encoded["encoded_commands"]["encoder_outputs"], pp["w_tk"], pp["b_tk"])
    h0 = jnp.tanh(linear(encoded["hidden_states"], pp["w_h2d"], pp["b_h2d"]))
    c0 = jnp.zeros_like(h0)

    new_order = jnp.repeat(jnp.arange(B), beam)

    def pad_rows(x):
        return jnp.pad(x, ((0, Bb_pad - Bb),) + ((0, 0),) * (x.ndim - 1))

    h = pad_rows(h0[new_order])
    c = pad_rows(c0[new_order])
    keys_txt = pad_rows(jnp.transpose(proj_keys_textual, (1, 0, 2))[new_order]
                        ).astype(jnp.bfloat16)                       # (Bb_pad, S, Hp)
    keys_vis = pad_rows(proj_keys_visual[new_order]).astype(jnp.bfloat16)  # (Bb_pad, R, Hp)
    lens = input_lengths[new_order]
    lens_full = jnp.concatenate([lens, jnp.full((Bb_pad - Bb,), S, jnp.int32)])
    tbias = jnp.where(jnp.arange(S)[None, :] < lens_full[:, None],
                      0.0, -1e30).astype(jnp.float32)                # (Bb_pad, S)

    # special-token / vocab-padding mask baked into the output bias
    colv = jnp.arange(Vp)
    masked = (colv == pad_idx) | (colv == sos_idx) | (colv >= V)
    if force_align:
        masked = masked | (colv == eos_idx)
    b_out_eff = jnp.where(masked[None, :], jnp.float32(-1e30), pp["b_out"])

    gen = jnp.full((Bb, L + 1), sos_idx, jnp.int32)
    scores = jnp.zeros((Bb, L + 1), jnp.float32)
    prefix = jnp.full((B, beam * times, L + 1), sos_idx, jnp.int32)
    bbsz_offsets = (jnp.arange(B) * beam)[:, None].astype(jnp.int32)
    final_scores = jnp.zeros((Bb,), jnp.float32)
    snaps = tuple(
        jnp.full((B, beam, 1) if r == 1 else (B, beam * times, r), sos_idx, jnp.int32)
        for r in required_lengths)
    col = jnp.arange(L + 1)[None, :]
    col3 = jnp.arange(L + 1)[None, None, :]

    def one_step(position, gen, scores, prefix, h, c, snaps, first):
        tok = gen[:, 0] if first else jnp.take(gen, position, axis=1)
        emb_tok = pad_rows(pp["emb"][tok])                            # (Bb_pad, Hp)
        logp_pad, h_new, c_new = decode_step(
            emb_tok, h, c, keys_txt, tbias, keys_vis,
            pp["w_cat"], pp["b_cat"], pp["w_out"], b_out_eff)
        logp = logp_pad[:Bb, :V]                                      # (Bb, V)

        if first:
            p0 = logp.reshape(B, beam, V)[:, 0, :]                    # == [:, ::beam, :]
            cand_scores, top_idx = lax.top_k(p0, beam)
            cand_beam, cand_word = top_idx // V, top_idx % V
            all_beam, all_word = cand_beam, cand_word
        else:
            prev = jnp.take(scores.reshape(B, beam, L + 1), position - 1, axis=2)
            flat = (logp.reshape(B, beam, V) + prev[:, :, None]).reshape(B, beam * V)
            cand_scores, top_idx = lax.top_k(flat, beam)
            _, all_idx = lax.top_k(flat, beam * times)
            cand_beam, cand_word = top_idx // V, top_idx % V
            all_beam, all_word = all_idx // V, all_idx % V

        cand_bbsz = (cand_beam + bbsz_offsets).reshape(-1)
        gen = gen[cand_bbsz]
        gen = jnp.where(col == position + 1, cand_word.reshape(-1)[:, None], gen)
        gen3 = gen.reshape(B, beam, L + 1)

        prefA = prefix.at[:, :beam, :].set(gen3)
        if first:
            prefix = prefA
        else:
            nall = all_beam.shape[1]
            gathered = jnp.take_along_axis(
                gen3, jnp.broadcast_to(all_beam[:, :, None], (B, nall, L + 1)), axis=1)
            prefB = jnp.where(col3 <= position, gathered, prefix)
            prefB = jnp.where(col3 == position + 1, all_word[:, :, None], prefB)
            prefix = jnp.where(position > 1, prefB, prefA)

        h = pad_rows(h_new[:Bb][cand_bbsz])
        c = pad_rows(c_new[:Bb][cand_bbsz])

        new_snaps = []
        for r, s in zip(required_lengths, snaps):
            if first and r == 1:
                s = prefix[:, :beam, 1:2]
            elif (not first) and r >= 2:
                s = jnp.where(position + 1 == r, prefix[:, :, 1:r + 1], s)
            new_snaps.append(s)
        snaps = tuple(new_snaps)

        scores = jnp.where(col == position, cand_scores.reshape(-1)[:, None], scores)
        # NOTE: faithful to the reference — it reads column position+1, which is
        #       never written (scores are stored at `position`).
        final_scores = jnp.take(scores, position + 1, axis=1)
        finished = jnp.take(gen, position + 1, axis=1) == eos_idx
        done = jnp.sum(finished.astype(jnp.int32)) == Bb
        return gen, scores, prefix, h, c, final_scores, snaps, done

    # position 0 (special-cased beam search) hoisted out of the on-device loop
    gen, scores, prefix, h, c, final_scores, snaps, done = one_step(
        0, gen, scores, prefix, h, c, snaps, first=True)

    def cond_fn(carry):
        position, done = carry[0], carry[1]
        return jnp.logical_and(position < L, jnp.logical_not(done))

    def body_fn(carry):
        position, _done, gen, scores, prefix, h, c, final_scores, snaps = carry
        gen, scores, prefix, h, c, final_scores, snaps, done = one_step(
            position, gen, scores, prefix, h, c, snaps, first=False)
        return (position + 1, done, gen, scores, prefix, h, c, final_scores, snaps)

    carry = (jnp.int32(1), done, gen, scores, prefix, h, c, final_scores, snaps)
    carry = lax.while_loop(cond_fn, body_fn, carry)
    gen, scores, prefix, h, c, final_scores, snaps = carry[2:]

    batch_scores = final_scores.reshape(B, beam)
    best_beam = jnp.argmax(batch_scores, axis=-1)
    gen3 = gen.reshape(B, beam, L + 1)
    best = jnp.take_along_axis(
        gen3, jnp.broadcast_to(best_beam[:, None, None], (B, 1, L + 1)), axis=1)[:, 0, :]
    return best[:, 1:], snaps


# ----------------------------------------------------------------------------
# SequenceGeneratorV2 — faithful port of the PyTorch forward pass.
# ----------------------------------------------------------------------------
class SequenceGeneratorV2:
    def __init__(self, params, beam_size, times, max_length,
                 pad_idx=PAD_IDX, sos_idx=SOS_IDX, eos_idx=EOS_IDX):
        self.pp = prepare_params(params)
        self.pad_idx = pad_idx
        self.sos_idx = sos_idx
        self.eos_idx = eos_idx
        self.beam_size = beam_size
        self.times = times
        self.max_length = max_length
        self.begin_token = sos_idx

    def forward(self, batch_data, required_length_list=(), force_align=True):
        (input_sequence, input_lengths, _derivation_spec, situation, _situation_spec,
         _target_sequence, _target_lengths, _agent_positions, _target_positions) = batch_data
        input_sequence = jnp.asarray(input_sequence, jnp.int32)
        input_lengths = jnp.asarray(input_lengths, jnp.int32)
        situation = jnp.asarray(situation, jnp.float32)
        req = tuple(int(r) for r in required_length_list)

        best_sentences, snaps = _forward_impl(
            self.pp, input_sequence, input_lengths, situation,
            beam=self.beam_size, times=self.times, max_length=self.max_length,
            force_align=bool(force_align), required_lengths=req,
            pad_idx=self.pad_idx, sos_idx=self.sos_idx, eos_idx=self.eos_idx)

        decode_dict = {r: s for r, s in zip(req, snaps)}
        return best_sentences, decode_dict


# ----------------------------------------------------------------------------
if __name__ == "__main__":
    key = jax.random.PRNGKey(0)
    B, S, V, H, R, D_VIS = 2, 8, 16, 32, 16, 16
    BEAM, TIMES, MAX_LEN = 3, 2, 6

    k_param, k_cmd, k_sit = jax.random.split(key, 3)
    params = init_params(k_param, V, H, D_VIS)

    input_sequence = jax.random.randint(k_cmd, (B, S), 3, V, dtype=jnp.int32)
    input_lengths = [S, S - 2]
    situation = jax.random.normal(k_sit, (B, R, D_VIS), jnp.float32)

    batch_data = (input_sequence, input_lengths, None, situation, None,
                  None, None, None, None)

    generator = SequenceGeneratorV2(params, beam_size=BEAM, times=TIMES,
                                    max_length=MAX_LEN)
    best_sentences, decode_dict = generator.forward(
        batch_data, required_length_list=[], force_align=True)

    jax.block_until_ready(best_sentences)
    assert best_sentences.shape == (B, MAX_LEN)
    print("KERNEL_OK")
</pallas_src>

<mosaic_0001>
module attributes {stable_mosaic.version = 11 : i64} {
  func.func @_linear_kernel(%arg0: i32, %arg1: memref<16x128xf32, #tpu.memory_space<vmem>>, %arg2: memref<128x128xf32, #tpu.memory_space<vmem>>, %arg3: memref<1x128xf32, #tpu.memory_space<vmem>>, %arg4: memref<16x128xf32, #tpu.memory_space<vmem>>) attributes {dimension_semantics = [#tpu.dimension_semantics<parallel>], iteration_bounds = array<i64: 1>, scalar_prefetch = 0 : i64, scratch_operands = 0 : i64, tpu.core_type = #tpu.core_type<tc>, window_params = [{transform_indices = @transform_0, window_bounds = array<i64: 16, 128>}, {pipeline_mode = #tpu.pipeline_mode<synchronous>, transform_indices = @transform_1, window_bounds = array<i64: 128, 128>}, {pipeline_mode = #tpu.pipeline_mode<synchronous>, transform_indices = @transform_2, window_bounds = array<i64: 1, 128>}, {transform_indices = @transform_3, window_bounds = array<i64: 16, 128>}]} {
    %c0 = arith.constant 0 : index
    %c0_0 = arith.constant 0 : index
    %0 = vector.load %arg1[%c0, %c0_0] : memref<16x128xf32, #tpu.memory_space<vmem>>, vector<16x128xf32>
    %c0_1 = arith.constant 0 : index
    %c0_2 = arith.constant 0 : index
    %1 = vector.load %arg2[%c0_1, %c0_2] : memref<128x128xf32, #tpu.memory_space<vmem>>, vector<128x128xf32>
    %cst = arith.constant dense<0.000000e+00> : vector<16x128xf32>
    %2 = tpu.matmul %0, %1, %cst {dimension_numbers = #tpu.dot_dimension_numbers<[1], [0], [0], [1], [0, 0, 1, 1], [], []>} : vector<16x128xf32>, vector<128x128xf32>, vector<16x128xf32> -> vector<16x128xf32>
    %c0_3 = arith.constant 0 : index
    %c0_4 = arith.constant 0 : index
    %3 = vector.load %arg3[%c0_3, %c0_4] : memref<1x128xf32, #tpu.memory_space<vmem>>, vector<1x128xf32>
    %4 = vector.broadcast %3 : vector<1x128xf32> to vector<16x128xf32>
    %5 = arith.addf %2, %4 : vector<16x128xf32>
    %c0_5 = arith.constant 0 : index
    %c0_6 = arith.constant 0 : index
    %6 = vector.load %arg4[%c0_5, %c0_6] : memref<16x128xf32, #tpu.memory_space<vmem>>, vector<16x128xf32>
    tpu.vector_store %arg4[%c0_5, %c0_6], %5 {strides = array<i32>} : memref<16x128xf32, #tpu.memory_space<vmem>>, vector<16x128xf32>,
    return
  }
  func.func @transform_0(%arg0: i32) -> (i32, i32) {
    %c0_i32 = arith.constant 0 : i32
    %c0_i32_0 = arith.constant 0 : i32
    return %arg0, %c0_i32 : i32, i32
  }
  func.func @transform_1(%arg0: i32) -> (i32, i32) {
    %c0_i32 = arith.constant 0 : i32
    %c0_i32_0 = arith.constant 0 : i32
    %c0_i32_1 = arith.constant 0 : i32
    return %c0_i32, %c0_i32_0 : i32, i32
  }
  func.func @transform_2(%arg0: i32) -> (i32, i32) {
    %c0_i32 = arith.constant 0 : i32
    %c0_i32_0 = arith.constant 0 : i32
    %c0_i32_1 = arith.constant 0 : i32
    return %c0_i32, %c0_i32_0 : i32, i32
  }
  func.func @transform_3(%arg0: i32) -> (i32, i32) {
    %c0_i32 = arith.constant 0 : i32
    %c0_i32_0 = arith.constant 0 : i32
    return %arg0, %c0_i32 : i32, i32
  }
}

module attributes {stable_mosaic.version = 11 : i64} {
  func.func @_linear_kernel(%arg0: i32, %arg1: memref<32x16xf32, #tpu.memory_space<vmem>>, %arg2: memref<16x128xf32, #tpu.memory_space<vmem>>, %arg3: memref<1x128xf32, #tpu.memory_space<vmem>>, %arg4: memref<32x128xf32, #tpu.memory_space<vmem>>) attributes {dimension_semantics = [#tpu.dimension_semantics<parallel>], iteration_bounds = array<i64: 1>, scalar_prefetch = 0 : i64, scratch_operands = 0 : i64, tpu.core_type = #tpu.core_type<tc>, window_params = [{transform_indices = @transform_0, window_bounds = array<i64: 32, 16>}, {pipeline_mode = #tpu.pipeline_mode<synchronous>, transform_indices = @transform_1, window_bounds = array<i64: 16, 128>}, {pipeline_mode = #tpu.pipeline_mode<synchronous>, transform_indices = @transform_2, window_bounds = array<i64: 1, 128>}, {transform_indices = @transform_3, window_bounds = array<i64: 32, 128>}]} {
    %c0 = arith.constant 0 : index
    %c0_0 = arith.constant 0 : index
    %0 = vector.load %arg1[%c0, %c0_0] : memref<32x16xf32, #tpu.memory_space<vmem>>, vector<32x16xf32>
    %c0_1 = arith.constant 0 : index
    %c0_2 = arith.constant 0 : index
    %1 = vector.load %arg2[%c0_1, %c0_2] : memref<16x128xf32, #tpu.memory_space<vmem>>, vector<16x128xf32>
    %cst = arith.constant dense<0.000000e+00> : vector<32x128xf32>
    %2 = tpu.matmul %0, %1, %cst {dimension_numbers = #tpu.dot_dimension_numbers<[1], [0], [0], [1], [0, 0, 1, 1], [], []>} : vector<32x16xf32>, vector<16x128xf32>, vector<32x128xf32> -> vector<32x128xf32>
    %c0_3 = arith.constant 0 : index
    %c0_4 = arith.constant 0 : index
    %3 = vector.load %arg3[%c0_3, %c0_4] : memref<1x128xf32, #tpu.memory_space<vmem>>, vector<1x128xf32>
    %4 = vector.broadcast %3 : vector<1x128xf32> to vector<32x128xf32>
    %5 = arith.addf %2, %4 : vector<32x128xf32>
    %c0_5 = arith.constant 0 : index
    %c0_6 = arith.constant 0 : index
    %6 = vector.load %arg4[%c0_5, %c0_6] : memref<32x128xf32, #tpu.memory_space<vmem>>, vector<32x128xf32>
    tpu.vector_store %arg4[%c0_5, %c0_6], %5 {strides = array<i32>} : memref<32x128xf32, #tpu.memory_space<vmem>>, vector<32x128xf32>,
    return
  }
  func.func @transform_0(%arg0: i32) -> (i32, i32) {
    %c0_i32 = arith.constant 0 : i32
    %c0_i32_0 = arith.constant 0 : i32
    return %arg0, %c0_i32 : i32, i32
  }
  func.func @transform_1(%arg0: i32) -> (i32, i32) {
    %c0_i32 = arith.constant 0 : i32
    %c0_i32_0 = arith.constant 0 : i32
    %c0_i32_1 = arith.constant 0 : i32
    return %c0_i32, %c0_i32_0 : i32, i32
  }
  func.func @transform_2(%arg0: i32) -> (i32, i32) {
    %c0_i32 = arith.constant 0 : i32
    %c0_i32_0 = arith.constant 0 : i32
    %c0_i32_1 = arith.constant 0 : i32
    return %c0_i32, %c0_i32_0 : i32, i32
  }
  func.func @transform_3(%arg0: i32) -> (i32, i32) {
    %c0_i32 = arith.constant 0 : i32
    %c0_i32_0 = arith.constant 0 : i32
    return %arg0, %c0_i32 : i32, i32
  }
}

module attributes {stable_mosaic.version = 11 : i64} {
  func.func @_linear_kernel(%arg0: i32, %arg1: memref<8x128xf32, #tpu.memory_space<vmem>>, %arg2: memref<128x128xf32, #tpu.memory_space<vmem>>, %arg3: memref<1x128xf32, #tpu.memory_space<vmem>>, %arg4: memref<8x128xf32, #tpu.memory_space<vmem>>) attributes {dimension_semantics = [#tpu.dimension_semantics<parallel>], iteration_bounds = array<i64: 1>, scalar_prefetch = 0 : i64, scratch_operands = 0 : i64, tpu.core_type = #tpu.core_type<tc>, window_params = [{transform_indices = @transform_0, window_bounds = array<i64: 8, 128>}, {pipeline_mode = #tpu.pipeline_mode<synchronous>, transform_indices = @transform_1, window_bounds = array<i64: 128, 128>}, {pipeline_mode = #tpu.pipeline_mode<synchronous>, transform_indices = @transform_2, window_bounds = array<i64: 1, 128>}, {transform_indices = @transform_3, window_bounds = array<i64: 8, 128>}]} {
    %c0 = arith.constant 0 : index
    %c0_0 = arith.constant 0 : index
    %0 = vector.load %arg1[%c0, %c0_0] : memref<8x128xf32, #tpu.memory_space<vmem>>, vector<8x128xf32>
    %c0_1 = arith.constant 0 : index
    %c0_2 = arith.constant 0 : index
    %1 = vector.load %arg2[%c0_1, %c0_2] : memref<128x128xf32, #tpu.memory_space<vmem>>, vector<128x128xf32>
    %cst = arith.constant dense<0.000000e+00> : vector<8x128xf32>
    %2 = tpu.matmul %0, %1, %cst {dimension_numbers = #tpu.dot_dimension_numbers<[1], [0], [0], [1], [0, 0, 1, 1], [], []>} : vector<8x128xf32>, vector<128x128xf32>, vector<8x128xf32> -> vector<8x128xf32>
    %c0_3 = arith.constant 0 : index
    %c0_4 = arith.constant 0 : index
    %3 = vector.load %arg3[%c0_3, %c0_4] : memref<1x128xf32, #tpu.memory_space<vmem>>, vector<1x128xf32>
    %4 = vector.broadcast %3 : vector<1x128xf32> to vector<8x128xf32>
    %5 = arith.addf %2, %4 : vector<8x128xf32>
    %c0_5 = arith.constant 0 : index
    %c0_6 = arith.constant 0 : index
    %6 = vector.load %arg4[%c0_5, %c0_6] : memref<8x128xf32, #tpu.memory_space<vmem>>, vector<8x128xf32>
    tpu.vector_store %arg4[%c0_5, %c0_6], %5 {strides = array<i32>} : memref<8x128xf32, #tpu.memory_space<vmem>>, vector<8x128xf32>,
    return
  }
  func.func @transform_0(%arg0: i32) -> (i32, i32) {
    %c0_i32 = arith.constant 0 : i32
    %c0_i32_0 = arith.constant 0 : i32
    return %arg0, %c0_i32 : i32, i32
  }
  func.func @transform_1(%arg0: i32) -> (i32, i32) {
    %c0_i32 = arith.constant 0 : i32
    %c0_i32_0 = arith.constant 0 : i32
    %c0_i32_1 = arith.constant 0 : i32
    return %c0_i32, %c0_i32_0 : i32, i32
  }
  func.func @transform_2(%arg0: i32) -> (i32, i32) {
    %c0_i32 = arith.constant 0 : i32
    %c0_i32_0 = arith.constant 0 : i32
    %c0_i32_1 = arith.constant 0 : i32
    return %c0_i32, %c0_i32_0 : i32, i32
  }
  func.func @transform_3(%arg0: i32) -> (i32, i32) {
    %c0_i32 = arith.constant 0 : i32
    %c0_i32_0 = arith.constant 0 : i32
    return %arg0, %c0_i32 : i32, i32
  }
}

module attributes {stable_mosaic.version = 11 : i64} {
  func.func @_decode_step_kernel(%arg0: memref<8x128xf32, #tpu.memory_space<vmem>>, %arg1: memref<8x128xf32, #tpu.memory_space<vmem>>, %arg2: memref<8x128xf32, #tpu.memory_space<vmem>>, %arg3: memref<8x8x128xbf16, #tpu.memory_space<vmem>>, %arg4: memref<8x8xf32, #tpu.memory_space<vmem>>, %arg5: memref<8x16x128xbf16, #tpu.memory_space<vmem>>, %arg6: memref<512x512xbf16, #tpu.memory_space<vmem>>, %arg7: memref<1x512xf32, #tpu.memory_space<vmem>>, %arg8: memref<128x128xbf16, #tpu.memory_space<vmem>>, %arg9: memref<1x128xf32, #tpu.memory_space<vmem>>, %arg10: memref<8x128xf32, #tpu.memory_space<vmem>>, %arg11: memref<8x128xf32, #tpu.memory_space<vmem>>, %arg12: memref<8x128xf32, #tpu.memory_space<vmem>>) attributes {dimension_semantics = [], scalar_prefetch = 0 : i64, scratch_operands = 0 : i64, tpu.core_type = #tpu.core_type<tc>} {
    %c0 = arith.constant 0 : index
    %c0_0 = arith.constant 0 : index
    %0 = vector.load %arg1[%c0, %c0_0] : memref<8x128xf32, #tpu.memory_space<vmem>>, vector<8x128xf32>
    %c0_1 = arith.constant 0 : index
    %c0_2 = arith.constant 0 : index
    %1 = vector.load %arg2[%c0_1, %c0_2] : memref<8x128xf32, #tpu.memory_space<vmem>>, vector<8x128xf32>
    %c0_3 = arith.constant 0 : index
    %c0_4 = arith.constant 0 : index
    %2 = vector.load %arg0[%c0_3, %c0_4] : memref<8x128xf32, #tpu.memory_space<vmem>>, vector<8x128xf32>
    %c0_5 = arith.constant 0 : index
    %c0_6 = arith.constant 0 : index
    %c0_7 = arith.constant 0 : index
    %3 = vector.load %arg3[%c0_5, %c0_6, %c0_7] : memref<8x8x128xbf16, #tpu.memory_space<vmem>>, vector<8x8x128xbf16>
    %c0_8 = arith.constant 0 : index
    %c0_9 = arith.constant 0 : index
    %c0_10 = arith.constant 0 : index
    %4 = vector.load %arg5[%c0_8, %c0_9, %c0_10] : memref<8x16x128xbf16, #tpu.memory_space<vmem>>, vector<8x16x128xbf16>
    %5 = arith.truncf %0 : vector<8x128xf32> to vector<8x128xbf16>
    %6 = vector.shape_cast %5 : vector<8x128xbf16> to vector<8x1x128xbf16>
    "tpu.trace_start"() <{level = 10 : i32, message = "bqh,bsh->bqs"}> : () -> ()
    %cst = arith.constant dense<0.000000e+00> : vector<8x1x8xf32>
    %7 = tpu.matmul %6, %3, %cst {dimension_numbers = #tpu.dot_dimension_numbers<[2], [2], [1], [1], [0, 0, 0, 1, 1, 1], [0], [0]>} : vector<8x1x128xbf16>, vector<8x8x128xbf16>, vector<8x1x8xf32> -> vector<8x1x8xf32>
    "tpu.trace_stop"() : () -> ()
    %8 = vector.shape_cast %7 : vector<8x1x8xf32> to vector<8x8xf32>
    %c0_11 = arith.constant 0 : index
    %c0_12 = arith.constant 0 : index
    %9 = vector.load %arg4[%c0_11, %c0_12] : memref<8x8xf32, #tpu.memory_space<vmem>>, vector<8x8xf32>
    %10 = arith.addf %8, %9 : vector<8x8xf32>
    %cst_13 = arith.constant dense<0xFF800000> : vector<8xf32>
    %11 = vector.multi_reduction <maximumf>, %10, %cst_13 [1] : vector<8x8xf32> to vector<8xf32>
    %12 = vector.shape_cast %11 : vector<8xf32> to vector<8x1xf32>
    %13 = vector.broadcast %12 : vector<8x1xf32> to vector<8x8xf32>
    %14 = arith.subf %10, %13 : vector<8x8xf32>
    %15 = math.exp %14 : vector<8x8xf32>
    %cst_14 = arith.constant dense<0.000000e+00> : vector<8xf32>
    %16 = vector.multi_reduction <add>, %15, %cst_14 [1] : vector<8x8xf32> to vector<8xf32>
    %17 = vector.shape_cast %16 : vector<8xf32> to vector<8x1xf32>
    %18 = tpu.reciprocal %17 {approx = true} : vector<8x1xf32> -> vector<8x1xf32>
    %19 = vector.broadcast %18 : vector<8x1xf32> to vector<8x8xf32>
    %20 = arith.mulf %15, %19 : vector<8x8xf32>
    %21 = vector.shape_cast %20 : vector<8x8xf32> to vector<8x1x8xf32>
    %22 = arith.truncf %21 : vector<8x1x8xf32> to vector<8x1x8xbf16>
    "tpu.trace_start"() <{level = 10 : i32, message = "bqs,bsh->bqh"}> : () -> ()
    %cst_15 = arith.constant dense<0.000000e+00> : vector<8x1x128xf32>
    %23 = tpu.matmul %22, %3, %cst_15 {dimension_numbers = #tpu.dot_dimension_numbers<[2], [1], [1], [2], [0, 0, 0, 1, 1, 2], [0], [0]>} : vector<8x1x8xbf16>, vector<8x8x128xbf16>, vector<8x1x128xf32> -> vector<8x1x128xf32>
    "tpu.trace_stop"() : () -> ()
    %24 = vector.shape_cast %23 : vector<8x1x128xf32> to vector<8x128xf32>
    "tpu.trace_start"() <{level = 10 : i32, message = "bqh,brh->bqr"}> : () -> ()
    %cst_16 = arith.constant dense<0.000000e+00> : vector<8x1x16xf32>
    %25 = tpu.matmul %6, %4, %cst_16 {dimension_numbers = #tpu.dot_dimension_numbers<[2], [2], [1], [1], [0, 0, 0, 1, 1, 1], [0], [0]>} : vector<8x1x128xbf16>, vector<8x16x128xbf16>, vector<8x1x16xf32> -> vector<8x1x16xf32>
    "tpu.trace_stop"() : () -> ()
    %26 = vector.shape_cast %25 : vector<8x1x16xf32> to vector<8x16xf32>
    %cst_17 = arith.constant dense<0xFF800000> : vector<8xf32>
    %27 = vector.multi_reduction <maximumf>, %26, %cst_17 [1] : vector<8x16xf32> to vector<8xf32>
    %28 = vector.shape_cast %27 : vector<8xf32> to vector<8x1xf32>
    %29 = vector.broadcast %28 : vector<8x1xf32> to vector<8x16xf32>
    %30 = arith.subf %26, %29 : vector<8x16xf32>
    %31 = math.exp %30 : vector<8x16xf32>
    %cst_18 = arith.constant dense<0.000000e+00> : vector<8xf32>
    %32 = vector.multi_reduction <add>, %31, %cst_18 [1] : vector<8x16xf32> to vector<8xf32>
    %33 = vector.shape_cast %32 : vector<8xf32> to vector<8x1xf32>
    %34 = tpu.reciprocal %33 {approx = true} : vector<8x1xf32> -> vector<8x1xf32>
    %35 = vector.broadcast %34 : vector<8x1xf32> to vector<8x16xf32>
    %36 = arith.mulf %31, %35 : vector<8x16xf32>
    %37 = vector.shape_cast %36 : vector<8x16xf32> to vector<8x1x16xf32>
    %38 = arith.truncf %37 : vector<8x1x16xf32> to vector<8x1x16xbf16>
    "tpu.trace_start"() <{level = 10 : i32, message = "bqr,brh->bqh"}> : () -> ()
    %cst_19 = arith.constant dense<0.000000e+00> : vector<8x1x128xf32>
    %39 = tpu.matmul %38, %4, %cst_19 {dimension_numbers = #tpu.dot_dimension_numbers<[2], [1], [1], [2], [0, 0, 0, 1, 1, 2], [0], [0]>} : vector<8x1x16xbf16>, vector<8x16x128xbf16>, vector<8x1x128xf32> -> vector<8x1x128xf32>
    "tpu.trace_stop"() : () -> ()
    %40 = vector.shape_cast %39 : vector<8x1x128xf32> to vector<8x128xf32>
    %41 = tpu.concatenate %2, %24, %40, %0 in 1 : vector<8x128xf32>, vector<8x128xf32>, vector<8x128xf32>, vector<8x128xf32> -> vector<8x512xf32>
    %42 = arith.truncf %41 : vector<8x512xf32> to vector<8x512xbf16>
    %c0_20 = arith.constant 0 : index
    %c0_21 = arith.constant 0 : index
    %43 = vector.load %arg6[%c0_20, %c0_21] : memref<512x512xbf16, #tpu.memory_space<vmem>>, vector<512x512xbf16>
    %cst_22 = arith.constant dense<0.000000e+00> : vector<8x512xf32>
    %44 = tpu.matmul %42, %43, %cst_22 {dimension_numbers = #tpu.dot_dimension_numbers<[1], [0], [0], [1], [0, 0, 1, 1], [], []>} : vector<8x512xbf16>, vector<512x512xbf16>, vector<8x512xf32> -> vector<8x512xf32>
    %c0_23 = arith.constant 0 : index
    %c0_24 = arith.constant 0 : index
    %45 = vector.load %arg7[%c0_23, %c0_24] : memref<1x512xf32, #tpu.memory_space<vmem>>, vector<1x512xf32>
    %46 = vector.broadcast %45 : vector<1x512xf32> to vector<8x512xf32>
    %47 = arith.addf %44, %46 : vector<8x512xf32>
    %48 = vector.extract_strided_slice %47 {offsets = [0, 0], sizes = [8, 128], strides = [1, 1]} : vector<8x512xf32> to vector<8x128xf32>
    %49 = arith.negf %48 : vector<8x128xf32>
    %50 = math.exp %49 : vector<8x128xf32>
    %cst_25 = arith.constant 1.000000e+00 : f32
    %51 = vector.broadcast %cst_25 : f32 to vector<8x128xf32>
    %52 = arith.addf %51, %50 : vector<8x128xf32>
    %53 = arith.divf %51, %52 : vector<8x128xf32>
    %54 = vector.extract_strided_slice %47 {offsets = [0, 128], sizes = [8, 128], strides = [1, 1]} : vector<8x512xf32> to vector<8x128xf32>
    %55 = arith.negf %54 : vector<8x128xf32>
    %56 = math.exp %55 : vector<8x128xf32>
    %cst_26 = arith.constant 1.000000e+00 : f32
    %57 = vector.broadcast %cst_26 : f32 to vector<8x128xf32>
    %58 = arith.addf %57, %56 : vector<8x128xf32>
    %59 = arith.divf %57, %58 : vector<8x128xf32>
    %60 = vector.extract_strided_slice %47 {offsets = [0, 256], sizes = [8, 128], strides = [1, 1]} : vector<8x512xf32> to vector<8x128xf32>
    %61 = math.tanh %60 : vector<8x128xf32>
    %62 = vector.extract_strided_slice %47 {offsets = [0, 384], sizes = [8, 128], strides = [1, 1]} : vector<8x512xf32> to vector<8x128xf32>
    %63 = arith.negf %62 : vector<8x128xf32>
    %64 = math.exp %63 : vector<8x128xf32>
    %cst_27 = arith.constant 1.000000e+00 : f32
    %65 = vector.broadcast %cst_27 : f32 to vector<8x128xf32>
    %66 = arith.addf %65, %64 : vector<8x128xf32>
    %67 = arith.divf %65, %66 : vector<8x128xf32>
    %68 = arith.mulf %59, %1 : vector<8x128xf32>
    %69 = arith.mulf %53, %61 : vector<8x128xf32>
    %70 = arith.addf %68, %69 : vector<8x128xf32>
    %71 = math.tanh %70 : vector<8x128xf32>
    %72 = arith.mulf %67, %71 : vector<8x128xf32>
    %73 = arith.truncf %72 : vector<8x128xf32> to vector<8x128xbf16>
    %c0_28 = arith.constant 0 : index
    %c0_29 = arith.constant 0 : index
    %74 = vector.load %arg8[%c0_28, %c0_29] : memref<128x128xbf16, #tpu.memory_space<vmem>>, vector<128x128xbf16>
    %cst_30 = arith.constant dense<0.000000e+00> : vector<8x128xf32>
    %75 = tpu.matmul %73, %74, %cst_30 {dimension_numbers = #tpu.dot_dimension_numbers<[1], [0], [0], [1], [0, 0, 1, 1], [], []>} : vector<8x128xbf16>, vector<128x128xbf16>, vector<8x128xf32> -> vector<8x128xf32>
    %c0_31 = arith.constant 0 : index
    %c0_32 = arith.constant 0 : index
    %76 = vector.load %arg9[%c0_31, %c0_32] : memref<1x128xf32, #tpu.memory_space<vmem>>, vector<1x128xf32>
    %77 = vector.broadcast %76 : vector<1x128xf32> to vector<8x128xf32>
    %78 = arith.addf %75, %77 : vector<8x128xf32>
    %cst_33 = arith.constant dense<0xFF800000> : vector<8xf32>
    %79 = vector.multi_reduction <maximumf>, %78, %cst_33 [1] : vector<8x128xf32> to vector<8xf32>
    %80 = vector.shape_cast %79 : vector<8xf32> to vector<8x1xf32>
    %81 = vector.broadcast %80 : vector<8x1xf32> to vector<8x128xf32>
    %82 = arith.subf %78, %81 : vector<8x128xf32>
    %83 = math.exp %82 : vector<8x128xf32>
    %cst_34 = arith.constant dense<0.000000e+00> : vector<8xf32>
    %84 = vector.multi_reduction <add>, %83, %cst_34 [1] : vector<8x128xf32> to vector<8xf32>
    %85 = vector.shape_cast %84 : vector<8xf32> to vector<8x1xf32>
    %86 = math.log %85 : vector<8x1xf32>
    %87 = arith.addf %80, %86 : vector<8x1xf32>
    %88 = vector.broadcast %87 : vector<8x1xf32> to vector<8x128xf32>
    %89 = arith.subf %78, %88 : vector<8x128xf32>
    %c0_35 = arith.constant 0 : index
    %c0_36 = arith.constant 0 : index
    %90 = vector.load %arg10[%c0_35, %c0_36] : memref<8x128xf32, #tpu.memory_space<vmem>>, vector<8x128xf32>
    tpu.vector_store %arg10[%c0_35, %c0_36], %89 {strides = array<i32>} : memref<8x128xf32, #tpu.memory_space<vmem>>, vector<8x128xf32>,
    %c0_37 = arith.constant 0 : index
    %c0_38 = arith.constant 0 : index
    %91 = vector.load %arg11[%c0_37, %c0_38] : memref<8x128xf32, #tpu.memory_space<vmem>>, vector<8x128xf32>
    tpu.vector_store %arg11[%c0_37, %c0_38], %72 {strides = array<i32>} : memref<8x128xf32, #tpu.memory_space<vmem>>, vector<8x128xf32>,
    %c0_39 = arith.constant 0 : index
    %c0_40 = arith.constant 0 : index
    %92 = vector.load %arg12[%c0_39, %c0_40] : memref<8x128xf32, #tpu.memory_space<vmem>>, vector<8x128xf32>
    tpu.vector_store %arg12[%c0_39, %c0_40], %70 {strides = array<i32>} : memref<8x128xf32, #tpu.memory_space<vmem>>, vector<8x128xf32>,
    return
  }
}

</mosaic_0001>

<llo_original>
// kernel: _forward_impl.5
$region0: #{_forward_impl.5}
  #allocation0 [shape = 'u32[]', space=smem, size = 0x4, offset = 0x4, fixed_abs, tag = 'smem constant byte address 0x4 - core index']
  #allocation1 [shape = 'u32[144,128]{1,0:T(1,128)}', space=vmem, size = 0x12000, scoped, tag = 'internal scratch']
  %s0 = inlined_call_operand.vmem [shape: f32[16,128], index: 0, kind: input, shape index: {}]
  %s1 = inlined_call_operand.vmem [shape: f32[128,128], index: 1, kind: input, shape index: {}]
  %s2 = inlined_call_operand.vmem [shape: f32[1,128], index: 2, kind: input, shape index: {}]
  %s3 = inlined_call_operand.vmem [shape: f32[16,128], index: 3, kind: output, shape index: {}]
  %s4 = sld [smem:[#allocation0]]
  $region22: #{_forward_impl.5} parent=0
    _
  %s6 = ssub.s32 1, %s4
  %s7 = scalar_select 0, %s6, %s4
  // Predicated region
  $region2: #{_forward_impl.5} parent=0 // pred_check
    _
  $region3: #{_forward_impl.5} parent=0 // pred_check_branch
    %9 = sbr.rel (0) target = $region5
  $region4: #{_forward_impl.5} parent=0 // pred_region
    _
  $region5: #{_forward_impl.5} parent=0 // pred_fallthru
    _
  // Predicated region
  $region6: #{_forward_impl.5} parent=0 // pred_check
    _
  $region7: #{_forward_impl.5} parent=0 // pred_check_branch
    %11 = sbr.rel (0) target = $region9
  $region8: #{_forward_impl.5} parent=0 // pred_region
    _
  $region9: #{_forward_impl.5} parent=0 // pred_fallthru
    _
  // Predicated region
  $region10: #{_forward_impl.5} parent=0 // pred_check
    _
  $region11: #{_forward_impl.5} parent=0 // pred_check_branch
    %13 = sbr.rel (0) target = $region13
  $region12: #{_forward_impl.5} parent=0 // pred_region
    _
  $region13: #{_forward_impl.5} parent=0 // pred_fallthru
    _
  %v14 = vld [vmem:[%s0] sm:$0xff]
  %v15 = vld [vmem:[%s0 + $0x8] sm:$0xff]
  %v16 = vld [vmem:[%s1] sm:$0xff]
  %v17 = vld [vmem:[%s1 + $0x8] sm:$0xff]
  %v18 = vld [vmem:[%s1 + $0x10] sm:$0xff]
  %v19 = vld [vmem:[%s1 + $0x18] sm:$0xff]
  %v20 = vld [vmem:[%s1 + $0x20] sm:$0xff]
  %v21 = vld [vmem:[%s1 + $0x28] sm:$0xff]
  %v22 = vld [vmem:[%s1 + $0x30] sm:$0xff]
  %v23 = vld [vmem:[%s1 + $0x38] sm:$0xff]
  %v24 = vld [vmem:[%s1 + $0x40] sm:$0xff]
  %v25 = vld [vmem:[%s1 + $0x48] sm:$0xff]
  %v26 = vld [vmem:[%s1 + $0x50] sm:$0xff]
  %v27 = vld [vmem:[%s1 + $0x58] sm:$0xff]
  %v28 = vld [vmem:[%s1 + $0x60] sm:$0xff]
  %v29 = vld [vmem:[%s1 + $0x68] sm:$0xff]
  %v30 = vld [vmem:[%s1 + $0x70] sm:$0xff]
  %v31 = vld [vmem:[%s1 + $0x78] sm:$0xff]
  %v32 = vld [vmem:[%s2] sm:$0x1]
  %v34 = vlaneseq
  %v35 = vshrl.u32 %v34, 7
  %v36 = vsub.s32 0, %v35
  %v37 = vrot.slane %v32, %v36
  %39 = vmatprep.subr.mxu0 0.0
  %40 = vmatpush1.msra.mxu0 %v31
  %41 = vmatprep.subr.mxu0 0.0
  %42 = vmatpush1.msra.mxu0 %v30
  %43 = vmatprep.subr.mxu0 0.0
  %44 = vmatpush1.msra.mxu0 %v29
  %45 = vmatprep.subr.mxu0 0.0
  %46 = vmatpush1.msra.mxu0 %v28
  %47 = vmatprep.subr.mxu0 0.0
  %48 = vmatpush1.msra.mxu0 %v27
  %49 = vmatprep.subr.mxu0 0.0
  %50 = vmatpush1.msra.mxu0 %v26
  %51 = vmatprep.subr.mxu0 0.0
  %52 = vmatpush1.msra.mxu0 %v25
  %53 = vmatprep.subr.mxu0 0.0
  %54 = vmatpush1.msra.mxu0 %v24
  %55 = vmatprep.subr.mxu0 0.0
  %56 = vmatpush1.msra.mxu0 %v23
  %57 = vmatprep.subr.mxu0 0.0
  %58 = vmatpush1.msra.mxu0 %v22
  %59 = vmatprep.subr.mxu0 0.0
  %60 = vmatpush1.msra.mxu0 %v21
  %61 = vmatprep.subr.mxu0 0.0
  %62 = vmatpush1.msra.mxu0 %v20
  %63 = vmatprep.subr.mxu0 0.0
  %64 = vmatpush1.msra.mxu0 %v19
  %65 = vmatprep.subr.mxu0 0.0
  %66 = vmatpush1.msra.mxu0 %v18
  %67 = vmatprep.subr.mxu0 0.0
  %68 = vmatpush1.msra.mxu0 %v17
  %69 = vmatprep.subr.mxu0 0.0
  %70 = vmatpush1.msra.mxu0 %v16
  %71 = vmatprep.subr.mxu0 0.0
  %72 = vmatpush2.msra.mxu0 0.0
  %73 = vmatprep.subr.mxu0 0.0
  %74 = vmatpush2.msra.mxu0 0.0
  %75 = vmatprep.subr.mxu0 0.0
  %76 = vmatpush2.msra.mxu0 0.0
  %77 = vmatprep.subr.mxu0 0.0
  %78 = vmatpush2.msra.mxu0 0.0
  %79 = vmatprep.subr.mxu0 0.0
  %80 = vmatpush2.msra.mxu0 0.0
  %81 = vmatprep.subr.mxu0 0.0
  %82 = vmatpush2.msra.mxu0 0.0
  %83 = vmatprep.subr.mxu0 0.0
  %84 = vmatpush2.msra.mxu0 0.0
  %85 = vmatprep.subr.mxu0 0.0
  %86 = vmatpush2.msra.mxu0 0.0
  %87 = vmatprep.subr.mxu0 0.0
  %88 = vmatpush2.msra.mxu0 0.0
  %89 = vmatprep.subr.mxu0 0.0
  %90 = vmatpush2.msra.mxu0 0.0
  %91 = vmatprep.subr.mxu0 0.0
  %92 = vmatpush2.msra.mxu0 0.0
  %93 = vmatprep.subr.mxu0 0.0
  %94 = vmatpush2.msra.mxu0 0.0
  %95 = vmatprep.subr.mxu0 0.0
  %96 = vmatpush2.msra.mxu0 0.0
  %97 = vmatprep.subr.mxu0 0.0
  %98 = vmatpush2.msra.mxu0 0.0
  %99 = vmatprep.subr.mxu0 0.0
  %100 = vmatpush2.msra.mxu0 0.0
  %101 = vmatprep.subr.mxu0 0.0
  %102 = vmatpush2.msra.mxu0 0.0
  %103 = vmatprep.mubr.f32.mxu0 0.0
  %104 = vmatmul.mubr.f32.gmra.mxu0 %v14
  %v105 = vpop.f32.mrf.mxu0
  %v106 = vadd.f32 %v37, %v105
  %v107 = vpop.f32.mrf.mxu0
  %108 = vmatprep.mubr.f32.mxu0 0.0
  %109 = vmatmul.mubr.f32.gmra.mxu0 %v15
  %v110 = vpop.f32.mrf.mxu0
  %v111 = vadd.f32 %v37, %v110
  %v112 = vpop.f32.mrf.mxu0
  %113 = vdwg.mxu0
  %114 = vst [vmem:[%s3] sm:$0xff] %v106
  %115 = vst [vmem:[%s3 + $0x8] sm:$0xff] %v111
  // Predicated region
  $region14: #{_forward_impl.5} parent=0 // pred_check
    _
  $region15: #{_forward_impl.5} parent=0 // pred_check_branch
    %117 = sbr.rel (0) target = $region17
  $region16: #{_forward_impl.5} parent=0 // pred_region
    _
  $region17: #{_forward_impl.5} parent=0 // pred_fallthru
    _
  // Predicated region
  $region18: #{_forward_impl.5} parent=0 // pred_check
    _
  $region19: #{_forward_impl.5} parent=0 // pred_check_branch
    %119 = sbr.rel (0) target = $region21
  $region20: #{_forward_impl.5} parent=0 // pred_region
    _
  $region21: #{_forward_impl.5} parent=0 // pred_fallthru
    _

// kernel: _forward_impl.6
$region0: #{_forward_impl.6}
  #allocation0 [shape = 'u32[]', space=smem, size = 0x4, offset = 0x4, fixed_abs, tag = 'smem constant byte address 0x4 - core index']
  #allocation1 [shape = 'u32[144,128]{1,0:T(1,128)}', space=vmem, size = 0x12000, scoped, tag = 'internal scratch']
  %s0 = inlined_call_operand.vmem [shape: f32[32,16], index: 0, kind: input, shape index: {}]
  %s1 = inlined_call_operand.vmem [shape: f32[16,128], index: 1, kind: input, shape index: {}]
  %s2 = inlined_call_operand.vmem [shape: f32[1,128], index: 2, kind: input, shape index: {}]
  %s3 = inlined_call_operand.vmem [shape: f32[32,128], index: 3, kind: output, shape index: {}]
  %s4 = sld [smem:[#allocation0]]
  $region22: #{_forward_impl.6} parent=0
    _
  %s6 = ssub.s32 1, %s4
  %s7 = scalar_select 0, %s6, %s4
  // Predicated region
  $region2: #{_forward_impl.6} parent=0 // pred_check
    _
  $region3: #{_forward_impl.6} parent=0 // pred_check_branch
    %9 = sbr.rel (0) target = $region5
  $region4: #{_forward_impl.6} parent=0 // pred_region
    _
  $region5: #{_forward_impl.6} parent=0 // pred_fallthru
    _
  // Predicated region
  $region6: #{_forward_impl.6} parent=0 // pred_check
    _
  $region7: #{_forward_impl.6} parent=0 // pred_check_branch
    %11 = sbr.rel (0) target = $region9
  $region8: #{_forward_impl.6} parent=0 // pred_region
    _
  $region9: #{_forward_impl.6} parent=0 // pred_fallthru
    _
  // Predicated region
  $region10: #{_forward_impl.6} parent=0 // pred_check
    _
  $region11: #{_forward_impl.6} parent=0 // pred_check_branch
    %13 = sbr.rel (0) target = $region13
  $region12: #{_forward_impl.6} parent=0 // pred_region
    _
  $region13: #{_forward_impl.6} parent=0 // pred_fallthru
    _
  %v14 = vld [vmem:[%s0] sm:$0xff]
  %v15 = vld [vmem:[%s0 + $0x8] sm:$0xff]
  %v16 = vld [vmem:[%s0 + $0x10] sm:$0xff]
  %v17 = vld [vmem:[%s0 + $0x18] sm:$0xff]
  %v18 = vld [vmem:[%s1] sm:$0xff]
  %v19 = vld [vmem:[%s1 + $0x8] sm:$0xff]
  %v20 = vld [vmem:[%s2] sm:$0x1]
  %v22 = vlaneseq
  %v23 = vshrl.u32 %v22, 7
  %v24 = vsub.s32 0, %v23
  %v25 = vrot.slane %v20, %v24
  %vm27 = vcmask 130048
  %v29 = vsel %vm27, %v14, 0
  %v32 = vsel %vm27, %v15, 0
  %v35 = vsel %vm27, %v16, 0
  %v38 = vsel %vm27, %v17, 0
  %40 = vmatprep.subr.mxu0 0.0
  %41 = vmatpush1.msra.mxu0 0.0
  %42 = vmatprep.subr.mxu0 0.0
  %43 = vmatpush1.msra.mxu0 0.0
  %44 = vmatprep.subr.mxu0 0.0
  %45 = vmatpush1.msra.mxu0 0.0
  %46 = vmatprep.subr.mxu0 0.0
  %47 = vmatpush1.msra.mxu0 0.0
  %48 = vmatprep.subr.mxu0 0.0
  %49 = vmatpush1.msra.mxu0 0.0
  %50 = vmatprep.subr.mxu0 0.0
  %51 = vmatpush1.msra.mxu0 0.0
  %52 = vmatprep.subr.mxu0 0.0
  %53 = vmatpush1.msra.mxu0 0.0
  %54 = vmatprep.subr.mxu0 0.0
  %55 = vmatpush1.msra.mxu0 0.0
  %56 = vmatprep.subr.mxu0 0.0
  %57 = vmatpush1.msra.mxu0 0.0
  %58 = vmatprep.subr.mxu0 0.0
  %59 = vmatpush1.msra.mxu0 0.0
  %60 = vmatprep.subr.mxu0 0.0
  %61 = vmatpush1.msra.mxu0 0.0
  %62 = vmatprep.subr.mxu0 0.0
  %63 = vmatpush1.msra.mxu0 0.0
  %64 = vmatprep.subr.mxu0 0.0
  %65 = vmatpush1.msra.mxu0 0.0
  %66 = vmatprep.subr.mxu0 0.0
  %67 = vmatpush1.msra.mxu0 0.0
  %68 = vmatprep.subr.mxu0 0.0
  %69 = vmatpush1.msra.mxu0 %v19
  %70 = vmatprep.subr.mxu0 0.0
  %71 = vmatpush1.msra.mxu0 %v18
  %72 = vmatprep.subr.mxu0 0.0
  %73 = vmatpush2.msra.mxu0 0.0
  %74 = vmatprep.subr.mxu0 0.0
  %75 = vmatpush2.msra.mxu0 0.0
  %76 = vmatprep.subr.mxu0 0.0
  %77 = vmatpush2.msra.mxu0 0.0
  %78 = vmatprep.subr.mxu0 0.0
  %79 = vmatpush2.msra.mxu0 0.0
  %80 = vmatprep.subr.mxu0 0.0
  %81 = vmatpush2.msra.mxu0 0.0
  %82 = vmatprep.subr.mxu0 0.0
  %83 = vmatpush2.msra.mxu0 0.0
  %84 = vmatprep.subr.mxu0 0.0
  %85 = vmatpush2.msra.mxu0 0.0
  %86 = vmatprep.subr.mxu0 0.0
  %87 = vmatpush2.msra.mxu0 0.0
  %88 = vmatprep.subr.mxu0 0.0
  %89 = vmatpush2.msra.mxu0 0.0
  %90 = vmatprep.subr.mxu0 0.0
  %91 = vmatpush2.msra.mxu0 0.0
  %92 = vmatprep.subr.mxu0 0.0
  %93 = vmatpush2.msra.mxu0 0.0
  %94 = vmatprep.subr.mxu0 0.0
  %95 = vmatpush2.msra.mxu0 0.0
  %96 = vmatprep.subr.mxu0 0.0
  %97 = vmatpush2.msra.mxu0 0.0
  %98 = vmatprep.subr.mxu0 0.0
  %99 = vmatpush2.msra.mxu0 0.0
  %100 = vmatprep.subr.mxu0 0.0
  %101 = vmatpush2.msra.mxu0 0.0
  %102 = vmatprep.subr.mxu0 0.0
  %103 = vmatpush2.msra.mxu0 0.0
  %104 = vmatprep.mubr.f32.mxu0 0.0
  %105 = vmatmul.mubr.f32.gmra.mxu0 %v29
  %v106 = vpop.f32.mrf.mxu0
  %v107 = vadd.f32 %v25, %v106
  %v108 = vpop.f32.mrf.mxu0
  %109 = vmatprep.mubr.f32.mxu0 0.0
  %110 = vmatmul.mubr.f32.gmra.mxu0 %v32
  %v111 = vpop.f32.mrf.mxu0
  %v112 = vadd.f32 %v25, %v111
  %v113 = vpop.f32.mrf.mxu0
  %114 = vmatprep.mubr.f32.mxu0 0.0
  %115 = vmatmul.mubr.f32.gmra.mxu0 %v35
  %v116 = vpop.f32.mrf.mxu0
  %v117 = vadd.f32 %v25, %v116
  %v118 = vpop.f32.mrf.mxu0
  %119 = vmatprep.mubr.f32.mxu0 0.0
  %120 = vmatmul.mubr.f32.gmra.mxu0 %v38
  %v121 = vpop.f32.mrf.mxu0
  %v122 = vadd.f32 %v25, %v121
  %v123 = vpop.f32.mrf.mxu0
  %124 = vdwg.mxu0
  %125 = vst [vmem:[%s3] sm:$0xff] %v107
  %126 = vst [vmem:[%s3 + $0x8] sm:$0xff] %v112
  %127 = vst [vmem:[%s3 + $0x10] sm:$0xff] %v117
  %128 = vst [vmem:[%s3 + $0x18] sm:$0xff] %v122
  // Predicated region
  $region14: #{_forward_impl.6} parent=0 // pred_check
    _
  $region15: #{_forward_impl.6} parent=0 // pred_check_branch
    %130 = sbr.rel (0) target = $region17
  $region16: #{_forward_impl.6} parent=0 // pred_region
    _
  $region17: #{_forward_impl.6} parent=0 // pred_fallthru
    _
  // Predicated region
  $region18: #{_forward_impl.6} parent=0 // pred_check
    _
  $region19: #{_forward_impl.6} parent=0 // pred_check_branch
    %132 = sbr.rel (0) target = $region21
  $region20: #{_forward_impl.6} parent=0 // pred_region
    _
  $region21: #{_forward_impl.6} parent=0 // pred_fallthru
    _

// kernel: _forward_impl.8
$region0: #{_forward_impl.8}
  #allocation0 [shape = 'u32[]', space=smem, size = 0x4, offset = 0x4, fixed_abs, tag = 'smem constant byte address 0x4 - core index']
  #allocation1 [shape = 'u32[144,128]{1,0:T(1,128)}', space=vmem, size = 0x12000, scoped, tag = 'internal scratch']
  %s0 = inlined_call_operand.vmem [shape: f32[8,128], index: 0, kind: input, shape index: {}]
  %s1 = inlined_call_operand.vmem [shape: f32[128,128], index: 1, kind: input, shape index: {}]
  %s2 = inlined_call_operand.vmem [shape: f32[1,128], index: 2, kind: input, shape index: {}]
  %s3 = inlined_call_operand.vmem [shape: f32[8,128], index: 3, kind: output, shape index: {}]
  %s4 = sld [smem:[#allocation0]]
  $region22: #{_forward_impl.8} parent=0
    _
  %s6 = ssub.s32 1, %s4
  %s7 = scalar_select 0, %s6, %s4
  // Predicated region
  $region2: #{_forward_impl.8} parent=0 // pred_check
    _
  $region3: #{_forward_impl.8} parent=0 // pred_check_branch
    %9 = sbr.rel (0) target = $region5
  $region4: #{_forward_impl.8} parent=0 // pred_region
    _
  $region5: #{_forward_impl.8} parent=0 // pred_fallthru
    _
  // Predicated region
  $region6: #{_forward_impl.8} parent=0 // pred_check
    _
  $region7: #{_forward_impl.8} parent=0 // pred_check_branch
    %11 = sbr.rel (0) target = $region9
  $region8: #{_forward_impl.8} parent=0 // pred_region
    _
  $region9: #{_forward_impl.8} parent=0 // pred_fallthru
    _
  // Predicated region
  $region10: #{_forward_impl.8} parent=0 // pred_check
    _
  $region11: #{_forward_impl.8} parent=0 // pred_check_branch
    %13 = sbr.rel (0) target = $region13
  $region12: #{_forward_impl.8} parent=0 // pred_region
    _
  $region13: #{_forward_impl.8} parent=0 // pred_fallthru
    _
  %v14 = vld [vmem:[%s0] sm:$0xff]
  %v15 = vld [vmem:[%s1] sm:$0xff]
  %v16 = vld [vmem:[%s1 + $0x8] sm:$0xff]
  %v17 = vld [vmem:[%s1 + $0x10] sm:$0xff]
  %v18 = vld [vmem:[%s1 + $0x18] sm:$0xff]
  %v19 = vld [vmem:[%s1 + $0x20] sm:$0xff]
  %v20 = vld [vmem:[%s1 + $0x28] sm:$0xff]
  %v21 = vld [vmem:[%s1 + $0x30] sm:$0xff]
  %v22 = vld [vmem:[%s1 + $0x38] sm:$0xff]
  %v23 = vld [vmem:[%s1 + $0x40] sm:$0xff]
  %v24 = vld [vmem:[%s1 + $0x48] sm:$0xff]
  %v25 = vld [vmem:[%s1 + $0x50] sm:$0xff]
  %v26 = vld [vmem:[%s1 + $0x58] sm:$0xff]
  %v27 = vld [vmem:[%s1 + $0x60] sm:$0xff]
  %v28 = vld [vmem:[%s1 + $0x68] sm:$0xff]
  %v29 = vld [vmem:[%s1 + $0x70] sm:$0xff]
  %v30 = vld [vmem:[%s1 + $0x78] sm:$0xff]
  %v31 = vld [vmem:[%s2] sm:$0x1]
  %v33 = vlaneseq
  %v34 = vshrl.u32 %v33, 7
  %v35 = vsub.s32 0, %v34
  %v36 = vrot.slane %v31, %v35
  %38 = vmatprep.subr.mxu0 0.0
  %39 = vmatpush1.msra.mxu0 %v30
  %40 = vmatprep.subr.mxu0 0.0
  %41 = vmatpush1.msra.mxu0 %v29
  %42 = vmatprep.subr.mxu0 0.0
  %43 = vmatpush1.msra.mxu0 %v28
  %44 = vmatprep.subr.mxu0 0.0
  %45 = vmatpush1.msra.mxu0 %v27
  %46 = vmatprep.subr.mxu0 0.0
  %47 = vmatpush1.msra.mxu0 %v26
  %48 = vmatprep.subr.mxu0 0.0
  %49 = vmatpush1.msra.mxu0 %v25
  %50 = vmatprep.subr.mxu0 0.0
  %51 = vmatpush1.msra.mxu0 %v24
  %52 = vmatprep.subr.mxu0 0.0
  %53 = vmatpush1.msra.mxu0 %v23
  %54 = vmatprep.subr.mxu0 0.0
  %55 = vmatpush1.msra.mxu0 %v22
  %56 = vmatprep.subr.mxu0 0.0
  %57 = vmatpush1.msra.mxu0 %v21
  %58 = vmatprep.subr.mxu0 0.0
  %59 = vmatpush1.msra.mxu0 %v20
  %60 = vmatprep.subr.mxu0 0.0
  %61 = vmatpush1.msra.mxu0 %v19
  %62 = vmatprep.subr.mxu0 0.0
  %63 = vmatpush1.msra.mxu0 %v18
  %64 = vmatprep.subr.mxu0 0.0
  %65 = vmatpush1.msra.mxu0 %v17
  %66 = vmatprep.subr.mxu0 0.0
  %67 = vmatpush1.msra.mxu0 %v16
  %68 = vmatprep.subr.mxu0 0.0
  %69 = vmatpush1.msra.mxu0 %v15
  %70 = vmatprep.subr.mxu0 0.0
  %71 = vmatpush2.msra.mxu0 0.0
  %72 = vmatprep.subr.mxu0 0.0
  %73 = vmatpush2.msra.mxu0 0.0
  %74 = vmatprep.subr.mxu0 0.0
  %75 = vmatpush2.msra.mxu0 0.0
  %76 = vmatprep.subr.mxu0 0.0
  %77 = vmatpush2.msra.mxu0 0.0
  %78 = vmatprep.subr.mxu0 0.0
  %79 = vmatpush2.msra.mxu0 0.0
  %80 = vmatprep.subr.mxu0 0.0
  %81 = vmatpush2.msra.mxu0 0.0
  %82 = vmatprep.subr.mxu0 0.0
  %83 = vmatpush2.msra.mxu0 0.0
  %84 = vmatprep.subr.mxu0 0.0
  %85 = vmatpush2.msra.mxu0 0.0
  %86 = vmatprep.subr.mxu0 0.0
  %87 = vmatpush2.msra.mxu0 0.0
  %88 = vmatprep.subr.mxu0 0.0
  %89 = vmatpush2.msra.mxu0 0.0
  %90 = vmatprep.subr.mxu0 0.0
  %91 = vmatpush2.msra.mxu0 0.0
  %92 = vmatprep.subr.mxu0 0.0
  %93 = vmatpush2.msra.mxu0 0.0
  %94 = vmatprep.subr.mxu0 0.0
  %95 = vmatpush2.msra.mxu0 0.0
  %96 = vmatprep.subr.mxu0 0.0
  %97 = vmatpush2.msra.mxu0 0.0
  %98 = vmatprep.subr.mxu0 0.0
  %99 = vmatpush2.msra.mxu0 0.0
  %100 = vmatprep.subr.mxu0 0.0
  %101 = vmatpush2.msra.mxu0 0.0
  %102 = vmatprep.mubr.f32.mxu0 0.0
  %103 = vmatmul.mubr.f32.gmra.mxu0 %v14
  %v104 = vpop.f32.mrf.mxu0
  %v105 = vadd.f32 %v36, %v104
  %v106 = vpop.f32.mrf.mxu0
  %107 = vdwg.mxu0
  %108 = vst [vmem:[%s3] sm:$0xff] %v105
  // Predicated region
  $region14: #{_forward_impl.8} parent=0 // pred_check
    _
  $region15: #{_forward_impl.8} parent=0 // pred_check_branch
    %110 = sbr.rel (0) target = $region17
  $region16: #{_forward_impl.8} parent=0 // pred_region
    _
  $region17: #{_forward_impl.8} parent=0 // pred_fallthru
    _
  // Predicated region
  $region18: #{_forward_impl.8} parent=0 // pred_check
    _
  $region19: #{_forward_impl.8} parent=0 // pred_check_branch
    %112 = sbr.rel (0) target = $region21
  $region20: #{_forward_impl.8} parent=0 // pred_region
    _
  $region21: #{_forward_impl.8} parent=0 // pred_fallthru
    _

// kernel: _forward_impl.9
$region0: #{_forward_impl.9}
  #allocation0 [shape = 'u32[]', space=smem, size = 0x4, offset = 0x4, fixed_abs, tag = 'smem constant byte address 0x4 - core index']
  #allocation1 [shape = 'u32[144,128]{1,0:T(1,128)}', space=vmem, size = 0x12000, scoped, tag = 'internal scratch']
  %s0 = inlined_call_operand.vmem [shape: f32[8,128], index: 0, kind: input, shape index: {}]
  %s1 = inlined_call_operand.vmem [shape: f32[8,128], index: 1, kind: input, shape index: {}]
  %s2 = inlined_call_operand.vmem [shape: f32[8,128], index: 2, kind: input, shape index: {}]
  %s3 = inlined_call_operand.vmem [shape: bf16[8,8,128], index: 3, kind: input, shape index: {}]
  %s4 = inlined_call_operand.vmem [shape: f32[8,8], index: 4, kind: input, shape index: {}]
  %s5 = inlined_call_operand.vmem [shape: bf16[8,16,128], index: 5, kind: input, shape index: {}]
  %s6 = inlined_call_operand.vmem [shape: bf16[512,512], index: 6, kind: input, shape index: {}]
  %s7 = inlined_call_operand.vmem [shape: f32[1,512], index: 7, kind: input, shape index: {}]
  %s8 = inlined_call_operand.vmem [shape: bf16[128,128], index: 8, kind: input, shape index: {}]
  %s9 = inlined_call_operand.vmem [shape: f32[1,128], index: 9, kind: input, shape index: {}]
  %s10 = inlined_call_operand.vmem [shape: f32[8,128], index: 10, kind: output, shape index: {0}]
  %s11 = inlined_call_operand.vmem [shape: f32[8,128], index: 11, kind: output, shape index: {1}]
  %s12 = inlined_call_operand.vmem [shape: f32[8,128], index: 12, kind: output, shape index: {2}]
  %13 = xla_tuple %s10, %s11, %s12
  %s14 = sld [smem:[#allocation0]]
  $region66: #{_forward_impl.9} parent=0
    _
  %s16 = ssub.s32 1, %s14
  %s17 = scalar_select 0, %s16, %s14
  // Predicated region
  $region2: #{_forward_impl.9} parent=0 // pred_check
    _
  $region3: #{_forward_impl.9} parent=0 // pred_check_branch
    %19 = sbr.rel (0) target = $region5
  $region4: #{_forward_impl.9} parent=0 // pred_region
    _
  $region5: #{_forward_impl.9} parent=0 // pred_fallthru
    _
  // Predicated region
  $region6: #{_forward_impl.9} parent=0 // pred_check
    _
  $region7: #{_forward_impl.9} parent=0 // pred_check_branch
    %21 = sbr.rel (0) target = $region9
  $region8: #{_forward_impl.9} parent=0 // pred_region
    _
  $region9: #{_forward_impl.9} parent=0 // pred_fallthru
    _
  // Predicated region
  $region10: #{_forward_impl.9} parent=0 // pred_check
    _
  $region11: #{_forward_impl.9} parent=0 // pred_check_branch
    %23 = sbr.rel (0) target = $region13
  $region12: #{_forward_impl.9} parent=0 // pred_region
    _
  $region13: #{_forward_impl.9} parent=0 // pred_fallthru
    _
  // Predicated region
  $region14: #{_forward_impl.9} parent=0 // pred_check
    _
  $region15: #{_forward_impl.9} parent=0 // pred_check_branch
    %25 = sbr.rel (0) target = $region17
  $region16: #{_forward_impl.9} parent=0 // pred_region
    _
  $region17: #{_forward_impl.9} parent=0 // pred_fallthru
    _
  // Predicated region
  $region18: #{_forward_impl.9} parent=0 // pred_check
    _
  $region19: #{_forward_impl.9} parent=0 // pred_check_branch
    %27 = sbr.rel (0) target = $region21
  $region20: #{_forward_impl.9} parent=0 // pred_region
    _
  $region21: #{_forward_impl.9} parent=0 // pred_fallthru
    _
  // Predicated region
  $region22: #{_forward_impl.9} parent=0 // pred_check
    _
  $region23: #{_forward_impl.9} parent=0 // pred_check_branch
    %29 = sbr.rel (0) target = $region25
  $region24: #{_forward_impl.9} parent=0 // pred_region
    _
  $region25: #{_forward_impl.9} parent=0 // pred_fallthru
    _
  // Predicated region
  $region26: #{_forward_impl.9} parent=0 // pred_check
    _
  $region27: #{_forward_impl.9} parent=0 // pred_check_branch
    %31 = sbr.rel (0) target = $region29
  $region28: #{_forward_impl.9} parent=0 // pred_region
    _
  $region29: #{_forward_impl.9} parent=0 // pred_fallthru
    _
  // Predicated region
  $region30: #{_forward_impl.9} parent=0 // pred_check
    _
  $region31: #{_forward_impl.9} parent=0 // pred_check_branch
    %33 = sbr.rel (0) target = $region33
  $region32: #{_forward_impl.9} parent=0 // pred_region
    _
  $region33: #{_forward_impl.9} parent=0 // pred_fallthru
    _
  // Predicated region
  $region34: #{_forward_impl.9} parent=0 // pred_check
    _
  $region35: #{_forward_impl.9} parent=0 // pred_check_branch
    %35 = sbr.rel (0) target = $region37
  $region36: #{_forward_impl.9} parent=0 // pred_region
    _
  $region37: #{_forward_impl.9} parent=0 // pred_fallthru
    _
  // Predicated region
  $region38: #{_forward_impl.9} parent=0 // pred_check
    _
  $region39: #{_forward_impl.9} parent=0 // pred_check_branch
    %37 = sbr.rel (0) target = $region41
  $region40: #{_forward_impl.9} parent=0 // pred_region
    _
  $region41: #{_forward_impl.9} parent=0 // pred_fallthru
    _
  %v39 = vld [vmem:[%s1] sm:$0xff]
  %v40 = vld [vmem:[%s2] sm:$0xff]
  %v41 = vld [vmem:[%s0] sm:$0xff]
  %v42 = vld [vmem:[%s3] sm:$0xf]
  %v43 = vld [vmem:[%s3 + $0x4] sm:$0xf]
  %v44 = vld [vmem:[%s3 + $0x8] sm:$0xf]
  %v45 = vld [vmem:[%s3 + $0xc] sm:$0xf]
  %v46 = vld [vmem:[%s3 + $0x10] sm:$0xf]
  %v47 = vld [vmem:[%s3 + $0x14] sm:$0xf]
  %v48 = vld [vmem:[%s3 + $0x18] sm:$0xf]
  %v49 = vld [vmem:[%s3 + $0x1c] sm:$0xf]
  %v50 = vld [vmem:[%s5] sm:$0xf]
  %v51 = vld [vmem:[%s5 + $0x4] sm:$0xf]
  %v52 = vld [vmem:[%s5 + $0x8] sm:$0xf]
  %v53 = vld [vmem:[%s5 + $0xc] sm:$0xf]
  %v54 = vld [vmem:[%s5 + $0x10] sm:$0xf]
  %v55 = vld [vmem:[%s5 + $0x14] sm:$0xf]
  %v56 = vld [vmem:[%s5 + $0x18] sm:$0xf]
  %v57 = vld [vmem:[%s5 + $0x1c] sm:$0xf]
  %v58 = vld [vmem:[%s5 + $0x20] sm:$0xf]
  %v59 = vld [vmem:[%s5 + $0x24] sm:$0xf]
  %v60 = vld [vmem:[%s5 + $0x28] sm:$0xf]
  %v61 = vld [vmem:[%s5 + $0x2c] sm:$0xf]
  %v62 = vld [vmem:[%s5 + $0x30] sm:$0xf]
  %v63 = vld [vmem:[%s5 + $0x34] sm:$0xf]
  %v64 = vld [vmem:[%s5 + $0x38] sm:$0xf]
  %v65 = vld [vmem:[%s5 + $0x3c] sm:$0xf]
  %v66 = vpack.c.bf16 %v39, %v39
  %v69 = vunpack.c.l.s4 1966171168
  %v70 = vunpack.c.0.s8 %v69
  %v71 = vlaneseq
  %v72 = vshrl.u32 %v71, 7
  %v73 = vsub.s32 %v70, %v72
  %v74 = vrot.slane %v66, %v73
  %v75 = vcombine.high %v74, %v74
  %v77 = vunpack.c.l.s4 1966171168
  %v78 = vunpack.c.0.s8 %v77
  %v79 = vlaneseq
  %v80 = vshrl.u32 %v79, 7
  %v81 = vsub.s32 %v78, %v80
  %v82 = vrot.slane %v74, %v81
  %v84 = vunpack.c.l.s4 1966171168
  %v85 = vunpack.c.0.s8 %v84
  %v86 = vlaneseq
  %v87 = vshrl.u32 %v86, 7
  %v88 = vsub.s32 %v85, %v87
  %v89 = vrot.slane %v75, %v88
  %v90 = vcombine.high %v82, %v82
  %v91 = vcombine.high %v89, %v89
  %v92 = vunpack.i.l.s16 %v82
  %v93 = vunpack.i.h.s16 %v82
  %v94 = vunpack.i.l.s16 %v89
  %v95 = vunpack.i.h.s16 %v89
  %v96 = vunpack.i.l.s16 %v90
  %v97 = vunpack.i.h.s16 %v90
  %v98 = vunpack.i.l.s16 %v91
  %v99 = vunpack.i.h.s16 %v91
  %v100 = vpack.i.b16 %v92, %v92
  %v101 = vlaneseq
  %v102 = vshrl.u32 %v101, 7
  %v103 = vsub.s32 0, %v102
  %v104 = vrot.slane %v100, %v103
  %106 = vmatprep.subr.bf16.mxu0 0
  %107 = vmatpush1.bf16.xpose.msra.mxu0 0
  %108 = vmatprep.subr.bf16.mxu0 0
  %109 = vmatpush1.bf16.xpose.msra.mxu0 0
  %110 = vmatprep.subr.bf16.mxu0 0
  %111 = vmatpush1.bf16.xpose.msra.mxu0 0
  %112 = vmatprep.subr.bf16.mxu0 0
  %113 = vmatpush1.bf16.xpose.msra.mxu0 0
  %114 = vmatprep.subr.bf16.mxu0 0
  %115 = vmatpush1.bf16.xpose.msra.mxu0 0
  %116 = vmatprep.subr.bf16.mxu0 0
  %117 = vmatpush1.bf16.xpose.msra.mxu0 0
  %118 = vmatprep.subr.bf16.mxu0 0
  %119 = vmatpush1.bf16.xpose.msra.mxu0 0
  %120 = vmatprep.subr.bf16.mxu0 0
  %121 = vmatpush1.bf16.xpose.msra.mxu0 %v42
  %122 = vmatprep.subr.bf16.mxu0 0
  %123 = vmatpush2.bf16.xpose.msra.mxu0 0
  %124 = vmatprep.subr.bf16.mxu0 0
  %125 = vmatpush2.bf16.xpose.msra.mxu0 0
  %126 = vmatprep.subr.bf16.mxu0 0
  %127 = vmatpush2.bf16.xpose.msra.mxu0 0
  %128 = vmatprep.subr.bf16.mxu0 0
  %129 = vmatpush2.bf16.xpose.msra.mxu0 0
  %130 = vmatprep.subr.bf16.mxu0 0
  %131 = vmatpush2.bf16.xpose.msra.mxu0 0
  %132 = vmatprep.subr.bf16.mxu0 0
  %133 = vmatpush2.bf16.xpose.msra.mxu0 0
  %134 = vmatprep.subr.bf16.mxu0 0
  %135 = vmatpush2.bf16.xpose.msra.mxu0 0
  %136 = vmatprep.subr.bf16.mxu0 0
  %137 = vmatpush2.bf16.xpose.msra.mxu0 0
  %138 = vmatprep.mubr.bf16.mxu0 0
  %139 = vmatmul.mubr.bf16.gmra.mxu0 %v104
  %v140 = vpop.f32.mrf.mxu0
  %v141 = vadd.f32 0.0, %v140
  %v142 = vpop.f32.mrf.mxu0
  %v143 = vpop.f32.mrf.mxu0
  %v144 = vpop.f32.mrf.mxu0
  %145 = vdwg.mxu0
  %v146 = vpack.i.b16 %v93, %v93
  %v147 = vlaneseq
  %v148 = vshrl.u32 %v147, 7
  %v149 = vsub.s32 0, %v148
  %v150 = vrot.slane %v146, %v149
  %152 = vmatprep.subr.bf16.mxu0 0
  %153 = vmatpush1.bf16.xpose.msra.mxu0 0
  %154 = vmatprep.subr.bf16.mxu0 0
  %155 = vmatpush1.bf16.xpose.msra.mxu0 0
  %156 = vmatprep.subr.bf16.mxu0 0
  %157 = vmatpush1.bf16.xpose.msra.mxu0 0
  %158 = vmatprep.subr.bf16.mxu0 0
  %159 = vmatpush1.bf16.xpose.msra.mxu0 0
  %160 = vmatprep.subr.bf16.mxu0 0
  %161 = vmatpush1.bf16.xpose.msra.mxu0 0
  %162 = vmatprep.subr.bf16.mxu0 0
  %163 = vmatpush1.bf16.xpose.msra.mxu0 0
  %164 = vmatprep.subr.bf16.mxu0 0
  %165 = vmatpush1.bf16.xpose.msra.mxu0 0
  %166 = vmatprep.subr.bf16.mxu0 0
  %167 = vmatpush1.bf16.xpose.msra.mxu0 %v43
  %168 = vmatprep.subr.bf16.mxu0 0
  %169 = vmatpush2.bf16.xpose.msra.mxu0 0
  %170 = vmatprep.subr.bf16.mxu0 0
  %171 = vmatpush2.bf16.xpose.msra.mxu0 0
  %172 = vmatprep.subr.bf16.mxu0 0
  %173 = vmatpush2.bf16.xpose.msra.mxu0 0
  %174 = vmatprep.subr.bf16.mxu0 0
  %175 = vmatpush2.bf16.xpose.msra.mxu0 0
  %176 = vmatprep.subr.bf16.mxu0 0
  %177 = vmatpush2.bf16.xpose.msra.mxu0 0
  %178 = vmatprep.subr.bf16.mxu0 0
  %179 = vmatpush2.bf16.xpose.msra.mxu0 0
  %180 = vmatprep.subr.bf16.mxu0 0
  %181 = vmatpush2.bf16.xpose.msra.mxu0 0
  %182 = vmatprep.subr.bf16.mxu0 0
  %183 = vmatpush2.bf16.xpose.msra.mxu0 0
  %184 = vmatprep.mubr.bf16.mxu0 0
  %185 = vmatmul.mubr.bf16.gmra.mxu0 %v150
  %v186 = vpop.f32.mrf.mxu0
  %v187 = vadd.f32 0.0, %v186
  %v188 = vpop.f32.mrf.mxu0
  %v189 = vpop.f32.mrf.mxu0
  %v190 = vpop.f32.mrf.mxu0
  %191 = vdwg.mxu0
  %v192 = vpack.i.b16 %v94, %v94
  %v193 = vlaneseq
  %v194 = vshrl.u32 %v193, 7
  %v195 = vsub.s32 0, %v194
  %v196 = vrot.slane %v192, %v195
  %198 = vmatprep.subr.bf16.mxu0 0
  %199 = vmatpush1.bf16.xpose.msra.mxu0 0
  %200 = vmatprep.subr.bf16.mxu0 0
  %201 = vmatpush1.bf16.xpose.msra.mxu0 0
  %202 = vmatprep.subr.bf16.mxu0 0
  %203 = vmatpush1.bf16.xpose.msra.mxu0 0
  %204 = vmatprep.subr.bf16.mxu0 0
  %205 = vmatpush1.bf16.xpose.msra.mxu0 0
  %206 = vmatprep.subr.bf16.mxu0 0
  %207 = vmatpush1.bf16.xpose.msra.mxu0 0
  %208 = vmatprep.subr.bf16.mxu0 0
  %209 = vmatpush1.bf16.xpose.msra.mxu0 0
  %210 = vmatprep.subr.bf16.mxu0 0
  %211 = vmatpush1.bf16.xpose.msra.mxu0 0
  %212 = vmatprep.subr.bf16.mxu0 0
  %213 = vmatpush1.bf16.xpose.msra.mxu0 %v44
  %214 = vmatprep.subr.bf16.mxu0 0
  %215 = vmatpush2.bf16.xpose.msra.mxu0 0
  %216 = vmatprep.subr.bf16.mxu0 0
  %217 = vmatpush2.bf16.xpose.msra.mxu0 0
  %218 = vmatprep.subr.bf16.mxu0 0
  %219 = vmatpush2.bf16.xpose.msra.mxu0 0
  %220 = vmatprep.subr.bf16.mxu0 0
  %221 = vmatpush2.bf16.xpose.msra.mxu0 0
  %222 = vmatprep.subr.bf16.mxu0 0
  %223 = vmatpush2.bf16.xpose.msra.mxu0 0
  %224 = vmatprep.subr.bf16.mxu0 0
  %225 = vmatpush2.bf16.xpose.msra.mxu0 0
  %226 = vmatprep.subr.bf16.mxu0 0
  %227 = vmatpush2.bf16.xpose.msra.mxu0 0
  %228 = vmatprep.subr.bf16.mxu0 0
  %229 = vmatpush2.bf16.xpose.msra.mxu0 0
  %230 = vmatprep.mubr.bf16.mxu0 0
  %231 = vmatmul.mubr.bf16.gmra.mxu0 %v196
  %v232 = vpop.f32.mrf.mxu0
  %v233 = vadd.f32 0.0, %v232
  %v234 = vpop.f32.mrf.mxu0
  %v235 = vpop.f32.mrf.mxu0
  %v236 = vpop.f32.mrf.mxu0
  %237 = vdwg.mxu0
  %v238 = vpack.i.b16 %v95, %v95
  %v239 = vlaneseq
  %v240 = vshrl.u32 %v239, 7
  %v241 = vsub.s32 0, %v240
  %v242 = vrot.slane %v238, %v241
  %244 = vmatprep.subr.bf16.mxu0 0
  %245 = vmatpush1.bf16.xpose.msra.mxu0 0
  %246 = vmatprep.subr.bf16.mxu0 0
  %247 = vmatpush1.bf16.xpose.msra.mxu0 0
  %248 = vmatprep.subr.bf16.mxu0 0
  %249 = vmatpush1.bf16.xpose.msra.mxu0 0
  %250 = vmatprep.subr.bf16.mxu0 0
  %251 = vmatpush1.bf16.xpose.msra.mxu0 0
  %252 = vmatprep.subr.bf16.mxu0 0
  %253 = vmatpush1.bf16.xpose.msra.mxu0 0
  %254 = vmatprep.subr.bf16.mxu0 0
  %255 = vmatpush1.bf16.xpose.msra.mxu0 0
  %256 = vmatprep.subr.bf16.mxu0 0
  %257 = vmatpush1.bf16.xpose.msra.mxu0 0
  %258 = vmatprep.subr.bf16.mxu0 0
  %259 = vmatpush1.bf16.xpose.msra.mxu0 %v45
  %260 = vmatprep.subr.bf16.mxu0 0
  %261 = vmatpush2.bf16.xpose.msra.mxu0 0
  %262 = vmatprep.subr.bf16.mxu0 0
  %263 = vmatpush2.bf16.xpose.msra.mxu0 0
  %264 = vmatprep.subr.bf16.mxu0 0
  %265 = vmatpush2.bf16.xpose.msra.mxu0 0
  %266 = vmatprep.subr.bf16.mxu0 0
  %267 = vmatpush2.bf16.xpose.msra.mxu0 0
  %268 = vmatprep.subr.bf16.mxu0 0
  %269 = vmatpush2.bf16.xpose.msra.mxu0 0
  %270 = vmatprep.subr.bf16.mxu0 0
  %271 = vmatpush2.bf16.xpose.msra.mxu0 0
  %272 = vmatprep.subr.bf16.mxu0 0
  %273 = vmatpush2.bf16.xpose.msra.mxu0 0
  %274 = vmatprep.subr.bf16.mxu0 0
  %275 = vmatpush2.bf16.xpose.msra.mxu0 0
  %276 = vmatprep.mubr.bf16.mxu0 0
  %277 = vmatmul.mubr.bf16.gmra.mxu0 %v242
  %v278 = vpop.f32.mrf.mxu0
  %v279 = vadd.f32 0.0, %v278
  %v280 = vpop.f32.mrf.mxu0
  %v281 = vpop.f32.mrf.mxu0
  %v282 = vpop.f32.mrf.mxu0
  %283 = vdwg.mxu0
  %v284 = vpack.i.b16 %v96, %v96
  %v285 = vlaneseq
  %v286 = vshrl.u32 %v285, 7
  %v287 = vsub.s32 0, %v286
  %v288 = vrot.slane %v284, %v287
  %290 = vmatprep.subr.bf16.mxu0 0
  %291 = vmatpush1.bf16.xpose.msra.mxu0 0
  %292 = vmatprep.subr.bf16.mxu0 0
  %293 = vmatpush1.bf16.xpose.msra.mxu0 0
  %294 = vmatprep.subr.bf16.mxu0 0
  %295 = vmatpush1.bf16.xpose.msra.mxu0 0
  %296 = vmatprep.subr.bf16.mxu0 0
  %297 = vmatpush1.bf16.xpose.msra.mxu0 0
  %298 = vmatprep.subr.bf16.mxu0 0
  %299 = vmatpush1.bf16.xpose.msra.mxu0 0
  %300 = vmatprep.subr.bf16.mxu0 0
  %301 = vmatpush1.bf16.xpose.msra.mxu0 0
  %302 = vmatprep.subr.bf16.mxu0 0
  %303 = vmatpush1.bf16.xpose.msra.mxu0 0
  %304 = vmatprep.subr.bf16.mxu0 0
  %305 = vmatpush1.bf16.xpose.msra.mxu0 %v46
  %306 = vmatprep.subr.bf16.mxu0 0
  %307 = vmatpush2.bf16.xpose.msra.mxu0 0
  %308 = vmatprep.subr.bf16.mxu0 0
  %309 = vmatpush2.bf16.xpose.msra.mxu0 0
  %310 = vmatprep.subr.bf16.mxu0 0
  %311 = vmatpush2.bf16.xpose.msra.mxu0 0
  %312 = vmatprep.subr.bf16.mxu0 0
  %313 = vmatpush2.bf16.xpose.msra.mxu0 0
  %314 = vmatprep.subr.bf16.mxu0 0
  %315 = vmatpush2.bf16.xpose.msra.mxu0 0
  %316 = vmatprep.subr.bf16.mxu0 0
  %317 = vmatpush2.bf16.xpose.msra.mxu0 0
  %318 = vmatprep.subr.bf16.mxu0 0
  %319 = vmatpush2.bf16.xpose.msra.mxu0 0
  %320 = vmatprep.subr.bf16.mxu0 0
  %321 = vmatpush2.bf16.xpose.msra.mxu0 0
  %322 = vmatprep.mubr.bf16.mxu0 0
  %323 = vmatmul.mubr.bf16.gmra.mxu0 %v288
  %v324 = vpop.f32.mrf.mxu0
  %v325 = vadd.f32 0.0, %v324
  %v326 = vpop.f32.mrf.mxu0
  %v327 = vpop.f32.mrf.mxu0
  %v328 = vpop.f32.mrf.mxu0
  %329 = vdwg.mxu0
  %v330 = vpack.i.b16 %v97, %v97
  %v331 = vlaneseq
  %v332 = vshrl.u32 %v331, 7
  %v333 = vsub.s32 0, %v332
  %v334 = vrot.slane %v330, %v333
  %336 = vmatprep.subr.bf16.mxu0 0
  %337 = vmatpush1.bf16.xpose.msra.mxu0 0
  %338 = vmatprep.subr.bf16.mxu0 0
  %339 = vmatpush1.bf16.xpose.msra.mxu0 0
  %340 = vmatprep.subr.bf16.mxu0 0
  %341 = vmatpush1.bf16.xpose.msra.mxu0 0
  %342 = vmatprep.subr.bf16.mxu0 0
  %343 = vmatpush1.bf16.xpose.msra.mxu0 0
  %344 = vmatprep.subr.bf16.mxu0 0
  %345 = vmatpush1.bf16.xpose.msra.mxu0 0
  %346 = vmatprep.subr.bf16.mxu0 0
  %347 = vmatpush1.bf16.xpose.msra.mxu0 0
  %348 = vmatprep.subr.bf16.mxu0 0
  %349 = vmatpush1.bf16.xpose.msra.mxu0 0
  %350 = vmatprep.subr.bf16.mxu0 0
  %351 = vmatpush1.bf16.xpose.msra.mxu0 %v47
  %352 = vmatprep.subr.bf16.mxu0 0
  %353 = vmatpush2.bf16.xpose.msra.mxu0 0
  %354 = vmatprep.subr.bf16.mxu0 0
  %355 = vmatpush2.bf16.xpose.msra.mxu0 0
  %356 = vmatprep.subr.bf16.mxu0 0
  %357 = vmatpush2.bf16.xpose.msra.mxu0 0
  %358 = vmatprep.subr.bf16.mxu0 0
  %359 = vmatpush2.bf16.xpose.msra.mxu0 0
  %360 = vmatprep.subr.bf16.mxu0 0
  %361 = vmatpush2.bf16.xpose.msra.mxu0 0
  %362 = vmatprep.subr.bf16.mxu0 0
  %363 = vmatpush2.bf16.xpose.msra.mxu0 0
  %364 = vmatprep.subr.bf16.mxu0 0
  %365 = vmatpush2.bf16.xpose.msra.mxu0 0
  %366 = vmatprep.subr.bf16.mxu0 0
  %367 = vmatpush2.bf16.xpose.msra.mxu0 0
  %368 = vmatprep.mubr.bf16.mxu0 0
  %369 = vmatmul.mubr.bf16.gmra.mxu0 %v334
  %v370 = vpop.f32.mrf.mxu0
  %v371 = vadd.f32 0.0, %v370
  %v372 = vpop.f32.mrf.mxu0
  %v373 = vpop.f32.mrf.mxu0
  %v374 = vpop.f32.mrf.mxu0
  %375 = vdwg.mxu0
  %v376 = vpack.i.b16 %v98, %v98
  %v377 = vlaneseq
  %v378 = vshrl.u32 %v377, 7
  %v379 = vsub.s32 0, %v378
  %v380 = vrot.slane %v376, %v379
  %382 = vmatprep.subr.bf16.mxu0 0
  %383 = vmatpush1.bf16.xpose.msra.mxu0 0
  %384 = vmatprep.subr.bf16.mxu0 0
  %385 = vmatpush1.bf16.xpose.msra.mxu0 0
  %386 = vmatprep.subr.bf16.mxu0 0
  %387 = vmatpush1.bf16.xpose.msra.mxu0 0
  %388 = vmatprep.subr.bf16.mxu0 0
  %389 = vmatpush1.bf16.xpose.msra.mxu0 0
  %390 = vmatprep.subr.bf16.mxu0 0
  %391 = vmatpush1.bf16.xpose.msra.mxu0 0
  %392 = vmatprep.subr.bf16.mxu0 0
  %393 = vmatpush1.bf16.xpose.msra.mxu0 0
  %394 = vmatprep.subr.bf16.mxu0 0
  %395 = vmatpush1.bf16.xpose.msra.mxu0 0
  %396 = vmatprep.subr.bf16.mxu0 0
  %397 = vmatpush1.bf16.xpose.msra.mxu0 %v48
  %398 = vmatprep.subr.bf16.mxu0 0
  %399 = vmatpush2.bf16.xpose.msra.mxu0 0
  %400 = vmatprep.subr.bf16.mxu0 0
  %401 = vmatpush2.bf16.xpose.msra.mxu0 0
  %402 = vmatprep.subr.bf16.mxu0 0
  %403 = vmatpush2.bf16.xpose.msra.mxu0 0
  %404 = vmatprep.subr.bf16.mxu0 0
  %405 = vmatpush2.bf16.xpose.msra.mxu0 0
  %406 = vmatprep.subr.bf16.mxu0 0
  %407 = vmatpush2.bf16.xpose.msra.mxu0 0
  %408 = vmatprep.subr.bf16.mxu0 0
  %409 = vmatpush2.bf16.xpose.msra.mxu0 0
  %410 = vmatprep.subr.bf16.mxu0 0
  %411 = vmatpush2.bf16.xpose.msra.mxu0 0
  %412 = vmatprep.subr.bf16.mxu0 0
  %413 = vmatpush2.bf16.xpose.msra.mxu0 0
  %414 = vmatprep.mubr.bf16.mxu0 0
  %415 = vmatmul.mubr.bf16.gmra.mxu0 %v380
  %v416 = vpop.f32.mrf.mxu0
  %v417 = vadd.f32 0.0, %v416
  %v418 = vpop.f32.mrf.mxu0
  %v419 = vpop.f32.mrf.mxu0
  %v420 = vpop.f32.mrf.mxu0
  %421 = vdwg.mxu0
  %v422 = vpack.i.b16 %v99, %v99
  %v423 = vlaneseq
  %v424 = vshrl.u32 %v423, 7
  %v425 = vsub.s32 0, %v424
  %v426 = vrot.slane %v422, %v425
  %428 = vmatprep.subr.bf16.mxu0 0
  %429 = vmatpush1.bf16.xpose.msra.mxu0 0
  %430 = vmatprep.subr.bf16.mxu0 0
  %431 = vmatpush1.bf16.xpose.msra.mxu0 0
  %432 = vmatprep.subr.bf16.mxu0 0
  %433 = vmatpush1.bf16.xpose.msra.mxu0 0
  %434 = vmatprep.subr.bf16.mxu0 0
  %435 = vmatpush1.bf16.xpose.msra.mxu0 0
  %436 = vmatprep.subr.bf16.mxu0 0
  %437 = vmatpush1.bf16.xpose.msra.mxu0 0
  %438 = vmatprep.subr.bf16.mxu0 0
  %439 = vmatpush1.bf16.xpose.msra.mxu0 0
  %440 = vmatprep.subr.bf16.mxu0 0
  %441 = vmatpush1.bf16.xpose.msra.mxu0 0
  %442 = vmatprep.subr.bf16.mxu0 0
  %443 = vmatpush1.bf16.xpose.msra.mxu0 %v49
  %444 = vmatprep.subr.bf16.mxu0 0
  %445 = vmatpush2.bf16.xpose.msra.mxu0 0
  %446 = vmatprep.subr.bf16.mxu0 0
  %447 = vmatpush2.bf16.xpose.msra.mxu0 0
  %448 = vmatprep.subr.bf16.mxu0 0
  %449 = vmatpush2.bf16.xpose.msra.mxu0 0
  %450 = vmatprep.subr.bf16.mxu0 0
  %451 = vmatpush2.bf16.xpose.msra.mxu0 0
  %452 = vmatprep.subr.bf16.mxu0 0
  %453 = vmatpush2.bf16.xpose.msra.mxu0 0
  %454 = vmatprep.subr.bf16.mxu0 0
  %455 = vmatpush2.bf16.xpose.msra.mxu0 0
  %456 = vmatprep.subr.bf16.mxu0 0
  %457 = vmatpush2.bf16.xpose.msra.mxu0 0
  %458 = vmatprep.subr.bf16.mxu0 0
  %459 = vmatpush2.bf16.xpose.msra.mxu0 0
  %460 = vmatprep.mubr.bf16.mxu0 0
  %461 = vmatmul.mubr.bf16.gmra.mxu0 %v426
  %v462 = vpop.f32.mrf.mxu0
  %v463 = vadd.f32 0.0, %v462
  %v464 = vpop.f32.mrf.mxu0
  %v465 = vpop.f32.mrf.mxu0
  %v466 = vpop.f32.mrf.mxu0
  %467 = vdwg.mxu0
  %v468 = vld [vmem:[%s4] sm:$0xff]
  %v470 = vrot.slane %v468, 1
  %v471 = vrot.slane %v468, 2
  %v472 = vrot.slane %v468, 3
  %v473 = vrot.slane %v468, 4
  %v474 = vrot.slane %v468, 5
  %v475 = vrot.slane %v468, 6
  %v476 = vrot.slane %v468, 7
  %v485 = vadd.f32 %v141, %v468
  %v486 = vadd.f32 %v187, %v470
  %v487 = vadd.f32 %v233, %v471
  %v488 = vadd.f32 %v279, %v472
  %v489 = vadd.f32 %v325, %v473
  %v490 = vadd.f32 %v371, %v474
  %v491 = vadd.f32 %v417, %v475
  %v492 = vadd.f32 %v463, %v476
  %v501 = vrot.slane %v486, 7
  %vm502 = vcmask 1041409
  %v503 = vsel %vm502, %v501, %v485
  %v504 = vrot.slane %v487, 6
  %vm505 = vcmask 1042434
  %v506 = vsel %vm505, %v504, %v503
  %v507 = vrot.slane %v488, 5
  %vm508 = vcmask 1043459
  %v509 = vsel %vm508, %v507, %v506
  %v510 = vrot.slane %v489, 4
  %vm511 = vcmask 1044484
  %v512 = vsel %vm511, %v510, %v509
  %v513 = vrot.slane %v490, 3
  %vm514 = vcmask 1045509
  %v515 = vsel %vm514, %v513, %v512
  %v516 = vrot.slane %v491, 2
  %vm517 = vcmask 1046534
  %v518 = vsel %vm517, %v516, %v515
  %v519 = vrot.slane %v492, 1
  %vm520 = vcmask 1047559
  %v521 = vsel %vm520, %v519, %v518
  %vm523 = vcmask 64512
  %v524 = vsel %vm523, %v521, -inf
  %525 = vmax.xlane.f32.xlu0 %v524
  %v526 = vpop.xlane.xlu0 %525
  %v528 = vrot.slane %v526, 1
  %v529 = vrot.slane %v526, 2
  %v530 = vrot.slane %v526, 3
  %v531 = vrot.slane %v526, 4
  %v532 = vrot.slane %v526, 5
  %v533 = vrot.slane %v526, 6
  %v534 = vrot.slane %v526, 7
  %v543 = vsub.f32 %v485, %v526
  %v544 = vsub.f32 %v486, %v528
  %v545 = vsub.f32 %v487, %v529
  %v546 = vsub.f32 %v488, %v530
  %v547 = vsub.f32 %v489, %v531
  %v548 = vsub.f32 %v490, %v532
  %v549 = vsub.f32 %v491, %v533
  %v550 = vsub.f32 %v492, %v534
  %v551 = vmul.f32 %v543, 1.442695
  %v552 = vpow.pop %v551
  %v553 = vmul.f32 %v544, 1.442695
  %v554 = vpow.pop %v553
  %v555 = vmul.f32 %v545, 1.442695
  %v556 = vpow.pop %v555
  %v557 = vmul.f32 %v546, 1.442695
  %v558 = vpow.pop %v557
  %v559 = vmul.f32 %v547, 1.442695
  %v560 = vpow.pop %v559
  %v561 = vmul.f32 %v548, 1.442695
  %v562 = vpow.pop %v561
  %v563 = vmul.f32 %v549, 1.442695
  %v564 = vpow.pop %v563
  %v565 = vmul.f32 %v550, 1.442695
  %v566 = vpow.pop %v565
  %v575 = vrot.slane %v554, 7
  %v576 = vsel %vm502, %v575, %v552
  %v577 = vrot.slane %v556, 6
  %v578 = vsel %vm505, %v577, %v576
  %v579 = vrot.slane %v558, 5
  %v580 = vsel %vm508, %v579, %v578
  %v581 = vrot.slane %v560, 4
  %v582 = vsel %vm511, %v581, %v580
  %v583 = vrot.slane %v562, 3
  %v584 = vsel %vm514, %v583, %v582
  %v585 = vrot.slane %v564, 2
  %v586 = vsel %vm517, %v585, %v584
  %v587 = vrot.slane %v566, 1
  %v588 = vsel %vm520, %v587, %v586
  %v590 = vsel %vm523, %v588, 0.0
  %591 = vadd.xlane.f32.xlu0 %v590
  %v592 = vpop.xlane.xlu0 %591
  %v593 = vrcp.pop %v592
  %v595 = vrot.slane %v593, 1
  %v596 = vrot.slane %v593, 2
  %v597 = vrot.slane %v593, 3
  %v598 = vrot.slane %v593, 4
  %v599 = vrot.slane %v593, 5
  %v600 = vrot.slane %v593, 6
  %v601 = vrot.slane %v593, 7
  %v610 = vmul.f32 %v552, %v593
  %v611 = vmul.f32 %v554, %v595
  %v612 = vmul.f32 %v556, %v596
  %v613 = vmul.f32 %v558, %v597
  %v614 = vmul.f32 %v560, %v598
  %v615 = vmul.f32 %v562, %v599
  %v616 = vmul.f32 %v564, %v600
  %v617 = vmul.f32 %v566, %v601
  %v618 = vpack.c.bf16 %v610, %v610
  %v619 = vpack.c.bf16 %v611, %v611
  %v620 = vpack.c.bf16 %v612, %v612
  %v621 = vpack.c.bf16 %v613, %v613
  %v622 = vpack.c.bf16 %v614, %v614
  %v623 = vpack.c.bf16 %v615, %v615
  %v624 = vpack.c.bf16 %v616, %v616
  %v625 = vpack.c.bf16 %v617, %v617
  %v627 = vsel %vm523, %v618, 0
  %vm629 = vcmask 1043456
  %v631 = vsel %vm629, %v42, 0
  %633 = vmatprep.subr.bf16.mxu0 0
  %634 = vmatpush1.bf16.msra.mxu0 0
  %635 = vmatprep.subr.bf16.mxu0 0
  %636 = vmatpush1.bf16.msra.mxu0 0
  %637 = vmatprep.subr.bf16.mxu0 0
  %638 = vmatpush1.bf16.msra.mxu0 0
  %639 = vmatprep.subr.bf16.mxu0 0
  %640 = vmatpush1.bf16.msra.mxu0 0
  %641 = vmatprep.subr.bf16.mxu0 0
  %642 = vmatpush1.bf16.msra.mxu0 0
  %643 = vmatprep.subr.bf16.mxu0 0
  %644 = vmatpush1.bf16.msra.mxu0 0
  %645 = vmatprep.subr.bf16.mxu0 0
  %646 = vmatpush1.bf16.msra.mxu0 0
  %647 = vmatprep.subr.bf16.mxu0 0
  %648 = vmatpush1.bf16.msra.mxu0 %v631
  %649 = vmatprep.subr.bf16.mxu0 0
  %650 = vmatpush2.bf16.msra.mxu0 0
  %651 = vmatprep.subr.bf16.mxu0 0
  %652 = vmatpush2.bf16.msra.mxu0 0
  %653 = vmatprep.subr.bf16.mxu0 0
  %654 = vmatpush2.bf16.msra.mxu0 0
  %655 = vmatprep.subr.bf16.mxu0 0
  %656 = vmatpush2.bf16.msra.mxu0 0
  %657 = vmatprep.subr.bf16.mxu0 0
  %658 = vmatpush2.bf16.msra.mxu0 0
  %659 = vmatprep.subr.bf16.mxu0 0
  %660 = vmatpush2.bf16.msra.mxu0 0
  %661 = vmatprep.subr.bf16.mxu0 0
  %662 = vmatpush2.bf16.msra.mxu0 0
  %663 = vmatprep.subr.bf16.mxu0 0
  %664 = vmatpush2.bf16.msra.mxu0 0
  %665 = vmatprep.mubr.bf16.mxu0 0
  %666 = vmatmul.mubr.bf16.gmra.mxu0 %v627
  %v667 = vpop.f32.mrf.mxu0
  %v668 = vadd.f32 0.0, %v667
  %v669 = vpop.f32.mrf.mxu0
  %v670 = vpop.f32.mrf.mxu0
  %v671 = vpop.f32.mrf.mxu0
  %672 = vdwg.mxu0
  %v674 = vsel %vm523, %v619, 0
  %v677 = vsel %vm629, %v43, 0
  %679 = vmatprep.subr.bf16.mxu0 0
  %680 = vmatpush1.bf16.msra.mxu0 0
  %681 = vmatprep.subr.bf16.mxu0 0
  %682 = vmatpush1.bf16.msra.mxu0 0
  %683 = vmatprep.subr.bf16.mxu0 0
  %684 = vmatpush1.bf16.msra.mxu0 0
  %685 = vmatprep.subr.bf16.mxu0 0
  %686 = vmatpush1.bf16.msra.mxu0 0
  %687 = vmatprep.subr.bf16.mxu0 0
  %688 = vmatpush1.bf16.msra.mxu0 0
  %689 = vmatprep.subr.bf16.mxu0 0
  %690 = vmatpush1.bf16.msra.mxu0 0
  %691 = vmatprep.subr.bf16.mxu0 0
  %692 = vmatpush1.bf16.msra.mxu0 0
  %693 = vmatprep.subr.bf16.mxu0 0
  %694 = vmatpush1.bf16.msra.mxu0 %v677
  %695 = vmatprep.subr.bf16.mxu0 0
  %696 = vmatpush2.bf16.msra.mxu0 0
  %697 = vmatprep.subr.bf16.mxu0 0
  %698 = vmatpush2.bf16.msra.mxu0 0
  %699 = vmatprep.subr.bf16.mxu0 0
  %700 = vmatpush2.bf16.msra.mxu0 0
  %701 = vmatprep.subr.bf16.mxu0 0
  %702 = vmatpush2.bf16.msra.mxu0 0
  %703 = vmatprep.subr.bf16.mxu0 0
  %704 = vmatpush2.bf16.msra.mxu0 0
  %705 = vmatprep.subr.bf16.mxu0 0
  %706 = vmatpush2.bf16.msra.mxu0 0
  %707 = vmatprep.subr.bf16.mxu0 0
  %708 = vmatpush2.bf16.msra.mxu0 0
  %709 = vmatprep.subr.bf16.mxu0 0
  %710 = vmatpush2.bf16.msra.mxu0 0
  %711 = vmatprep.mubr.bf16.mxu0 0
  %712 = vmatmul.mubr.bf16.gmra.mxu0 %v674
  %v713 = vpop.f32.mrf.mxu0
  %v714 = vadd.f32 0.0, %v713
  %v715 = vpop.f32.mrf.mxu0
  %v716 = vpop.f32.mrf.mxu0
  %v717 = vpop.f32.mrf.mxu0
  %718 = vdwg.mxu0
  %v720 = vsel %vm523, %v620, 0
  %v723 = vsel %vm629, %v44, 0
  %725 = vmatprep.subr.bf16.mxu0 0
  %726 = vmatpush1.bf16.msra.mxu0 0
  %727 = vmatprep.subr.bf16.mxu0 0
  %728 = vmatpush1.bf16.msra.mxu0 0
  %729 = vmatprep.subr.bf16.mxu0 0
  %730 = vmatpush1.bf16.msra.mxu0 0
  %731 = vmatprep.subr.bf16.mxu0 0
  %732 = vmatpush1.bf16.msra.mxu0 0
  %733 = vmatprep.subr.bf16.mxu0 0
  %734 = vmatpush1.bf16.msra.mxu0 0
  %735 = vmatprep.subr.bf16.mxu0 0
  %736 = vmatpush1.bf16.msra.mxu0 0
  %737 = vmatprep.subr.bf16.mxu0 0
  %738 = vmatpush1.bf16.msra.mxu0 0
  %739 = vmatprep.subr.bf16.mxu0 0
  %740 = vmatpush1.bf16.msra.mxu0 %v723
  %741 = vmatprep.subr.bf16.mxu0 0
  %742 = vmatpush2.bf16.msra.mxu0 0
  %743 = vmatprep.subr.bf16.mxu0 0
  %744 = vmatpush2.bf16.msra.mxu0 0
  %745 = vmatprep.subr.bf16.mxu0 0
  %746 = vmatpush2.bf16.msra.mxu0 0
  %747 = vmatprep.subr.bf16.mxu0 0
  %748 = vmatpush2.bf16.msra.mxu0 0
  %749 = vmatprep.subr.bf16.mxu0 0
  %750 = vmatpush2.bf16.msra.mxu0 0
  %751 = vmatprep.subr.bf16.mxu0 0
  %752 = vmatpush2.bf16.msra.mxu0 0
  %753 = vmatprep.subr.bf16.mxu0 0
  %754 = vmatpush2.bf16.msra.mxu0 0
  %755 = vmatprep.subr.bf16.mxu0 0
  %756 = vmatpush2.bf16.msra.mxu0 0
  %757 = vmatprep.mubr.bf16.mxu0 0
  %758 = vmatmul.mubr.bf16.gmra.mxu0 %v720
  %v759 = vpop.f32.mrf.mxu0
  %v760 = vadd.f32 0.0, %v759
  %v761 = vpop.f32.mrf.mxu0
  %v762 = vpop.f32.mrf.mxu0
  %v763 = vpop.f32.mrf.mxu0
  %764 = vdwg.mxu0
  %v766 = vsel %vm523, %v621, 0
  %v769 = vsel %vm629, %v45, 0
  %771 = vmatprep.subr.bf16.mxu0 0
  %772 = vmatpush1.bf16.msra.mxu0 0
  %773 = vmatprep.subr.bf16.mxu0 0
  %774 = vmatpush1.bf16.msra.mxu0 0
  %775 = vmatprep.subr.bf16.mxu0 0
  %776 = vmatpush1.bf16.msra.mxu0 0
  %777 = vmatprep.subr.bf16.mxu0 0
  %778 = vmatpush1.bf16.msra.mxu0 0
  %779 = vmatprep.subr.bf16.mxu0 0
  %780 = vmatpush1.bf16.msra.mxu0 0
  %781 = vmatprep.subr.bf16.mxu0 0
  %782 = vmatpush1.bf16.msra.mxu0 0
  %783 = vmatprep.subr.bf16.mxu0 0
  %784 = vmatpush1.bf16.msra.mxu0 0
  %785 = vmatprep.subr.bf16.mxu0 0
  %786 = vmatpush1.bf16.msra.mxu0 %v769
  %787 = vmatprep.subr.bf16.mxu0 0
  %788 = vmatpush2.bf16.msra.mxu0 0
  %789 = vmatprep.subr.bf16.mxu0 0
  %790 = vmatpush2.bf16.msra.mxu0 0
  %791 = vmatprep.subr.bf16.mxu0 0
  %792 = vmatpush2.bf16.msra.mxu0 0
  %793 = vmatprep.subr.bf16.mxu0 0
  %794 = vmatpush2.bf16.msra.mxu0 0
  %795 = vmatprep.subr.bf16.mxu0 0
  %796 = vmatpush2.bf16.msra.mxu0 0
  %797 = vmatprep.subr.bf16.mxu0 0
  %798 = vmatpush2.bf16.msra.mxu0 0
  %799 = vmatprep.subr.bf16.mxu0 0
  %800 = vmatpush2.bf16.msra.mxu0 0
  %801 = vmatprep.subr.bf16.mxu0 0
  %802 = vmatpush2.bf16.msra.mxu0 0
  %803 = vmatprep.mubr.bf16.mxu0 0
  %804 = vmatmul.mubr.bf16.gmra.mxu0 %v766
  %v805 = vpop.f32.mrf.mxu0
  %v806 = vadd.f32 0.0, %v805
  %v807 = vpop.f32.mrf.mxu0
  %v808 = vpop.f32.mrf.mxu0
  %v809 = vpop.f32.mrf.mxu0
  %810 = vdwg.mxu0
  %v812 = vsel %vm523, %v622, 0
  %v815 = vsel %vm629, %v46, 0
  %817 = vmatprep.subr.bf16.mxu0 0
  %818 = vmatpush1.bf16.msra.mxu0 0
  %819 = vmatprep.subr.bf16.mxu0 0
  %820 = vmatpush1.bf16.msra.mxu0 0
  %821 = vmatprep.subr.bf16.mxu0 0
  %822 = vmatpush1.bf16.msra.mxu0 0
  %823 = vmatprep.subr.bf16.mxu0 0
  %824 = vmatpush1.bf16.msra.mxu0 0
  %825 = vmatprep.subr.bf16.mxu0 0
  %826 = vmatpush1.bf16.msra.mxu0 0
  %827 = vmatprep.subr.bf16.mxu0 0
  %828 = vmatpush1.bf16.msra.mxu0 0
  %829 = vmatprep.subr.bf16.mxu0 0
  %830 = vmatpush1.bf16.msra.mxu0 0
  %831 = vmatprep.subr.bf16.mxu0 0
  %832 = vmatpush1.bf16.msra.mxu0 %v815
  %833 = vmatprep.subr.bf16.mxu0 0
  %834 = vmatpush2.bf16.msra.mxu0 0
  %835 = vmatprep.subr.bf16.mxu0 0
  %836 = vmatpush2.bf16.msra.mxu0 0
  %837 = vmatprep.subr.bf16.mxu0 0
  %838 = vmatpush2.bf16.msra.mxu0 0
  %839 = vmatprep.subr.bf16.mxu0 0
  %840 = vmatpush2.bf16.msra.mxu0 0
  %841 = vmatprep.subr.bf16.mxu0 0
  %842 = vmatpush2.bf16.msra.mxu0 0
  %843 = vmatprep.subr.bf16.mxu0 0
  %844 = vmatpush2.bf16.msra.mxu0 0
  %845 = vmatprep.subr.bf16.mxu0 0
  %846 = vmatpush2.bf16.msra.mxu0 0
  %847 = vmatprep.subr.bf16.mxu0 0
  %848 = vmatpush2.bf16.msra.mxu0 0
  %849 = vmatprep.mubr.bf16.mxu0 0
  %850 = vmatmul.mubr.bf16.gmra.mxu0 %v812
  %v851 = vpop.f32.mrf.mxu0
  %v852 = vadd.f32 0.0, %v851
  %v853 = vpop.f32.mrf.mxu0
  %v854 = vpop.f32.mrf.mxu0
  %v855 = vpop.f32.mrf.mxu0
  %856 = vdwg.mxu0
  %v858 = vsel %vm523, %v623, 0
  %v861 = vsel %vm629, %v47, 0
  %863 = vmatprep.subr.bf16.mxu0 0
  %864 = vmatpush1.bf16.msra.mxu0 0
  %865 = vmatprep.subr.bf16.mxu0 0
  %866 = vmatpush1.bf16.msra.mxu0 0
  %867 = vmatprep.subr.bf16.mxu0 0
  %868 = vmatpush1.bf16.msra.mxu0 0
  %869 = vmatprep.subr.bf16.mxu0 0
  %870 = vmatpush1.bf16.msra.mxu0 0
  %871 = vmatprep.subr.bf16.mxu0 0
  %872 = vmatpush1.bf16.msra.mxu0 0
  %873 = vmatprep.subr.bf16.mxu0 0
  %874 = vmatpush1.bf16.msra.mxu0 0
  %875 = vmatprep.subr.bf16.mxu0 0
  %876 = vmatpush1.bf16.msra.mxu0 0
  %877 = vmatprep.subr.bf16.mxu0 0
  %878 = vmatpush1.bf16.msra.mxu0 %v861
  %879 = vmatprep.subr.bf16.mxu0 0
  %880 = vmatpush2.bf16.msra.mxu0 0
  %881 = vmatprep.subr.bf16.mxu0 0
  %882 = vmatpush2.bf16.msra.mxu0 0
  %883 = vmatprep.subr.bf16.mxu0 0
  %884 = vmatpush2.bf16.msra.mxu0 0
  %885 = vmatprep.subr.bf16.mxu0 0
  %886 = vmatpush2.bf16.msra.mxu0 0
  %887 = vmatprep.subr.bf16.mxu0 0
  %888 = vmatpush2.bf16.msra.mxu0 0
  %889 = vmatprep.subr.bf16.mxu0 0
  %890 = vmatpush2.bf16.msra.mxu0 0
  %891 = vmatprep.subr.bf16.mxu0 0
  %892 = vmatpush2.bf16.msra.mxu0 0
  %893 = vmatprep.subr.bf16.mxu0 0
  %894 = vmatpush2.bf16.msra.mxu0 0
  %895 = vmatprep.mubr.bf16.mxu0 0
  %896 = vmatmul.mubr.bf16.gmra.mxu0 %v858
  %v897 = vpop.f32.mrf.mxu0
  %v898 = vadd.f32 0.0, %v897
  %v899 = vpop.f32.mrf.mxu0
  %v900 = vpop.f32.mrf.mxu0
  %v901 = vpop.f32.mrf.mxu0
  %902 = vdwg.mxu0
  %v904 = vsel %vm523, %v624, 0
  %v907 = vsel %vm629, %v48, 0
  %909 = vmatprep.subr.bf16.mxu0 0
  %910 = vmatpush1.bf16.msra.mxu0 0
  %911 = vmatprep.subr.bf16.mxu0 0
  %912 = vmatpush1.bf16.msra.mxu0 0
  %913 = vmatprep.subr.bf16.mxu0 0
  %914 = vmatpush1.bf16.msra.mxu0 0
  %915 = vmatprep.subr.bf16.mxu0 0
  %916 = vmatpush1.bf16.msra.mxu0 0
  %917 = vmatprep.subr.bf16.mxu0 0
  %918 = vmatpush1.bf16.msra.mxu0 0
  %919 = vmatprep.subr.bf16.mxu0 0
  %920 = vmatpush1.bf16.msra.mxu0 0
  %921 = vmatprep.subr.bf16.mxu0 0
  %922 = vmatpush1.bf16.msra.mxu0 0
  %923 = vmatprep.subr.bf16.mxu0 0
  %924 = vmatpush1.bf16.msra.mxu0 %v907
  %925 = vmatprep.subr.bf16.mxu0 0
  %926 = vmatpush2.bf16.msra.mxu0 0
  %927 = vmatprep.subr.bf16.mxu0 0
  %928 = vmatpush2.bf16.msra.mxu0 0
  %929 = vmatprep.subr.bf16.mxu0 0
  %930 = vmatpush2.bf16.msra.mxu0 0
  %931 = vmatprep.subr.bf16.mxu0 0
  %932 = vmatpush2.bf16.msra.mxu0 0
  %933 = vmatprep.subr.bf16.mxu0 0
  %934 = vmatpush2.bf16.msra.mxu0 0
  %935 = vmatprep.subr.bf16.mxu0 0
  %936 = vmatpush2.bf16.msra.mxu0 0
  %937 = vmatprep.subr.bf16.mxu0 0
  %938 = vmatpush2.bf16.msra.mxu0 0
  %939 = vmatprep.subr.bf16.mxu0 0
  %940 = vmatpush2.bf16.msra.mxu0 0
  %941 = vmatprep.mubr.bf16.mxu0 0
  %942 = vmatmul.mubr.bf16.gmra.mxu0 %v904
  %v943 = vpop.f32.mrf.mxu0
  %v944 = vadd.f32 0.0, %v943
  %v945 = vpop.f32.mrf.mxu0
  %v946 = vpop.f32.mrf.mxu0
  %v947 = vpop.f32.mrf.mxu0
  %948 = vdwg.mxu0
  %v950 = vsel %vm523, %v625, 0
  %v953 = vsel %vm629, %v49, 0
  %955 = vmatprep.subr.bf16.mxu0 0
  %956 = vmatpush1.bf16.msra.mxu0 0
  %957 = vmatprep.subr.bf16.mxu0 0
  %958 = vmatpush1.bf16.msra.mxu0 0
  %959 = vmatprep.subr.bf16.mxu0 0
  %960 = vmatpush1.bf16.msra.mxu0 0
  %961 = vmatprep.subr.bf16.mxu0 0
  %962 = vmatpush1.bf16.msra.mxu0 0
  %963 = vmatprep.subr.bf16.mxu0 0
  %964 = vmatpush1.bf16.msra.mxu0 0
  %965 = vmatprep.subr.bf16.mxu0 0
  %966 = vmatpush1.bf16.msra.mxu0 0
  %967 = vmatprep.subr.bf16.mxu0 0
  %968 = vmatpush1.bf16.msra.mxu0 0
  %969 = vmatprep.subr.bf16.mxu0 0
  %970 = vmatpush1.bf16.msra.mxu0 %v953
  %971 = vmatprep.subr.bf16.mxu0 0
  %972 = vmatpush2.bf16.msra.mxu0 0
  %973 = vmatprep.subr.bf16.mxu0 0
  %974 = vmatpush2.bf16.msra.mxu0 0
  %975 = vmatprep.subr.bf16.mxu0 0
  %976 = vmatpush2.bf16.msra.mxu0 0
  %977 = vmatprep.subr.bf16.mxu0 0
  %978 = vmatpush2.bf16.msra.mxu0 0
  %979 = vmatprep.subr.bf16.mxu0 0
  %980 = vmatpush2.bf16.msra.mxu0 0
  %981 = vmatprep.subr.bf16.mxu0 0
  %982 = vmatpush2.bf16.msra.mxu0 0
  %983 = vmatprep.subr.bf16.mxu0 0
  %984 = vmatpush2.bf16.msra.mxu0 0
  %985 = vmatprep.subr.bf16.mxu0 0
  %986 = vmatpush2.bf16.msra.mxu0 0
  %987 = vmatprep.mubr.bf16.mxu0 0
  %988 = vmatmul.mubr.bf16.gmra.mxu0 %v950
  %v989 = vpop.f32.mrf.mxu0
  %v990 = vadd.f32 0.0, %v989
  %v991 = vpop.f32.mrf.mxu0
  %v992 = vpop.f32.mrf.mxu0
  %v993 = vpop.f32.mrf.mxu0
  %994 = vdwg.mxu0
  %v997 = vunpack.c.l.b16 %v50
  %v998 = vunpack.c.l.b16 %v51
  %v999 = vpack.c.b16 %v998, %v997
  %1001 = vmatprep.subr.bf16.mxu0 0
  %1002 = vmatpush1.bf16.xpose.msra.mxu0 0
  %1003 = vmatprep.subr.bf16.mxu0 0
  %1004 = vmatpush1.bf16.xpose.msra.mxu0 0
  %1005 = vmatprep.subr.bf16.mxu0 0
  %1006 = vmatpush1.bf16.xpose.msra.mxu0 0
  %1007 = vmatprep.subr.bf16.mxu0 0
  %1008 = vmatpush1.bf16.xpose.msra.mxu0 0
  %1009 = vmatprep.subr.bf16.mxu0 0
  %1010 = vmatpush1.bf16.xpose.msra.mxu0 0
  %1011 = vmatprep.subr.bf16.mxu0 0
  %1012 = vmatpush1.bf16.xpose.msra.mxu0 0
  %1013 = vmatprep.subr.bf16.mxu0 0
  %1014 = vmatpush1.bf16.xpose.msra.mxu0 0
  %1015 = vmatprep.subr.bf16.mxu0 0
  %1016 = vmatpush1.bf16.xpose.msra.mxu0 %v999
  %1017 = vmatprep.subr.bf16.mxu0 0
  %1018 = vmatpush2.bf16.xpose.msra.mxu0 0
  %1019 = vmatprep.subr.bf16.mxu0 0
  %1020 = vmatpush2.bf16.xpose.msra.mxu0 0
  %1021 = vmatprep.subr.bf16.mxu0 0
  %1022 = vmatpush2.bf16.xpose.msra.mxu0 0
  %1023 = vmatprep.subr.bf16.mxu0 0
  %1024 = vmatpush2.bf16.xpose.msra.mxu0 0
  %1025 = vmatprep.subr.bf16.mxu0 0
  %1026 = vmatpush2.bf16.xpose.msra.mxu0 0
  %1027 = vmatprep.subr.bf16.mxu0 0
  %1028 = vmatpush2.bf16.xpose.msra.mxu0 0
  %1029 = vmatprep.subr.bf16.mxu0 0
  %1030 = vmatpush2.bf16.xpose.msra.mxu0 0
  %1031 = vmatprep.subr.bf16.mxu0 0
  %1032 = vmatpush2.bf16.xpose.msra.mxu0 0
  %1033 = vmatprep.mubr.bf16.mxu0 0
  %1034 = vmatmul.mubr.bf16.gmra.mxu0 %v104
  %v1035 = vpop.f32.mrf.mxu0
  %v1036 = vadd.f32 0.0, %v1035
  %v1037 = vpop.f32.mrf.mxu0
  %v1038 = vpop.f32.mrf.mxu0
  %v1039 = vpop.f32.mrf.mxu0
  %1040 = vdwg.mxu0
  %v1043 = vunpack.c.l.b16 %v52
  %v1044 = vunpack.c.l.b16 %v53
  %v1045 = vpack.c.b16 %v1044, %v1043
  %1047 = vmatprep.subr.bf16.mxu0 0
  %1048 = vmatpush1.bf16.xpose.msra.mxu0 0
  %1049 = vmatprep.subr.bf16.mxu0 0
  %1050 = vmatpush1.bf16.xpose.msra.mxu0 0
  %1051 = vmatprep.subr.bf16.mxu0 0
  %1052 = vmatpush1.bf16.xpose.msra.mxu0 0
  %1053 = vmatprep.subr.bf16.mxu0 0
  %1054 = vmatpush1.bf16.xpose.msra.mxu0 0
  %1055 = vmatprep.subr.bf16.mxu0 0
  %1056 = vmatpush1.bf16.xpose.msra.mxu0 0
  %1057 = vmatprep.subr.bf16.mxu0 0
  %1058 = vmatpush1.bf16.xpose.msra.mxu0 0
  %1059 = vmatprep.subr.bf16.mxu0 0
  %1060 = vmatpush1.bf16.xpose.msra.mxu0 0
  %1061 = vmatprep.subr.bf16.mxu0 0
  %1062 = vmatpush1.bf16.xpose.msra.mxu0 %v1045
  %1063 = vmatprep.subr.bf16.mxu0 0
  %1064 = vmatpush2.bf16.xpose.msra.mxu0 0
  %1065 = vmatprep.subr.bf16.mxu0 0
  %1066 = vmatpush2.bf16.xpose.msra.mxu0 0
  %1067 = vmatprep.subr.bf16.mxu0 0
  %1068 = vmatpush2.bf16.xpose.msra.mxu0 0
  %1069 = vmatprep.subr.bf16.mxu0 0
  %1070 = vmatpush2.bf16.xpose.msra.mxu0 0
  %1071 = vmatprep.subr.bf16.mxu0 0
  %1072 = vmatpush2.bf16.xpose.msra.mxu0 0
  %1073 = vmatprep.subr.bf16.mxu0 0
  %1074 = vmatpush2.bf16.xpose.msra.mxu0 0
  %1075 = vmatprep.subr.bf16.mxu0 0
  %1076 = vmatpush2.bf16.xpose.msra.mxu0 0
  %1077 = vmatprep.subr.bf16.mxu0 0
  %1078 = vmatpush2.bf16.xpose.msra.mxu0 0
  %1079 = vmatprep.mubr.bf16.mxu0 0
  %1080 = vmatmul.mubr.bf16.gmra.mxu0 %v150
  %v1081 = vpop.f32.mrf.mxu0
  %v1082 = vadd.f32 0.0, %v1081
  %v1083 = vpop.f32.mrf.mxu0
  %v1084 = vpop.f32.mrf.mxu0
  %v1085 = vpop.f32.mrf.mxu0
  %1086 = vdwg.mxu0
  %v1089 = vunpack.c.l.b16 %v54
  %v1090 = vunpack.c.l.b16 %v55
  %v1091 = vpack.c.b16 %v1090, %v1089
  %1093 = vmatprep.subr.bf16.mxu0 0
  %1094 = vmatpush1.bf16.xpose.msra.mxu0 0
  %1095 = vmatprep.subr.bf16.mxu0 0
  %1096 = vmatpush1.bf16.xpose.msra.mxu0 0
  %1097 = vmatprep.subr.bf16.mxu0 0
  %1098 = vmatpush1.bf16.xpose.msra.mxu0 0
  %1099 = vmatprep.subr.bf16.mxu0 0
  %1100 = vmatpush1.bf16.xpose.msra.mxu0 0
  %1101 = vmatprep.subr.bf16.mxu0 0
  %1102 = vmatpush1.bf16.xpose.msra.mxu0 0
  %1103 = vmatprep.subr.bf16.mxu0 0
  %1104 = vmatpush1.bf16.xpose.msra.mxu0 0
  %1105 = vmatprep.subr.bf16.mxu0 0
  %1106 = vmatpush1.bf16.xpose.msra.mxu0 0
  %1107 = vmatprep.subr.bf16.mxu0 0
  %1108 = vmatpush1.bf16.xpose.msra.mxu0 %v1091
  %1109 = vmatprep.subr.bf16.mxu0 0
  %1110 = vmatpush2.bf16.xpose.msra.mxu0 0
  %1111 = vmatprep.subr.bf16.mxu0 0
  %1112 = vmatpush2.bf16.xpose.msra.mxu0 0
  %1113 = vmatprep.subr.bf16.mxu0 0
  %1114 = vmatpush2.bf16.xpose.msra.mxu0 0
  %1115 = vmatprep.subr.bf16.mxu0 0
  %1116 = vmatpush2.bf16.xpose.msra.mxu0 0
  %1117 = vmatprep.subr.bf16.mxu0 0
  %1118 = vmatpush2.bf16.xpose.msra.mxu0 0
  %1119 = vmatprep.subr.bf16.mxu0 0
  %1120 = vmatpush2.bf16.xpose.msra.mxu0 0
  %1121 = vmatprep.subr.bf16.mxu0 0
  %1122 = vmatpush2.bf16.xpose.msra.mxu0 0
  %1123 = vmatprep.subr.bf16.mxu0 0
  %1124 = vmatpush2.bf16.xpose.msra.mxu0 0
  %1125 = vmatprep.mubr.bf16.mxu0 0
  %1126 = vmatmul.mubr.bf16.gmra.mxu0 %v196
  %v1127 = vpop.f32.mrf.mxu0
  %v1128 = vadd.f32 0.0, %v1127
  %v1129 = vpop.f32.mrf.mxu0
  %v1130 = vpop.f32.mrf.mxu0
  %v1131 = vpop.f32.mrf.mxu0
  %1132 = vdwg.mxu0
  %v1135 = vunpack.c.l.b16 %v56
  %v1136 = vunpack.c.l.b16 %v57
  %v1137 = vpack.c.b16 %v1136, %v1135
  %1139 = vmatprep.subr.bf16.mxu0 0
  %1140 = vmatpush1.bf16.xpose.msra.mxu0 0
  %1141 = vmatprep.subr.bf16.mxu0 0
  %1142 = vmatpush1.bf16.xpose.msra.mxu0 0
  %1143 = vmatprep.subr.bf16.mxu0 0
  %1144 = vmatpush1.bf16.xpose.msra.mxu0 0
  %1145 = vmatprep.subr.bf16.mxu0 0
  %1146 = vmatpush1.bf16.xpose.msra.mxu0 0
  %1147 = vmatprep.subr.bf16.mxu0 0
  %1148 = vmatpush1.bf16.xpose.msra.mxu0 0
  %1149 = vmatprep.subr.bf16.mxu0 0
  %1150 = vmatpush1.bf16.xpose.msra.mxu0 0
  %1151 = vmatprep.subr.bf16.mxu0 0
  %1152 = vmatpush1.bf16.xpose.msra.mxu0 0
  %1153 = vmatprep.subr.bf16.mxu0 0
  %1154 = vmatpush1.bf16.xpose.msra.mxu0 %v1137
  %1155 = vmatprep.subr.bf16.mxu0 0
  %1156 = vmatpush2.bf16.xpose.msra.mxu0 0
  %1157 = vmatprep.subr.bf16.mxu0 0
  %1158 = vmatpush2.bf16.xpose.msra.mxu0 0
  %1159 = vmatprep.subr.bf16.mxu0 0
  %1160 = vmatpush2.bf16.xpose.msra.mxu0 0
  %1161 = vmatprep.subr.bf16.mxu0 0
  %1162 = vmatpush2.bf16.xpose.msra.mxu0 0
  %1163 = vmatprep.subr.bf16.mxu0 0
  %1164 = vmatpush2.bf16.xpose.msra.mxu0 0
  %1165 = vmatprep.subr.bf16.mxu0 0
  %1166 = vmatpush2.bf16.xpose.msra.mxu0 0
  %1167 = vmatprep.subr.bf16.mxu0 0
  %1168 = vmatpush2.bf16.xpose.msra.mxu0 0
  %1169 = vmatprep.subr.bf16.mxu0 0
  %1170 = vmatpush2.bf16.xpose.msra.mxu0 0
  %1171 = vmatprep.mubr.bf16.mxu0 0
  %1172 = vmatmul.mubr.bf16.gmra.mxu0 %v242
  %v1173 = vpop.f32.mrf.mxu0
  %v1174 = vadd.f32 0.0, %v1173
  %v1175 = vpop.f32.mrf.mxu0
  %v1176 = vpop.f32.mrf.mxu0
  %v1177 = vpop.f32.mrf.mxu0
  %1178 = vdwg.mxu0
  %v1181 = vunpack.c.l.b16 %v58
  %v1182 = vunpack.c.l.b16 %v59
  %v1183 = vpack.c.b16 %v1182, %v1181
  %1185 = vmatprep.subr.bf16.mxu0 0
  %1186 = vmatpush1.bf16.xpose.msra.mxu0 0
  %1187 = vmatprep.subr.bf16.mxu0 0
  %1188 = vmatpush1.bf16.xpose.msra.mxu0 0
  %1189 = vmatprep.subr.bf16.mxu0 0
  %1190 = vmatpush1.bf16.xpose.msra.mxu0 0
  %1191 = vmatprep.subr.bf16.mxu0 0
  %1192 = vmatpush1.bf16.xpose.msra.mxu0 0
  %1193 = vmatprep.subr.bf16.mxu0 0
  %1194 = vmatpush1.bf16.xpose.msra.mxu0 0
  %1195 = vmatprep.subr.bf16.mxu0 0
  %1196 = vmatpush1.bf16.xpose.msra.mxu0 0
  %1197 = vmatprep.subr.bf16.mxu0 0
  %1198 = vmatpush1.bf16.xpose.msra.mxu0 0
  %1199 = vmatprep.subr.bf16.mxu0 0
  %1200 = vmatpush1.bf16.xpose.msra.mxu0 %v1183
  %1201 = vmatprep.subr.bf16.mxu0 0
  %1202 = vmatpush2.bf16.xpose.msra.mxu0 0
  %1203 = vmatprep.subr.bf16.mxu0 0
  %1204 = vmatpush2.bf16.xpose.msra.mxu0 0
  %1205 = vmatprep.subr.bf16.mxu0 0
  %1206 = vmatpush2.bf16.xpose.msra.mxu0 0
  %1207 = vmatprep.subr.bf16.mxu0 0
  %1208 = vmatpush2.bf16.xpose.msra.mxu0 0
  %1209 = vmatprep.subr.bf16.mxu0 0
  %1210 = vmatpush2.bf16.xpose.msra.mxu0 0
  %1211 = vmatprep.subr.bf16.mxu0 0
  %1212 = vmatpush2.bf16.xpose.msra.mxu0 0
  %1213 = vmatprep.subr.bf16.mxu0 0
  %1214 = vmatpush2.bf16.xpose.msra.mxu0 0
  %1215 = vmatprep.subr.bf16.mxu0 0
  %1216 = vmatpush2.bf16.xpose.msra.mxu0 0
  %1217 = vmatprep.mubr.bf16.mxu0 0
  %1218 = vmatmul.mubr.bf16.gmra.mxu0 %v288
  %v1219 = vpop.f32.mrf.mxu0
  %v1220 = vadd.f32 0.0, %v1219
  %v1221 = vpop.f32.mrf.mxu0
  %v1222 = vpop.f32.mrf.mxu0
  %v1223 = vpop.f32.mrf.mxu0
  %1224 = vdwg.mxu0
  %v1227 = vunpack.c.l.b16 %v60
  %v1228 = vunpack.c.l.b16 %v61
  %v1229 = vpack.c.b16 %v1228, %v1227
  %1231 = vmatprep.subr.bf16.mxu0 0
  %1232 = vmatpush1.bf16.xpose.msra.mxu0 0
  %1233 = vmatprep.subr.bf16.mxu0 0
  %1234 = vmatpush1.bf16.xpose.msra.mxu0 0
  %1235 = vmatprep.subr.bf16.mxu0 0
  %1236 = vmatpush1.bf16.xpose.msra.mxu0 0
  %1237 = vmatprep.subr.bf16.mxu0 0
  %1238 = vmatpush1.bf16.xpose.msra.mxu0 0
  %1239 = vmatprep.subr.bf16.mxu0 0
  %1240 = vmatpush1.bf16.xpose.msra.mxu0 0
  %1241 = vmatprep.subr.bf16.mxu0 0
  %1242 = vmatpush1.bf16.xpose.msra.mxu0 0
  %1243 = vmatprep.subr.bf16.mxu0 0
  %1244 = vmatpush1.bf16.xpose.msra.mxu0 0
  %1245 = vmatprep.subr.bf16.mxu0 0
  %1246 = vmatpush1.bf16.xpose.msra.mxu0 %v1229
  %1247 = vmatprep.subr.bf16.mxu0 0
  %1248 = vmatpush2.bf16.xpose.msra.mxu0 0
  %1249 = vmatprep.subr.bf16.mxu0 0
  %1250 = vmatpush2.bf16.xpose.msra.mxu0 0
  %1251 = vmatprep.subr.bf16.mxu0 0
  %1252 = vmatpush2.bf16.xpose.msra.mxu0 0
  %1253 = vmatprep.subr.bf16.mxu0 0
  %1254 = vmatpush2.bf16.xpose.msra.mxu0 0
  %1255 = vmatprep.subr.bf16.mxu0 0
  %1256 = vmatpush2.bf16.xpose.msra.mxu0 0
  %1257 = vmatprep.subr.bf16.mxu0 0
  %1258 = vmatpush2.bf16.xpose.msra.mxu0 0
  %1259 = vmatprep.subr.bf16.mxu0 0
  %1260 = vmatpush2.bf16.xpose.msra.mxu0 0
  %1261 = vmatprep.subr.bf16.mxu0 0
  %1262 = vmatpush2.bf16.xpose.msra.mxu0 0
  %1263 = vmatprep.mubr.bf16.mxu0 0
  %1264 = vmatmul.mubr.bf16.gmra.mxu0 %v334
  %v1265 = vpop.f32.mrf.mxu0
  %v1266 = vadd.f32 0.0, %v1265
  %v1267 = vpop.f32.mrf.mxu0
  %v1268 = vpop.f32.mrf.mxu0
  %v1269 = vpop.f32.mrf.mxu0
  %1270 = vdwg.mxu0
  %v1273 = vunpack.c.l.b16 %v62
  %v1274 = vunpack.c.l.b16 %v63
  %v1275 = vpack.c.b16 %v1274, %v1273
  %1277 = vmatprep.subr.bf16.mxu0 0
  %1278 = vmatpush1.bf16.xpose.msra.mxu0 0
  %1279 = vmatprep.subr.bf16.mxu0 0
  %1280 = vmatpush1.bf16.xpose.msra.mxu0 0
  %1281 = vmatprep.subr.bf16.mxu0 0
  %1282 = vmatpush1.bf16.xpose.msra.mxu0 0
  %1283 = vmatprep.subr.bf16.mxu0 0
  %1284 = vmatpush1.bf16.xpose.msra.mxu0 0
  %1285 = vmatprep.subr.bf16.mxu0 0
  %1286 = vmatpush1.bf16.xpose.msra.mxu0 0
  %1287 = vmatprep.subr.bf16.mxu0 0
  %1288 = vmatpush1.bf16.xpose.msra.mxu0 0
  %1289 = vmatprep.subr.bf16.mxu0 0
  %1290 = vmatpush1.bf16.xpose.msra.mxu0 0
  %1291 = vmatprep.subr.bf16.mxu0 0
  %1292 = vmatpush1.bf16.xpose.msra.mxu0 %v1275
  %1293 = vmatprep.subr.bf16.mxu0 0
  %1294 = vmatpush2.bf16.xpose.msra.mxu0 0
  %1295 = vmatprep.subr.bf16.mxu0 0
  %1296 = vmatpush2.bf16.xpose.msra.mxu0 0
  %1297 = vmatprep.subr.bf16.mxu0 0
  %1298 = vmatpush2.bf16.xpose.msra.mxu0 0
  %1299 = vmatprep.subr.bf16.mxu0 0
  %1300 = vmatpush2.bf16.xpose.msra.mxu0 0
  %1301 = vmatprep.subr.bf16.mxu0 0
  %1302 = vmatpush2.bf16.xpose.msra.mxu0 0
  %1303 = vmatprep.subr.bf16.mxu0 0
  %1304 = vmatpush2.bf16.xpose.msra.mxu0 0
  %1305 = vmatprep.subr.bf16.mxu0 0
  %1306 = vmatpush2.bf16.xpose.msra.mxu0 0
  %1307 = vmatprep.subr.bf16.mxu0 0
  %1308 = vmatpush2.bf16.xpose.msra.mxu0 0
  %1309 = vmatprep.mubr.bf16.mxu0 0
  %1310 = vmatmul.mubr.bf16.gmra.mxu0 %v380
  %v1311 = vpop.f32.mrf.mxu0
  %v1312 = vadd.f32 0.0, %v1311
  %v1313 = vpop.f32.mrf.mxu0
  %v1314 = vpop.f32.mrf.mxu0
  %v1315 = vpop.f32.mrf.mxu0
  %1316 = vdwg.mxu0
  %v1319 = vunpack.c.l.b16 %v64
  %v1320 = vunpack.c.l.b16 %v65
  %v1321 = vpack.c.b16 %v1320, %v1319
  %1323 = vmatprep.subr.bf16.mxu0 0
  %1324 = vmatpush1.bf16.xpose.msra.mxu0 0
  %1325 = vmatprep.subr.bf16.mxu0 0
  %1326 = vmatpush1.bf16.xpose.msra.mxu0 0
  %1327 = vmatprep.subr.bf16.mxu0 0
  %1328 = vmatpush1.bf16.xpose.msra.mxu0 0
  %1329 = vmatprep.subr.bf16.mxu0 0
  %1330 = vmatpush1.bf16.xpose.msra.mxu0 0
  %1331 = vmatprep.subr.bf16.mxu0 0
  %1332 = vmatpush1.bf16.xpose.msra.mxu0 0
  %1333 = vmatprep.subr.bf16.mxu0 0
  %1334 = vmatpush1.bf16.xpose.msra.mxu0 0
  %1335 = vmatprep.subr.bf16.mxu0 0
  %1336 = vmatpush1.bf16.xpose.msra.mxu0 0
  %1337 = vmatprep.subr.bf16.mxu0 0
  %1338 = vmatpush1.bf16.xpose.msra.mxu0 %v1321
  %1339 = vmatprep.subr.bf16.mxu0 0
  %1340 = vmatpush2.bf16.xpose.msra.mxu0 0
  %1341 = vmatprep.subr.bf16.mxu0 0
  %1342 = vmatpush2.bf16.xpose.msra.mxu0 0
  %1343 = vmatprep.subr.bf16.mxu0 0
  %1344 = vmatpush2.bf16.xpose.msra.mxu0 0
  %1345 = vmatprep.subr.bf16.mxu0 0
  %1346 = vmatpush2.bf16.xpose.msra.mxu0 0
  %1347 = vmatprep.subr.bf16.mxu0 0
  %1348 = vmatpush2.bf16.xpose.msra.mxu0 0
  %1349 = vmatprep.subr.bf16.mxu0 0
  %1350 = vmatpush2.bf16.xpose.msra.mxu0 0
  %1351 = vmatprep.subr.bf16.mxu0 0
  %1352 = vmatpush2.bf16.xpose.msra.mxu0 0
  %1353 = vmatprep.subr.bf16.mxu0 0
  %1354 = vmatpush2.bf16.xpose.msra.mxu0 0
  %1355 = vmatprep.mubr.bf16.mxu0 0
  %1356 = vmatmul.mubr.bf16.gmra.mxu0 %v426
  %v1357 = vpop.f32.mrf.mxu0
  %v1358 = vadd.f32 0.0, %v1357
  %v1359 = vpop.f32.mrf.mxu0
  %v1360 = vpop.f32.mrf.mxu0
  %v1361 = vpop.f32.mrf.mxu0
  %1362 = vdwg.mxu0
  %v1371 = vrot.slane %v1082, 7
  %v1372 = vsel %vm502, %v1371, %v1036
  %v1373 = vrot.slane %v1128, 6
  %v1374 = vsel %vm505, %v1373, %v1372
  %v1375 = vrot.slane %v1174, 5
  %v1376 = vsel %vm508, %v1375, %v1374
  %v1377 = vrot.slane %v1220, 4
  %v1378 = vsel %vm511, %v1377, %v1376
  %v1379 = vrot.slane %v1266, 3
  %v1380 = vsel %vm514, %v1379, %v1378
  %v1381 = vrot.slane %v1312, 2
  %v1382 = vsel %vm517, %v1381, %v1380
  %v1383 = vrot.slane %v1358, 1
  %v1384 = vsel %vm520, %v1383, %v1382
  %vm1386 = vcmask 130048
  %v1387 = vsel %vm1386, %v1384, -inf
  %1388 = vmax.xlane.f32.xlu0 %v1387
  %v1389 = vpop.xlane.xlu0 %1388
  %v1391 = vrot.slane %v1389, 1
  %v1392 = vrot.slane %v1389, 2
  %v1393 = vrot.slane %v1389, 3
  %v1394 = vrot.slane %v1389, 4
  %v1395 = vrot.slane %v1389, 5
  %v1396 = vrot.slane %v1389, 6
  %v1397 = vrot.slane %v1389, 7
  %v1406 = vsub.f32 %v1036, %v1389
  %v1407 = vsub.f32 %v1082, %v1391
  %v1408 = vsub.f32 %v1128, %v1392
  %v1409 = vsub.f32 %v1174, %v1393
  %v1410 = vsub.f32 %v1220, %v1394
  %v1411 = vsub.f32 %v1266, %v1395
  %v1412 = vsub.f32 %v1312, %v1396
  %v1413 = vsub.f32 %v1358, %v1397
  %v1414 = vmul.f32 %v1406, 1.442695
  %v1415 = vpow.pop %v1414
  %v1416 = vmul.f32 %v1407, 1.442695
  %v1417 = vpow.pop %v1416
  %v1418 = vmul.f32 %v1408, 1.442695
  %v1419 = vpow.pop %v1418
  %v1420 = vmul.f32 %v1409, 1.442695
  %v1421 = vpow.pop %v1420
  %v1422 = vmul.f32 %v1410, 1.442695
  %v1423 = vpow.pop %v1422
  %v1424 = vmul.f32 %v1411, 1.442695
  %v1425 = vpow.pop %v1424
  %v1426 = vmul.f32 %v1412, 1.442695
  %v1427 = vpow.pop %v1426
  %v1428 = vmul.f32 %v1413, 1.442695
  %v1429 = vpow.pop %v1428
  %v1438 = vrot.slane %v1417, 7
  %v1439 = vsel %vm502, %v1438, %v1415
  %v1440 = vrot.slane %v1419, 6
  %v1441 = vsel %vm505, %v1440, %v1439
  %v1442 = vrot.slane %v1421, 5
  %v1443 = vsel %vm508, %v1442, %v1441
  %v1444 = vrot.slane %v1423, 4
  %v1445 = vsel %vm511, %v1444, %v1443
  %v1446 = vrot.slane %v1425, 3
  %v1447 = vsel %vm514, %v1446, %v1445
  %v1448 = vrot.slane %v1427, 2
  %v1449 = vsel %vm517, %v1448, %v1447
  %v1450 = vrot.slane %v1429, 1
  %v1451 = vsel %vm520, %v1450, %v1449
  %v1453 = vsel %vm1386, %v1451, 0.0
  %1454 = vadd.xlane.f32.xlu0 %v1453
  %v1455 = vpop.xlane.xlu0 %1454
  %v1456 = vrcp.pop %v1455
  %v1458 = vrot.slane %v1456, 1
  %v1459 = vrot.slane %v1456, 2
  %v1460 = vrot.slane %v1456, 3
  %v1461 = vrot.slane %v1456, 4
  %v1462 = vrot.slane %v1456, 5
  %v1463 = vrot.slane %v1456, 6
  %v1464 = vrot.slane %v1456, 7
  %v1473 = vmul.f32 %v1415, %v1456
  %v1474 = vmul.f32 %v1417, %v1458
  %v1475 = vmul.f32 %v1419, %v1459
  %v1476 = vmul.f32 %v1421, %v1460
  %v1477 = vmul.f32 %v1423, %v1461
  %v1478 = vmul.f32 %v1425, %v1462
  %v1479 = vmul.f32 %v1427, %v1463
  %v1480 = vmul.f32 %v1429, %v1464
  %v1481 = vpack.c.bf16 %v1473, %v1473
  %v1482 = vpack.c.bf16 %v1474, %v1474
  %v1483 = vpack.c.bf16 %v1475, %v1475
  %v1484 = vpack.c.bf16 %v1476, %v1476
  %v1485 = vpack.c.bf16 %v1477, %v1477
  %v1486 = vpack.c.bf16 %v1478, %v1478
  %v1487 = vpack.c.bf16 %v1479, %v1479
  %v1488 = vpack.c.bf16 %v1480, %v1480
  %v1490 = vsel %vm1386, %v1481, 0
  %1492 = vmatprep.subr.bf16.mxu0 0
  %1493 = vmatpush1.bf16.msra.mxu0 0
  %1494 = vmatprep.subr.bf16.mxu0 0
  %1495 = vmatpush1.bf16.msra.mxu0 0
  %1496 = vmatprep.subr.bf16.mxu0 0
  %1497 = vmatpush1.bf16.msra.mxu0 0
  %1498 = vmatprep.subr.bf16.mxu0 0
  %1499 = vmatpush1.bf16.msra.mxu0 0
  %1500 = vmatprep.subr.bf16.mxu0 0
  %1501 = vmatpush1.bf16.msra.mxu0 0
  %1502 = vmatprep.subr.bf16.mxu0 0
  %1503 = vmatpush1.bf16.msra.mxu0 0
  %1504 = vmatprep.subr.bf16.mxu0 0
  %1505 = vmatpush1.bf16.msra.mxu0 0
  %1506 = vmatprep.subr.bf16.mxu0 0
  %1507 = vmatpush1.bf16.msra.mxu0 %v999
  %1508 = vmatprep.subr.bf16.mxu0 0
  %1509 = vmatpush2.bf16.msra.mxu0 0
  %1510 = vmatprep.subr.bf16.mxu0 0
  %1511 = vmatpush2.bf16.msra.mxu0 0
  %1512 = vmatprep.subr.bf16.mxu0 0
  %1513 = vmatpush2.bf16.msra.mxu0 0
  %1514 = vmatprep.subr.bf16.mxu0 0
  %1515 = vmatpush2.bf16.msra.mxu0 0
  %1516 = vmatprep.subr.bf16.mxu0 0
  %1517 = vmatpush2.bf16.msra.mxu0 0
  %1518 = vmatprep.subr.bf16.mxu0 0
  %1519 = vmatpush2.bf16.msra.mxu0 0
  %1520 = vmatprep.subr.bf16.mxu0 0
  %1521 = vmatpush2.bf16.msra.mxu0 0
  %1522 = vmatprep.subr.bf16.mxu0 0
  %1523 = vmatpush2.bf16.msra.mxu0 0
  %1524 = vmatprep.mubr.bf16.mxu0 0
  %1525 = vmatmul.mubr.bf16.gmra.mxu0 %v1490
  %v1526 = vpop.f32.mrf.mxu0
  %v1527 = vadd.f32 0.0, %v1526
  %v1528 = vpop.f32.mrf.mxu0
  %v1529 = vpop.f32.mrf.mxu0
  %v1530 = vpop.f32.mrf.mxu0
  %1531 = vdwg.mxu0
  %v1533 = vsel %vm1386, %v1482, 0
  %1535 = vmatprep.subr.bf16.mxu0 0
  %1536 = vmatpush1.bf16.msra.mxu0 0
  %1537 = vmatprep.subr.bf16.mxu0 0
  %1538 = vmatpush1.bf16.msra.mxu0 0
  %1539 = vmatprep.subr.bf16.mxu0 0
  %1540 = vmatpush1.bf16.msra.mxu0 0
  %1541 = vmatprep.subr.bf16.mxu0 0
  %1542 = vmatpush1.bf16.msra.mxu0 0
  %1543 = vmatprep.subr.bf16.mxu0 0
  %1544 = vmatpush1.bf16.msra.mxu0 0
  %1545 = vmatprep.subr.bf16.mxu0 0
  %1546 = vmatpush1.bf16.msra.mxu0 0
  %1547 = vmatprep.subr.bf16.mxu0 0
  %1548 = vmatpush1.bf16.msra.mxu0 0
  %1549 = vmatprep.subr.bf16.mxu0 0
  %1550 = vmatpush1.bf16.msra.mxu0 %v1045
  %1551 = vmatprep.subr.bf16.mxu0 0
  %1552 = vmatpush2.bf16.msra.mxu0 0
  %1553 = vmatprep.subr.bf16.mxu0 0
  %1554 = vmatpush2.bf16.msra.mxu0 0
  %1555 = vmatprep.subr.bf16.mxu0 0
  %1556 = vmatpush2.bf16.msra.mxu0 0
  %1557 = vmatprep.subr.bf16.mxu0 0
  %1558 = vmatpush2.bf16.msra.mxu0 0
  %1559 = vmatprep.subr.bf16.mxu0 0
  %1560 = vmatpush2.bf16.msra.mxu0 0
  %1561 = vmatprep.subr.bf16.mxu0 0
  %1562 = vmatpush2.bf16.msra.mxu0 0
  %1563 = vmatprep.subr.bf16.mxu0 0
  %1564 = vmatpush2.bf16.msra.mxu0 0
  %1565 = vmatprep.subr.bf16.mxu0 0
  %1566 = vmatpush2.bf16.msra.mxu0 0
  %1567 = vmatprep.mubr.bf16.mxu0 0
  %1568 = vmatmul.mubr.bf16.gmra.mxu0 %v1533
  %v1569 = vpop.f32.mrf.mxu0
  %v1570 = vadd.f32 0.0, %v1569
  %v1571 = vpop.f32.mrf.mxu0
  %v1572 = vpop.f32.mrf.mxu0
  %v1573 = vpop.f32.mrf.mxu0
  %1574 = vdwg.mxu0
  %v1576 = vsel %vm1386, %v1483, 0
  %1578 = vmatprep.subr.bf16.mxu0 0
  %1579 = vmatpush1.bf16.msra.mxu0 0
  %1580 = vmatprep.subr.bf16.mxu0 0
  %1581 = vmatpush1.bf16.msra.mxu0 0
  %1582 = vmatprep.subr.bf16.mxu0 0
  %1583 = vmatpush1.bf16.msra.mxu0 0
  %1584 = vmatprep.subr.bf16.mxu0 0
  %1585 = vmatpush1.bf16.msra.mxu0 0
  %1586 = vmatprep.subr.bf16.mxu0 0
  %1587 = vmatpush1.bf16.msra.mxu0 0
  %1588 = vmatprep.subr.bf16.mxu0 0
  %1589 = vmatpush1.bf16.msra.mxu0 0
  %1590 = vmatprep.subr.bf16.mxu0 0
  %1591 = vmatpush1.bf16.msra.mxu0 0
  %1592 = vmatprep.subr.bf16.mxu0 0
  %1593 = vmatpush1.bf16.msra.mxu0 %v1091
  %1594 = vmatprep.subr.bf16.mxu0 0
  %1595 = vmatpush2.bf16.msra.mxu0 0
  %1596 = vmatprep.subr.bf16.mxu0 0
  %1597 = vmatpush2.bf16.msra.mxu0 0
  %1598 = vmatprep.subr.bf16.mxu0 0
  %1599 = vmatpush2.bf16.msra.mxu0 0
  %1600 = vmatprep.subr.bf16.mxu0 0
  %1601 = vmatpush2.bf16.msra.mxu0 0
  %1602 = vmatprep.subr.bf16.mxu0 0
  %1603 = vmatpush2.bf16.msra.mxu0 0
  %1604 = vmatprep.subr.bf16.mxu0 0
  %1605 = vmatpush2.bf16.msra.mxu0 0
  %1606 = vmatprep.subr.bf16.mxu0 0
  %1607 = vmatpush2.bf16.msra.mxu0 0
  %1608 = vmatprep.subr.bf16.mxu0 0
  %1609 = vmatpush2.bf16.msra.mxu0 0
  %1610 = vmatprep.mubr.bf16.mxu0 0
  %1611 = vmatmul.mubr.bf16.gmra.mxu0 %v1576
  %v1612 = vpop.f32.mrf.mxu0
  %v1613 = vadd.f32 0.0, %v1612
  %v1614 = vpop.f32.mrf.mxu0
  %v1615 = vpop.f32.mrf.mxu0
  %v1616 = vpop.f32.mrf.mxu0
  %1617 = vdwg.mxu0
  %v1619 = vsel %vm1386, %v1484, 0
  %1621 = vmatprep.subr.bf16.mxu0 0
  %1622 = vmatpush1.bf16.msra.mxu0 0
  %1623 = vmatprep.subr.bf16.mxu0 0
  %1624 = vmatpush1.bf16.msra.mxu0 0
  %1625 = vmatprep.subr.bf16.mxu0 0
  %1626 = vmatpush1.bf16.msra.mxu0 0
  %1627 = vmatprep.subr.bf16.mxu0 0
  %1628 = vmatpush1.bf16.msra.mxu0 0
  %1629 = vmatprep.subr.bf16.mxu0 0
  %1630 = vmatpush1.bf16.msra.mxu0 0
  %1631 = vmatprep.subr.bf16.mxu0 0
  %1632 = vmatpush1.bf16.msra.mxu0 0
  %1633 = vmatprep.subr.bf16.mxu0 0
  %1634 = vmatpush1.bf16.msra.mxu0 0
  %1635 = vmatprep.subr.bf16.mxu0 0
  %1636 = vmatpush1.bf16.msra.mxu0 %v1137
  %1637 = vmatprep.subr.bf16.mxu0 0
  %1638 = vmatpush2.bf16.msra.mxu0 0
  %1639 = vmatprep.subr.bf16.mxu0 0
  %1640 = vmatpush2.bf16.msra.mxu0 0
  %1641 = vmatprep.subr.bf16.mxu0 0
  %1642 = vmatpush2.bf16.msra.mxu0 0
  %1643 = vmatprep.subr.bf16.mxu0 0
  %1644 = vmatpush2.bf16.msra.mxu0 0
  %1645 = vmatprep.subr.bf16.mxu0 0
  %1646 = vmatpush2.bf16.msra.mxu0 0
  %1647 = vmatprep.subr.bf16.mxu0 0
  %1648 = vmatpush2.bf16.msra.mxu0 0
  %1649 = vmatprep.subr.bf16.mxu0 0
  %1650 = vmatpush2.bf16.msra.mxu0 0
  %1651 = vmatprep.subr.bf16.mxu0 0
  %1652 = vmatpush2.bf16.msra.mxu0 0
  %1653 = vmatprep.mubr.bf16.mxu0 0
  %1654 = vmatmul.mubr.bf16.gmra.mxu0 %v1619
  %v1655 = vpop.f32.mrf.mxu0
  %v1656 = vadd.f32 0.0, %v1655
  %v1657 = vpop.f32.mrf.mxu0
  %v1658 = vpop.f32.mrf.mxu0
  %v1659 = vpop.f32.mrf.mxu0
  %1660 = vdwg.mxu0
  %v1662 = vsel %vm1386, %v1485, 0
  %1664 = vmatprep.subr.bf16.mxu0 0
  %1665 = vmatpush1.bf16.msra.mxu0 0
  %1666 = vmatprep.subr.bf16.mxu0 0
  %1667 = vmatpush1.bf16.msra.mxu0 0
  %1668 = vmatprep.subr.bf16.mxu0 0
  %1669 = vmatpush1.bf16.msra.mxu0 0
  %1670 = vmatprep.subr.bf16.mxu0 0
  %1671 = vmatpush1.bf16.msra.mxu0 0
  %1672 = vmatprep.subr.bf16.mxu0 0
  %1673 = vmatpush1.bf16.msra.mxu0 0
  %1674 = vmatprep.subr.bf16.mxu0 0
  %1675 = vmatpush1.bf16.msra.mxu0 0
  %1676 = vmatprep.subr.bf16.mxu0 0
  %1677 = vmatpush1.bf16.msra.mxu0 0
  %1678 = vmatprep.subr.bf16.mxu0 0
  %1679 = vmatpush1.bf16.msra.mxu0 %v1183
  %1680 = vmatprep.subr.bf16.mxu0 0
  %1681 = vmatpush2.bf16.msra.mxu0 0
  %1682 = vmatprep.subr.bf16.mxu0 0
  %1683 = vmatpush2.bf16.msra.mxu0 0
  %1684 = vmatprep.subr.bf16.mxu0 0
  %1685 = vmatpush2.bf16.msra.mxu0 0
  %1686 = vmatprep.subr.bf16.mxu0 0
  %1687 = vmatpush2.bf16.msra.mxu0 0
  %1688 = vmatprep.subr.bf16.mxu0 0
  %1689 = vmatpush2.bf16.msra.mxu0 0
  %1690 = vmatprep.subr.bf16.mxu0 0
  %1691 = vmatpush2.bf16.msra.mxu0 0
  %1692 = vmatprep.subr.bf16.mxu0 0
  %1693 = vmatpush2.bf16.msra.mxu0 0
  %1694 = vmatprep.subr.bf16.mxu0 0
  %1695 = vmatpush2.bf16.msra.mxu0 0
  %1696 = vmatprep.mubr.bf16.mxu0 0
  %1697 = vmatmul.mubr.bf16.gmra.mxu0 %v1662
  %v1698 = vpop.f32.mrf.mxu0
  %v1699 = vadd.f32 0.0, %v1698
  %v1700 = vpop.f32.mrf.mxu0
  %v1701 = vpop.f32.mrf.mxu0
  %v1702 = vpop.f32.mrf.mxu0
  %1703 = vdwg.mxu0
  %v1705 = vsel %vm1386, %v1486, 0
  %1707 = vmatprep.subr.bf16.mxu0 0
  %1708 = vmatpush1.bf16.msra.mxu0 0
  %1709 = vmatprep.subr.bf16.mxu0 0
  %1710 = vmatpush1.bf16.msra.mxu0 0
  %1711 = vmatprep.subr.bf16.mxu0 0
  %1712 = vmatpush1.bf16.msra.mxu0 0
  %1713 = vmatprep.subr.bf16.mxu0 0
  %1714 = vmatpush1.bf16.msra.mxu0 0
  %1715 = vmatprep.subr.bf16.mxu0 0
  %1716 = vmatpush1.bf16.msra.mxu0 0
  %1717 = vmatprep.subr.bf16.mxu0 0
  %1718 = vmatpush1.bf16.msra.mxu0 0
  %1719 = vmatprep.subr.bf16.mxu0 0
  %1720 = vmatpush1.bf16.msra.mxu0 0
  %1721 = vmatprep.subr.bf16.mxu0 0
  %1722 = vmatpush1.bf16.msra.mxu0 %v1229
  %1723 = vmatprep.subr.bf16.mxu0 0
  %1724 = vmatpush2.bf16.msra.mxu0 0
  %1725 = vmatprep.subr.bf16.mxu0 0
  %1726 = vmatpush2.bf16.msra.mxu0 0
  %1727 = vmatprep.subr.bf16.mxu0 0
  %1728 = vmatpush2.bf16.msra.mxu0 0
  %1729 = vmatprep.subr.bf16.mxu0 0
  %1730 = vmatpush2.bf16.msra.mxu0 0
  %1731 = vmatprep.subr.bf16.mxu0 0
  %1732 = vmatpush2.bf16.msra.mxu0 0
  %1733 = vmatprep.subr.bf16.mxu0 0
  %1734 = vmatpush2.bf16.msra.mxu0 0
  %1735 = vmatprep.subr.bf16.mxu0 0
  %1736 = vmatpush2.bf16.msra.mxu0 0
  %1737 = vmatprep.subr.bf16.mxu0 0
  %1738 = vmatpush2.bf16.msra.mxu0 0
  %1739 = vmatprep.mubr.bf16.mxu0 0
  %1740 = vmatmul.mubr.bf16.gmra.mxu0 %v1705
  %v1741 = vpop.f32.mrf.mxu0
  %v1742 = vadd.f32 0.0, %v1741
  %v1743 = vpop.f32.mrf.mxu0
  %v1744 = vpop.f32.mrf.mxu0
  %v1745 = vpop.f32.mrf.mxu0
  %1746 = vdwg.mxu0
  %v1748 = vsel %vm1386, %v1487, 0
  %1750 = vmatprep.subr.bf16.mxu0 0
  %1751 = vmatpush1.bf16.msra.mxu0 0
  %1752 = vmatprep.subr.bf16.mxu0 0
  %1753 = vmatpush1.bf16.msra.mxu0 0
  %1754 = vmatprep.subr.bf16.mxu0 0
  %1755 = vmatpush1.bf16.msra.mxu0 0
  %1756 = vmatprep.subr.bf16.mxu0 0
  %1757 = vmatpush1.bf16.msra.mxu0 0
  %1758 = vmatprep.subr.bf16.mxu0 0
  %1759 = vmatpush1.bf16.msra.mxu0 0
  %1760 = vmatprep.subr.bf16.mxu0 0
  %1761 = vmatpush1.bf16.msra.mxu0 0
  %1762 = vmatprep.subr.bf16.mxu0 0
  %1763 = vmatpush1.bf16.msra.mxu0 0
  %1764 = vmatprep.subr.bf16.mxu0 0
  %1765 = vmatpush1.bf16.msra.mxu0 %v1275
  %1766 = vmatprep.subr.bf16.mxu0 0
  %1767 = vmatpush2.bf16.msra.mxu0 0
  %1768 = vmatprep.subr.bf16.mxu0 0
  %1769 = vmatpush2.bf16.msra.mxu0 0
  %1770 = vmatprep.subr.bf16.mxu0 0
  %1771 = vmatpush2.bf16.msra.mxu0 0
  %1772 = vmatprep.subr.bf16.mxu0 0
  %1773 = vmatpush2.bf16.msra.mxu0 0
  %1774 = vmatprep.subr.bf16.mxu0 0
  %1775 = vmatpush2.bf16.msra.mxu0 0
  %1776 = vmatprep.subr.bf16.mxu0 0
  %1777 = vmatpush2.bf16.msra.mxu0 0
  %1778 = vmatprep.subr.bf16.mxu0 0
  %1779 = vmatpush2.bf16.msra.mxu0 0
  %1780 = vmatprep.subr.bf16.mxu0 0
  %1781 = vmatpush2.bf16.msra.mxu0 0
  %1782 = vmatprep.mubr.bf16.mxu0 0
  %1783 = vmatmul.mubr.bf16.gmra.mxu0 %v1748
  %v1784 = vpop.f32.mrf.mxu0
  %v1785 = vadd.f32 0.0, %v1784
  %v1786 = vpop.f32.mrf.mxu0
  %v1787 = vpop.f32.mrf.mxu0
  %v1788 = vpop.f32.mrf.mxu0
  %1789 = vdwg.mxu0
  %v1791 = vsel %vm1386, %v1488, 0
  %1793 = vmatprep.subr.bf16.mxu0 0
  %1794 = vmatpush1.bf16.msra.mxu0 0
  %1795 = vmatprep.subr.bf16.mxu0 0
  %1796 = vmatpush1.bf16.msra.mxu0 0
  %1797 = vmatprep.subr.bf16.mxu0 0
  %1798 = vmatpush1.bf16.msra.mxu0 0
  %1799 = vmatprep.subr.bf16.mxu0 0
  %1800 = vmatpush1.bf16.msra.mxu0 0
  %1801 = vmatprep.subr.bf16.mxu0 0
  %1802 = vmatpush1.bf16.msra.mxu0 0
  %1803 = vmatprep.subr.bf16.mxu0 0
  %1804 = vmatpush1.bf16.msra.mxu0 0
  %1805 = vmatprep.subr.bf16.mxu0 0
  %1806 = vmatpush1.bf16.msra.mxu0 0
  %1807 = vmatprep.subr.bf16.mxu0 0
  %1808 = vmatpush1.bf16.msra.mxu0 %v1321
  %1809 = vmatprep.subr.bf16.mxu0 0
  %1810 = vmatpush2.bf16.msra.mxu0 0
  %1811 = vmatprep.subr.bf16.mxu0 0
  %1812 = vmatpush2.bf16.msra.mxu0 0
  %1813 = vmatprep.subr.bf16.mxu0 0
  %1814 = vmatpush2.bf16.msra.mxu0 0
  %1815 = vmatprep.subr.bf16.mxu0 0
  %1816 = vmatpush2.bf16.msra.mxu0 0
  %1817 = vmatprep.subr.bf16.mxu0 0
  %1818 = vmatpush2.bf16.msra.mxu0 0
  %1819 = vmatprep.subr.bf16.mxu0 0
  %1820 = vmatpush2.bf16.msra.mxu0 0
  %1821 = vmatprep.subr.bf16.mxu0 0
  %1822 = vmatpush2.bf16.msra.mxu0 0
  %1823 = vmatprep.subr.bf16.mxu0 0
  %1824 = vmatpush2.bf16.msra.mxu0 0
  %1825 = vmatprep.mubr.bf16.mxu0 0
  %1826 = vmatmul.mubr.bf16.gmra.mxu0 %v1791
  %v1827 = vpop.f32.mrf.mxu0
  %v1828 = vadd.f32 0.0, %v1827
  %v1829 = vpop.f32.mrf.mxu0
  %v1830 = vpop.f32.mrf.mxu0
  %v1831 = vpop.f32.mrf.mxu0
  %1832 = vdwg.mxu0
  %v1841 = vrot.slane %v714, 7
  %v1842 = vsel %vm502, %v1841, %v668
  %v1843 = vrot.slane %v760, 6
  %v1844 = vsel %vm505, %v1843, %v1842
  %v1845 = vrot.slane %v806, 5
  %v1846 = vsel %vm508, %v1845, %v1844
  %v1847 = vrot.slane %v852, 4
  %v1848 = vsel %vm511, %v1847, %v1846
  %v1849 = vrot.slane %v898, 3
  %v1850 = vsel %vm514, %v1849, %v1848
  %v1851 = vrot.slane %v944, 2
  %v1852 = vsel %vm517, %v1851, %v1850
  %v1853 = vrot.slane %v990, 1
  %v1854 = vsel %vm520, %v1853, %v1852
  %v1864 = vrot.slane %v1570, 7
  %v1865 = vsel %vm502, %v1864, %v1527
  %v1866 = vrot.slane %v1613, 6
  %v1867 = vsel %vm505, %v1866, %v1865
  %v1868 = vrot.slane %v1656, 5
  %v1869 = vsel %vm508, %v1868, %v1867
  %v1870 = vrot.slane %v1699, 4
  %v1871 = vsel %vm511, %v1870, %v1869
  %v1872 = vrot.slane %v1742, 3
  %v1873 = vsel %vm514, %v1872, %v1871
  %v1874 = vrot.slane %v1785, 2
  %v1875 = vsel %vm517, %v1874, %v1873
  %v1876 = vrot.slane %v1828, 1
  %v1877 = vsel %vm520, %v1876, %v1875
  %v1879 = vpack.c.bf16 %v41, %v41
  %v1880 = vpack.c.bf16 %v1854, %v1854
  %v1881 = vpack.c.bf16 %v1877, %v1877
  %v1882 = vld [vmem:[%s6] sm:$0xff]
  %v1883 = vld [vmem:[%s6 + $0x8] sm:$0xff]
  %v1884 = vld [vmem:[%s6 + $0x10] sm:$0xff]
  %v1885 = vld [vmem:[%s6 + $0x18] sm:$0xff]
  %v1886 = vld [vmem:[%s6 + $0x20] sm:$0xff]
  %v1887 = vld [vmem:[%s6 + $0x28] sm:$0xff]
  %v1888 = vld [vmem:[%s6 + $0x30] sm:$0xff]
  %v1889 = vld [vmem:[%s6 + $0x38] sm:$0xff]
  %v1890 = vld [vmem:[%s6 + $0x40] sm:$0xff]
  %v1891 = vld [vmem:[%s6 + $0x48] sm:$0xff]
  %v1892 = vld [vmem:[%s6 + $0x50] sm:$0xff]
  %v1893 = vld [vmem:[%s6 + $0x58] sm:$0xff]
  %v1894 = vld [vmem:[%s6 + $0x60] sm:$0xff]
  %v1895 = vld [vmem:[%s6 + $0x68] sm:$0xff]
  %v1896 = vld [vmem:[%s6 + $0x70] sm:$0xff]
  %v1897 = vld [vmem:[%s6 + $0x78] sm:$0xff]
  %v1898 = vld [vmem:[%s6 + $0x80] sm:$0xff]
  %v1899 = vld [vmem:[%s6 + $0x88] sm:$0xff]
  %v1900 = vld [vmem:[%s6 + $0x90] sm:$0xff]
  %v1901 = vld [vmem:[%s6 + $0x98] sm:$0xff]
  %v1902 = vld [vmem:[%s6 + $0xa0] sm:$0xff]
  %v1903 = vld [vmem:[%s6 + $0xa8] sm:$0xff]
  %v1904 = vld [vmem:[%s6 + $0xb0] sm:$0xff]
  %v1905 = vld [vmem:[%s6 + $0xb8] sm:$0xff]
  %v1906 = vld [vmem:[%s6 + $0xc0] sm:$0xff]
  %v1907 = vld [vmem:[%s6 + $0xc8] sm:$0xff]
  %v1908 = vld [vmem:[%s6 + $0xd0] sm:$0xff]
  %v1909 = vld [vmem:[%s6 + $0xd8] sm:$0xff]
  %v1910 = vld [vmem:[%s6 + $0xe0] sm:$0xff]
  %v1911 = vld [vmem:[%s6 + $0xe8] sm:$0xff]
  %v1912 = vld [vmem:[%s6 + $0xf0] sm:$0xff]
  %v1913 = vld [vmem:[%s6 + $0xf8] sm:$0xff]
  %v1914 = vld [vmem:[%s6 + $0x100] sm:$0xff]
  %v1915 = vld [vmem:[%s6 + $0x108] sm:$0xff]
  %v1916 = vld [vmem:[%s6 + $0x110] sm:$0xff]
  %v1917 = vld [vmem:[%s6 + $0x118] sm:$0xff]
  %v1918 = vld [vmem:[%s6 + $0x120] sm:$0xff]
  %v1919 = vld [vmem:[%s6 + $0x128] sm:$0xff]
  %v1920 = vld [vmem:[%s6 + $0x130] sm:$0xff]
  %v1921 = vld [vmem:[%s6 + $0x138] sm:$0xff]
  %v1922 = vld [vmem:[%s6 + $0x140] sm:$0xff]
  %v1923 = vld [vmem:[%s6 + $0x148] sm:$0xff]
  %v1924 = vld [vmem:[%s6 + $0x150] sm:$0xff]
  %v1925 = vld [vmem:[%s6 + $0x158] sm:$0xff]
  %v1926 = vld [vmem:[%s6 + $0x160] sm:$0xff]
  %v1927 = vld [vmem:[%s6 + $0x168] sm:$0xff]
  %v1928 = vld [vmem:[%s6 + $0x170] sm:$0xff]
  %v1929 = vld [vmem:[%s6 + $0x178] sm:$0xff]
  %v1930 = vld [vmem:[%s6 + $0x180] sm:$0xff]
  %v1931 = vld [vmem:[%s6 + $0x188] sm:$0xff]
  %v1932 = vld [vmem:[%s6 + $0x190] sm:$0xff]
  %v1933 = vld [vmem:[%s6 + $0x198] sm:$0xff]
  %v1934 = vld [vmem:[%s6 + $0x1a0] sm:$0xff]
  %v1935 = vld [vmem:[%s6 + $0x1a8] sm:$0xff]
  %v1936 = vld [vmem:[%s6 + $0x1b0] sm:$0xff]
  %v1937 = vld [vmem:[%s6 + $0x1b8] sm:$0xff]
  %v1938 = vld [vmem:[%s6 + $0x1c0] sm:$0xff]
  %v1939 = vld [vmem:[%s6 + $0x1c8] sm:$0xff]
  %v1940 = vld [vmem:[%s6 + $0x1d0] sm:$0xff]
  %v1941 = vld [vmem:[%s6 + $0x1d8] sm:$0xff]
  %v1942 = vld [vmem:[%s6 + $0x1e0] sm:$0xff]
  %v1943 = vld [vmem:[%s6 + $0x1e8] sm:$0xff]
  %v1944 = vld [vmem:[%s6 + $0x1f0] sm:$0xff]
  %v1945 = vld [vmem:[%s6 + $0x1f8] sm:$0xff]
  %v1946 = vld [vmem:[%s6 + $0x200] sm:$0xff]
  %v1947 = vld [vmem:[%s6 + $0x208] sm:$0xff]
  %v1948 = vld [vmem:[%s6 + $0x210] sm:$0xff]
  %v1949 = vld [vmem:[%s6 + $0x218] sm:$0xff]
  %v1950 = vld [vmem:[%s6 + $0x220] sm:$0xff]
  %v1951 = vld [vmem:[%s6 + $0x228] sm:$0xff]
  %v1952 = vld [vmem:[%s6 + $0x230] sm:$0xff]
  %v1953 = vld [vmem:[%s6 + $0x238] sm:$0xff]
  %v1954 = vld [vmem:[%s6 + $0x240] sm:$0xff]
  %v1955 = vld [vmem:[%s6 + $0x248] sm:$0xff]
  %v1956 = vld [vmem:[%s6 + $0x250] sm:$0xff]
  %v1957 = vld [vmem:[%s6 + $0x258] sm:$0xff]
  %v1958 = vld [vmem:[%s6 + $0x260] sm:$0xff]
  %v1959 = vld [vmem:[%s6 + $0x268] sm:$0xff]
  %v1960 = vld [vmem:[%s6 + $0x270] sm:$0xff]
  %v1961 = vld [vmem:[%s6 + $0x278] sm:$0xff]
  %v1962 = vld [vmem:[%s6 + $0x280] sm:$0xff]
  %v1963 = vld [vmem:[%s6 + $0x288] sm:$0xff]
  %v1964 = vld [vmem:[%s6 + $0x290] sm:$0xff]
  %v1965 = vld [vmem:[%s6 + $0x298] sm:$0xff]
  %v1966 = vld [vmem:[%s6 + $0x2a0] sm:$0xff]
  %v1967 = vld [vmem:[%s6 + $0x2a8] sm:$0xff]
  %v1968 = vld [vmem:[%s6 + $0x2b0] sm:$0xff]
  %v1969 = vld [vmem:[%s6 + $0x2b8] sm:$0xff]
  %v1970 = vld [vmem:[%s6 + $0x2c0] sm:$0xff]
  %v1971 = vld [vmem:[%s6 + $0x2c8] sm:$0xff]
  %v1972 = vld [vmem:[%s6 + $0x2d0] sm:$0xff]
  %v1973 = vld [vmem:[%s6 + $0x2d8] sm:$0xff]
  %v1974 = vld [vmem:[%s6 + $0x2e0] sm:$0xff]
  %v1975 = vld [vmem:[%s6 + $0x2e8] sm:$0xff]
  %v1976 = vld [vmem:[%s6 + $0x2f0] sm:$0xff]
  %v1977 = vld [vmem:[%s6 + $0x2f8] sm:$0xff]
  %v1978 = vld [vmem:[%s6 + $0x300] sm:$0xff]
  %v1979 = vld [vmem:[%s6 + $0x308] sm:$0xff]
  %v1980 = vld [vmem:[%s6 + $0x310] sm:$0xff]
  %v1981 = vld [vmem:[%s6 + $0x318] sm:$0xff]
  %v1982 = vld [vmem:[%s6 + $0x320] sm:$0xff]
  %v1983 = vld [vmem:[%s6 + $0x328] sm:$0xff]
  %v1984 = vld [vmem:[%s6 + $0x330] sm:$0xff]
  %v1985 = vld [vmem:[%s6 + $0x338] sm:$0xff]
  %v1986 = vld [vmem:[%s6 + $0x340] sm:$0xff]
  %v1987 = vld [vmem:[%s6 + $0x348] sm:$0xff]
  %v1988 = vld [vmem:[%s6 + $0x350] sm:$0xff]
  %v1989 = vld [vmem:[%s6 + $0x358] sm:$0xff]
  %v1990 = vld [vmem:[%s6 + $0x360] sm:$0xff]
  %v1991 = vld [vmem:[%s6 + $0x368] sm:$0xff]
  %v1992 = vld [vmem:[%s6 + $0x370] sm:$0xff]
  %v1993 = vld [vmem:[%s6 + $0x378] sm:$0xff]
  %v1994 = vld [vmem:[%s6 + $0x380] sm:$0xff]
  %v1995 = vld [vmem:[%s6 + $0x388] sm:$0xff]
  %v1996 = vld [vmem:[%s6 + $0x390] sm:$0xff]
  %v1997 = vld [vmem:[%s6 + $0x398] sm:$0xff]
  %v1998 = vld [vmem:[%s6 + $0x3a0] sm:$0xff]
  %v1999 = vld [vmem:[%s6 + $0x3a8] sm:$0xff]
  %v2000 = vld [vmem:[%s6 + $0x3b0] sm:$0xff]
  %v2001 = vld [vmem:[%s6 + $0x3b8] sm:$0xff]
  %v2002 = vld [vmem:[%s6 + $0x3c0] sm:$0xff]
  %v2003 = vld [vmem:[%s6 + $0x3c8] sm:$0xff]
  %v2004 = vld [vmem:[%s6 + $0x3d0] sm:$0xff]
  %v2005 = vld [vmem:[%s6 + $0x3d8] sm:$0xff]
  %v2006 = vld [vmem:[%s6 + $0x3e0] sm:$0xff]
  %v2007 = vld [vmem:[%s6 + $0x3e8] sm:$0xff]
  %v2008 = vld [vmem:[%s6 + $0x3f0] sm:$0xff]
  %v2009 = vld [vmem:[%s6 + $0x3f8] sm:$0xff]
  %v2010 = vld [vmem:[%s7] sm:$0xf]
  %v2012 = vlaneseq
  %v2013 = vshrl.u32 %v2012, 7
  %v2014 = vsub.s32 0, %v2013
  %v2015 = vrot.slane %v2010, %v2014
  %v2016 = vlaneseq
  %v2017 = vshrl.u32 %v2016, 7
  %v2018 = vsub.s32 1, %v2017
  %v2019 = vrot.slane %v2010, %v2018
  %v2020 = vlaneseq
  %v2021 = vshrl.u32 %v2020, 7
  %v2022 = vsub.s32 2, %v2021
  %v2023 = vrot.slane %v2010, %v2022
  %v2024 = vlaneseq
  %v2025 = vshrl.u32 %v2024, 7
  %v2026 = vsub.s32 3, %v2025
  %v2027 = vrot.slane %v2010, %v2026
  %v2160 = vunpack.c.l.b16 %v1882
  %v2161 = vunpack.c.h.b16 %v1882
  %v2162 = vunpack.c.l.b16 %v1883
  %v2163 = vunpack.c.h.b16 %v1883
  %v2164 = vunpack.c.l.b16 %v1884
  %v2165 = vunpack.c.h.b16 %v1884
  %v2166 = vunpack.c.l.b16 %v1885
  %v2167 = vunpack.c.h.b16 %v1885
  %v2168 = vunpack.c.l.b16 %v1886
  %v2169 = vunpack.c.h.b16 %v1886
  %v2170 = vunpack.c.l.b16 %v1887
  %v2171 = vunpack.c.h.b16 %v1887
  %v2172 = vunpack.c.l.b16 %v1888
  %v2173 = vunpack.c.h.b16 %v1888
  %v2174 = vunpack.c.l.b16 %v1889
  %v2175 = vunpack.c.h.b16 %v1889
  %v2176 = vunpack.c.l.b16 %v1890
  %v2177 = vunpack.c.h.b16 %v1890
  %v2178 = vunpack.c.l.b16 %v1891
  %v2179 = vunpack.c.h.b16 %v1891
  %v2180 = vunpack.c.l.b16 %v1892
  %v2181 = vunpack.c.h.b16 %v1892
  %v2182 = vunpack.c.l.b16 %v1893
  %v2183 = vunpack.c.h.b16 %v1893
  %v2184 = vunpack.c.l.b16 %v1894
  %v2185 = vunpack.c.h.b16 %v1894
  %v2186 = vunpack.c.l.b16 %v1895
  %v2187 = vunpack.c.h.b16 %v1895
  %v2188 = vunpack.c.l.b16 %v1896
  %v2189 = vunpack.c.h.b16 %v1896
  %v2190 = vunpack.c.l.b16 %v1897
  %v2191 = vunpack.c.h.b16 %v1897
  %v2192 = vunpack.c.l.b16 %v1898
  %v2193 = vunpack.c.h.b16 %v1898
  %v2194 = vunpack.c.l.b16 %v1899
  %v2195 = vunpack.c.h.b16 %v1899
  %v2196 = vunpack.c.l.b16 %v1900
  %v2197 = vunpack.c.h.b16 %v1900
  %v2198 = vunpack.c.l.b16 %v1901
  %v2199 = vunpack.c.h.b16 %v1901
  %v2200 = vunpack.c.l.b16 %v1902
  %v2201 = vunpack.c.h.b16 %v1902
  %v2202 = vunpack.c.l.b16 %v1903
  %v2203 = vunpack.c.h.b16 %v1903
  %v2204 = vunpack.c.l.b16 %v1904
  %v2205 = vunpack.c.h.b16 %v1904
  %v2206 = vunpack.c.l.b16 %v1905
  %v2207 = vunpack.c.h.b16 %v1905
  %v2208 = vunpack.c.l.b16 %v1906
  %v2209 = vunpack.c.h.b16 %v1906
  %v2210 = vunpack.c.l.b16 %v1907
  %v2211 = vunpack.c.h.b16 %v1907
  %v2212 = vunpack.c.l.b16 %v1908
  %v2213 = vunpack.c.h.b16 %v1908
  %v2214 = vunpack.c.l.b16 %v1909
  %v2215 = vunpack.c.h.b16 %v1909
  %v2216 = vunpack.c.l.b16 %v1910
  %v2217 = vunpack.c.h.b16 %v1910
  %v2218 = vunpack.c.l.b16 %v1911
  %v2219 = vunpack.c.h.b16 %v1911
  %v2220 = vunpack.c.l.b16 %v1912
  %v2221 = vunpack.c.h.b16 %v1912
  %v2222 = vunpack.c.l.b16 %v1913
  %v2223 = vunpack.c.h.b16 %v1913
  %v2224 = vunpack.c.l.b16 %v1914
  %v2225 = vunpack.c.h.b16 %v1914
  %v2226 = vunpack.c.l.b16 %v1915
  %v2227 = vunpack.c.h.b16 %v1915
  %v2228 = vunpack.c.l.b16 %v1916
  %v2229 = vunpack.c.h.b16 %v1916
  %v2230 = vunpack.c.l.b16 %v1917
  %v2231 = vunpack.c.h.b16 %v1917
  %v2232 = vunpack.c.l.b16 %v1918
  %v2233 = vunpack.c.h.b16 %v1918
  %v2234 = vunpack.c.l.b16 %v1919
  %v2235 = vunpack.c.h.b16 %v1919
  %v2236 = vunpack.c.l.b16 %v1920
  %v2237 = vunpack.c.h.b16 %v1920
  %v2238 = vunpack.c.l.b16 %v1921
  %v2239 = vunpack.c.h.b16 %v1921
  %v2240 = vunpack.c.l.b16 %v1922
  %v2241 = vunpack.c.h.b16 %v1922
  %v2242 = vunpack.c.l.b16 %v1923
  %v2243 = vunpack.c.h.b16 %v1923
  %v2244 = vunpack.c.l.b16 %v1924
  %v2245 = vunpack.c.h.b16 %v1924
  %v2246 = vunpack.c.l.b16 %v1925
  %v2247 = vunpack.c.h.b16 %v1925
  %v2248 = vunpack.c.l.b16 %v1926
  %v2249 = vunpack.c.h.b16 %v1926
  %v2250 = vunpack.c.l.b16 %v1927
  %v2251 = vunpack.c.h.b16 %v1927
  %v2252 = vunpack.c.l.b16 %v1928
  %v2253 = vunpack.c.h.b16 %v1928
  %v2254 = vunpack.c.l.b16 %v1929
  %v2255 = vunpack.c.h.b16 %v1929
  %v2256 = vunpack.c.l.b16 %v1930
  %v2257 = vunpack.c.h.b16 %v1930
  %v2258 = vunpack.c.l.b16 %v1931
  %v2259 = vunpack.c.h.b16 %v1931
  %v2260 = vunpack.c.l.b16 %v1932
  %v2261 = vunpack.c.h.b16 %v1932
  %v2262 = vunpack.c.l.b16 %v1933
  %v2263 = vunpack.c.h.b16 %v1933
  %v2264 = vunpack.c.l.b16 %v1934
  %v2265 = vunpack.c.h.b16 %v1934
  %v2266 = vunpack.c.l.b16 %v1935
  %v2267 = vunpack.c.h.b16 %v1935
  %v2268 = vunpack.c.l.b16 %v1936
  %v2269 = vunpack.c.h.b16 %v1936
  %v2270 = vunpack.c.l.b16 %v1937
  %v2271 = vunpack.c.h.b16 %v1937
  %v2272 = vunpack.c.l.b16 %v1938
  %v2273 = vunpack.c.h.b16 %v1938
  %v2274 = vunpack.c.l.b16 %v1939
  %v2275 = vunpack.c.h.b16 %v1939
  %v2276 = vunpack.c.l.b16 %v1940
  %v2277 = vunpack.c.h.b16 %v1940
  %v2278 = vunpack.c.l.b16 %v1941
  %v2279 = vunpack.c.h.b16 %v1941
  %v2280 = vunpack.c.l.b16 %v1942
  %v2281 = vunpack.c.h.b16 %v1942
  %v2282 = vunpack.c.l.b16 %v1943
  %v2283 = vunpack.c.h.b16 %v1943
  %v2284 = vunpack.c.l.b16 %v1944
  %v2285 = vunpack.c.h.b16 %v1944
  %v2286 = vunpack.c.l.b16 %v1945
  %v2287 = vunpack.c.h.b16 %v1945
  %v2288 = vunpack.c.l.b16 %v1946
  %v2289 = vunpack.c.h.b16 %v1946
  %v2290 = vunpack.c.l.b16 %v1947
  %v2291 = vunpack.c.h.b16 %v1947
  %v2292 = vunpack.c.l.b16 %v1948
  %v2293 = vunpack.c.h.b16 %v1948
  %v2294 = vunpack.c.l.b16 %v1949
  %v2295 = vunpack.c.h.b16 %v1949
  %v2296 = vunpack.c.l.b16 %v1950
  %v2297 = vunpack.c.h.b16 %v1950
  %v2298 = vunpack.c.l.b16 %v1951
  %v2299 = vunpack.c.h.b16 %v1951
  %v2300 = vunpack.c.l.b16 %v1952
  %v2301 = vunpack.c.h.b16 %v1952
  %v2302 = vunpack.c.l.b16 %v1953
  %v2303 = vunpack.c.h.b16 %v1953
  %v2304 = vunpack.c.l.b16 %v1954
  %v2305 = vunpack.c.h.b16 %v1954
  %v2306 = vunpack.c.l.b16 %v1955
  %v2307 = vunpack.c.h.b16 %v1955
  %v2308 = vunpack.c.l.b16 %v1956
  %v2309 = vunpack.c.h.b16 %v1956
  %v2310 = vunpack.c.l.b16 %v1957
  %v2311 = vunpack.c.h.b16 %v1957
  %v2312 = vunpack.c.l.b16 %v1958
  %v2313 = vunpack.c.h.b16 %v1958
  %v2314 = vunpack.c.l.b16 %v1959
  %v2315 = vunpack.c.h.b16 %v1959
  %v2316 = vunpack.c.l.b16 %v1960
  %v2317 = vunpack.c.h.b16 %v1960
  %v2318 = vunpack.c.l.b16 %v1961
  %v2319 = vunpack.c.h.b16 %v1961
  %v2320 = vunpack.c.l.b16 %v1962
  %v2321 = vunpack.c.h.b16 %v1962
  %v2322 = vunpack.c.l.b16 %v1963
  %v2323 = vunpack.c.h.b16 %v1963
  %v2324 = vunpack.c.l.b16 %v1964
  %v2325 = vunpack.c.h.b16 %v1964
  %v2326 = vunpack.c.l.b16 %v1965
  %v2327 = vunpack.c.h.b16 %v1965
  %v2328 = vunpack.c.l.b16 %v1966
  %v2329 = vunpack.c.h.b16 %v1966
  %v2330 = vunpack.c.l.b16 %v1967
  %v2331 = vunpack.c.h.b16 %v1967
  %v2332 = vunpack.c.l.b16 %v1968
  %v2333 = vunpack.c.h.b16 %v1968
  %v2334 = vunpack.c.l.b16 %v1969
  %v2335 = vunpack.c.h.b16 %v1969
  %v2336 = vunpack.c.l.b16 %v1970
  %v2337 = vunpack.c.h.b16 %v1970
  %v2338 = vunpack.c.l.b16 %v1971
  %v2339 = vunpack.c.h.b16 %v1971
  %v2340 = vunpack.c.l.b16 %v1972
  %v2341 = vunpack.c.h.b16 %v1972
  %v2342 = vunpack.c.l.b16 %v1973
  %v2343 = vunpack.c.h.b16 %v1973
  %v2344 = vunpack.c.l.b16 %v1974
  %v2345 = vunpack.c.h.b16 %v1974
  %v2346 = vunpack.c.l.b16 %v1975
  %v2347 = vunpack.c.h.b16 %v1975
  %v2348 = vunpack.c.l.b16 %v1976
  %v2349 = vunpack.c.h.b16 %v1976
  %v2350 = vunpack.c.l.b16 %v1977
  %v2351 = vunpack.c.h.b16 %v1977
  %v2352 = vunpack.c.l.b16 %v1978
  %v2353 = vunpack.c.h.b16 %v1978
  %v2354 = vunpack.c.l.b16 %v1979
  %v2355 = vunpack.c.h.b16 %v1979
  %v2356 = vunpack.c.l.b16 %v1980
  %v2357 = vunpack.c.h.b16 %v1980
  %v2358 = vunpack.c.l.b16 %v1981
  %v2359 = vunpack.c.h.b16 %v1981
  %v2360 = vunpack.c.l.b16 %v1982
  %v2361 = vunpack.c.h.b16 %v1982
  %v2362 = vunpack.c.l.b16 %v1983
  %v2363 = vunpack.c.h.b16 %v1983
  %v2364 = vunpack.c.l.b16 %v1984
  %v2365 = vunpack.c.h.b16 %v1984
  %v2366 = vunpack.c.l.b16 %v1985
  %v2367 = vunpack.c.h.b16 %v1985
  %v2368 = vunpack.c.l.b16 %v1986
  %v2369 = vunpack.c.h.b16 %v1986
  %v2370 = vunpack.c.l.b16 %v1987
  %v2371 = vunpack.c.h.b16 %v1987
  %v2372 = vunpack.c.l.b16 %v1988
  %v2373 = vunpack.c.h.b16 %v1988
  %v2374 = vunpack.c.l.b16 %v1989
  %v2375 = vunpack.c.h.b16 %v1989
  %v2376 = vunpack.c.l.b16 %v1990
  %v2377 = vunpack.c.h.b16 %v1990
  %v2378 = vunpack.c.l.b16 %v1991
  %v2379 = vunpack.c.h.b16 %v1991
  %v2380 = vunpack.c.l.b16 %v1992
  %v2381 = vunpack.c.h.b16 %v1992
  %v2382 = vunpack.c.l.b16 %v1993
  %v2383 = vunpack.c.h.b16 %v1993
  %v2384 = vunpack.c.l.b16 %v1994
  %v2385 = vunpack.c.h.b16 %v1994
  %v2386 = vunpack.c.l.b16 %v1995
  %v2387 = vunpack.c.h.b16 %v1995
  %v2388 = vunpack.c.l.b16 %v1996
  %v2389 = vunpack.c.h.b16 %v1996
  %v2390 = vunpack.c.l.b16 %v1997
  %v2391 = vunpack.c.h.b16 %v1997
  %v2392 = vunpack.c.l.b16 %v1998
  %v2393 = vunpack.c.h.b16 %v1998
  %v2394 = vunpack.c.l.b16 %v1999
  %v2395 = vunpack.c.h.b16 %v1999
  %v2396 = vunpack.c.l.b16 %v2000
  %v2397 = vunpack.c.h.b16 %v2000
  %v2398 = vunpack.c.l.b16 %v2001
  %v2399 = vunpack.c.h.b16 %v2001
  %v2400 = vunpack.c.l.b16 %v2002
  %v2401 = vunpack.c.h.b16 %v2002
  %v2402 = vunpack.c.l.b16 %v2003
  %v2403 = vunpack.c.h.b16 %v2003
  %v2404 = vunpack.c.l.b16 %v2004
  %v2405 = vunpack.c.h.b16 %v2004
  %v2406 = vunpack.c.l.b16 %v2005
  %v2407 = vunpack.c.h.b16 %v2005
  %v2408 = vunpack.c.l.b16 %v2006
  %v2409 = vunpack.c.h.b16 %v2006
  %v2410 = vunpack.c.l.b16 %v2007
  %v2411 = vunpack.c.h.b16 %v2007
  %v2412 = vunpack.c.l.b16 %v2008
  %v2413 = vunpack.c.h.b16 %v2008
  %v2414 = vunpack.c.l.b16 %v2009
  %v2415 = vunpack.c.h.b16 %v2009
  %v2416 = vpack.c.b16 %v2164, %v2160
  %v2417 = vpack.c.b16 %v2165, %v2161
  %v2418 = vpack.c.b16 %v2166, %v2162
  %v2419 = vpack.c.b16 %v2167, %v2163
  %v2420 = vpack.c.b16 %v2172, %v2168
  %v2421 = vpack.c.b16 %v2173, %v2169
  %v2422 = vpack.c.b16 %v2174, %v2170
  %v2423 = vpack.c.b16 %v2175, %v2171
  %v2424 = vpack.c.b16 %v2180, %v2176
  %v2425 = vpack.c.b16 %v2181, %v2177
  %v2426 = vpack.c.b16 %v2182, %v2178
  %v2427 = vpack.c.b16 %v2183, %v2179
  %v2428 = vpack.c.b16 %v2188, %v2184
  %v2429 = vpack.c.b16 %v2189, %v2185
  %v2430 = vpack.c.b16 %v2190, %v2186
  %v2431 = vpack.c.b16 %v2191, %v2187
  %v2432 = vpack.c.b16 %v2196, %v2192
  %v2433 = vpack.c.b16 %v2197, %v2193
  %v2434 = vpack.c.b16 %v2198, %v2194
  %v2435 = vpack.c.b16 %v2199, %v2195
  %v2436 = vpack.c.b16 %v2204, %v2200
  %v2437 = vpack.c.b16 %v2205, %v2201
  %v2438 = vpack.c.b16 %v2206, %v2202
  %v2439 = vpack.c.b16 %v2207, %v2203
  %v2440 = vpack.c.b16 %v2212, %v2208
  %v2441 = vpack.c.b16 %v2213, %v2209
  %v2442 = vpack.c.b16 %v2214, %v2210
  %v2443 = vpack.c.b16 %v2215, %v2211
  %v2444 = vpack.c.b16 %v2220, %v2216
  %v2445 = vpack.c.b16 %v2221, %v2217
  %v2446 = vpack.c.b16 %v2222, %v2218
  %v2447 = vpack.c.b16 %v2223, %v2219
  %v2448 = vpack.c.b16 %v2228, %v2224
  %v2449 = vpack.c.b16 %v2229, %v2225
  %v2450 = vpack.c.b16 %v2230, %v2226
  %v2451 = vpack.c.b16 %v2231, %v2227
  %v2452 = vpack.c.b16 %v2236, %v2232
  %v2453 = vpack.c.b16 %v2237, %v2233
  %v2454 = vpack.c.b16 %v2238, %v2234
  %v2455 = vpack.c.b16 %v2239, %v2235
  %v2456 = vpack.c.b16 %v2244, %v2240
  %v2457 = vpack.c.b16 %v2245, %v2241
  %v2458 = vpack.c.b16 %v2246, %v2242
  %v2459 = vpack.c.b16 %v2247, %v2243
  %v2460 = vpack.c.b16 %v2252, %v2248
  %v2461 = vpack.c.b16 %v2253, %v2249
  %v2462 = vpack.c.b16 %v2254, %v2250
  %v2463 = vpack.c.b16 %v2255, %v2251
  %v2464 = vpack.c.b16 %v2260, %v2256
  %v2465 = vpack.c.b16 %v2261, %v2257
  %v2466 = vpack.c.b16 %v2262, %v2258
  %v2467 = vpack.c.b16 %v2263, %v2259
  %v2468 = vpack.c.b16 %v2268, %v2264
  %v2469 = vpack.c.b16 %v2269, %v2265
  %v2470 = vpack.c.b16 %v2270, %v2266
  %v2471 = vpack.c.b16 %v2271, %v2267
  %v2472 = vpack.c.b16 %v2276, %v2272
  %v2473 = vpack.c.b16 %v2277, %v2273
  %v2474 = vpack.c.b16 %v2278, %v2274
  %v2475 = vpack.c.b16 %v2279, %v2275
  %v2476 = vpack.c.b16 %v2284, %v2280
  %v2477 = vpack.c.b16 %v2285, %v2281
  %v2478 = vpack.c.b16 %v2286, %v2282
  %v2479 = vpack.c.b16 %v2287, %v2283
  %v2480 = vpack.c.b16 %v2292, %v2288
  %v2481 = vpack.c.b16 %v2293, %v2289
  %v2482 = vpack.c.b16 %v2294, %v2290
  %v2483 = vpack.c.b16 %v2295, %v2291
  %v2484 = vpack.c.b16 %v2300, %v2296
  %v2485 = vpack.c.b16 %v2301, %v2297
  %v2486 = vpack.c.b16 %v2302, %v2298
  %v2487 = vpack.c.b16 %v2303, %v2299
  %v2488 = vpack.c.b16 %v2308, %v2304
  %v2489 = vpack.c.b16 %v2309, %v2305
  %v2490 = vpack.c.b16 %v2310, %v2306
  %v2491 = vpack.c.b16 %v2311, %v2307
  %v2492 = vpack.c.b16 %v2316, %v2312
  %v2493 = vpack.c.b16 %v2317, %v2313
  %v2494 = vpack.c.b16 %v2318, %v2314
  %v2495 = vpack.c.b16 %v2319, %v2315
  %v2496 = vpack.c.b16 %v2324, %v2320
  %v2497 = vpack.c.b16 %v2325, %v2321
  %v2498 = vpack.c.b16 %v2326, %v2322
  %v2499 = vpack.c.b16 %v2327, %v2323
  %v2500 = vpack.c.b16 %v2332, %v2328
  %v2501 = vpack.c.b16 %v2333, %v2329
  %v2502 = vpack.c.b16 %v2334, %v2330
  %v2503 = vpack.c.b16 %v2335, %v2331
  %v2504 = vpack.c.b16 %v2340, %v2336
  %v2505 = vpack.c.b16 %v2341, %v2337
  %v2506 = vpack.c.b16 %v2342, %v2338
  %v2507 = vpack.c.b16 %v2343, %v2339
  %v2508 = vpack.c.b16 %v2348, %v2344
  %v2509 = vpack.c.b16 %v2349, %v2345
  %v2510 = vpack.c.b16 %v2350, %v2346
  %v2511 = vpack.c.b16 %v2351, %v2347
  %v2512 = vpack.c.b16 %v2356, %v2352
  %v2513 = vpack.c.b16 %v2357, %v2353
  %v2514 = vpack.c.b16 %v2358, %v2354
  %v2515 = vpack.c.b16 %v2359, %v2355
  %v2516 = vpack.c.b16 %v2364, %v2360
  %v2517 = vpack.c.b16 %v2365, %v2361
  %v2518 = vpack.c.b16 %v2366, %v2362
  %v2519 = vpack.c.b16 %v2367, %v2363
  %v2520 = vpack.c.b16 %v2372, %v2368
  %v2521 = vpack.c.b16 %v2373, %v2369
  %v2522 = vpack.c.b16 %v2374, %v2370
  %v2523 = vpack.c.b16 %v2375, %v2371
  %v2524 = vpack.c.b16 %v2380, %v2376
  %v2525 = vpack.c.b16 %v2381, %v2377
  %v2526 = vpack.c.b16 %v2382, %v2378
  %v2527 = vpack.c.b16 %v2383, %v2379
  %v2528 = vpack.c.b16 %v2388, %v2384
  %v2529 = vpack.c.b16 %v2389, %v2385
  %v2530 = vpack.c.b16 %v2390, %v2386
  %v2531 = vpack.c.b16 %v2391, %v2387
  %v2532 = vpack.c.b16 %v2396, %v2392
  %v2533 = vpack.c.b16 %v2397, %v2393
  %v2534 = vpack.c.b16 %v2398, %v2394
  %v2535 = vpack.c.b16 %v2399, %v2395
  %v2536 = vpack.c.b16 %v2404, %v2400
  %v2537 = vpack.c.b16 %v2405, %v2401
  %v2538 = vpack.c.b16 %v2406, %v2402
  %v2539 = vpack.c.b16 %v2407, %v2403
  %v2540 = vpack.c.b16 %v2412, %v2408
  %v2541 = vpack.c.b16 %v2413, %v2409
  %v2542 = vpack.c.b16 %v2414, %v2410
  %v2543 = vpack.c.b16 %v2415, %v2411
  %2672 = vmatprep.subr.bf16.mxu0 %v2445
  %2673 = vmatpush1.bf16.msra.mxu0 %v2444
  %2674 = vmatprep.subr.bf16.mxu0 %v2441
  %2675 = vmatpush1.bf16.msra.mxu0 %v2440
  %2676 = vmatprep.subr.bf16.mxu0 %v2437
  %2677 = vmatpush1.bf16.msra.mxu0 %v2436
  %2678 = vmatprep.subr.bf16.mxu0 %v2433
  %2679 = vmatpush1.bf16.msra.mxu0 %v2432
  %2680 = vmatprep.subr.bf16.mxu0 %v2429
  %2681 = vmatpush1.bf16.msra.mxu0 %v2428
  %2682 = vmatprep.subr.bf16.mxu0 %v2425
  %2683 = vmatpush1.bf16.msra.mxu0 %v2424
  %2684 = vmatprep.subr.bf16.mxu0 %v2421
  %2685 = vmatpush1.bf16.msra.mxu0 %v2420
  %2686 = vmatprep.subr.bf16.mxu0 %v2417
  %2687 = vmatpush1.bf16.msra.mxu0 %v2416
  %2688 = vmatprep.subr.bf16.mxu0 %v2477
  %2689 = vmatpush2.bf16.msra.mxu0 %v2476
  %2690 = vmatprep.subr.bf16.mxu0 %v2473
  %2691 = vmatpush2.bf16.msra.mxu0 %v2472
  %2692 = vmatprep.subr.bf16.mxu0 %v2469
  %2693 = vmatpush2.bf16.msra.mxu0 %v2468
  %2694 = vmatprep.subr.bf16.mxu0 %v2465
  %2695 = vmatpush2.bf16.msra.mxu0 %v2464
  %2696 = vmatprep.subr.bf16.mxu0 %v2461
  %2697 = vmatpush2.bf16.msra.mxu0 %v2460
  %2698 = vmatprep.subr.bf16.mxu0 %v2457
  %2699 = vmatpush2.bf16.msra.mxu0 %v2456
  %2700 = vmatprep.subr.bf16.mxu0 %v2453
  %2701 = vmatpush2.bf16.msra.mxu0 %v2452
  %2702 = vmatprep.subr.bf16.mxu0 %v2449
  %2703 = vmatpush2.bf16.msra.mxu0 %v2448
  %2704 = vmatprep.mubr.bf16.mxu0 %v1880
  %2705 = vmatmul.mubr.bf16.gmra.mxu0 %v1879
  %v2706 = vpop.f32.mrf.mxu0
  %v2707 = vadd.f32 %v2015, %v2706
  %v2708 = vpop.f32.mrf.mxu0
  %v2709 = vadd.f32 %v2019, %v2708
  %v2710 = vpop.f32.mrf.mxu0
  %v2711 = vpop.f32.mrf.mxu0
  %2712 = vdwg.mxu0
  %2713 = vmatprep.subr.bf16.mxu0 %v2509
  %2714 = vmatpush1.bf16.msra.mxu0 %v2508
  %2715 = vmatprep.subr.bf16.mxu0 %v2505
  %2716 = vmatpush1.bf16.msra.mxu0 %v2504
  %2717 = vmatprep.subr.bf16.mxu0 %v2501
  %2718 = vmatpush1.bf16.msra.mxu0 %v2500
  %2719 = vmatprep.subr.bf16.mxu0 %v2497
  %2720 = vmatpush1.bf16.msra.mxu0 %v2496
  %2721 = vmatprep.subr.bf16.mxu0 %v2493
  %2722 = vmatpush1.bf16.msra.mxu0 %v2492
  %2723 = vmatprep.subr.bf16.mxu0 %v2489
  %2724 = vmatpush1.bf16.msra.mxu0 %v2488
  %2725 = vmatprep.subr.bf16.mxu0 %v2485
  %2726 = vmatpush1.bf16.msra.mxu0 %v2484
  %2727 = vmatprep.subr.bf16.mxu0 %v2481
  %2728 = vmatpush1.bf16.msra.mxu0 %v2480
  %2729 = vmatprep.subr.bf16.mxu0 %v2541
  %2730 = vmatpush2.bf16.msra.mxu0 %v2540
  %2731 = vmatprep.subr.bf16.mxu0 %v2537
  %2732 = vmatpush2.bf16.msra.mxu0 %v2536
  %2733 = vmatprep.subr.bf16.mxu0 %v2533
  %2734 = vmatpush2.bf16.msra.mxu0 %v2532
  %2735 = vmatprep.subr.bf16.mxu0 %v2529
  %2736 = vmatpush2.bf16.msra.mxu0 %v2528
  %2737 = vmatprep.subr.bf16.mxu0 %v2525
  %2738 = vmatpush2.bf16.msra.mxu0 %v2524
  %2739 = vmatprep.subr.bf16.mxu0 %v2521
  %2740 = vmatpush2.bf16.msra.mxu0 %v2520
  %2741 = vmatprep.subr.bf16.mxu0 %v2517
  %2742 = vmatpush2.bf16.msra.mxu0 %v2516
  %2743 = vmatprep.subr.bf16.mxu0 %v2513
  %2744 = vmatpush2.bf16.msra.mxu0 %v2512
  %2745 = vmatprep.mubr.bf16.mxu0 %v66
  %2746 = vmatmul.mubr.bf16.gmra.mxu0 %v1881
  %v2747 = vpop.f32.mrf.mxu0
  %v2748 = vadd.f32 %v2707, %v2747
  %v2749 = vpop.f32.mrf.mxu0
  %v2750 = vadd.f32 %v2709, %v2749
  %v2751 = vpop.f32.mrf.mxu0
  %v2752 = vpop.f32.mrf.mxu0
  %2753 = vdwg.mxu0
  %2754 = vmatprep.subr.bf16.mxu0 %v2447
  %2755 = vmatpush1.bf16.msra.mxu0 %v2446
  %2756 = vmatprep.subr.bf16.mxu0 %v2443
  %2757 = vmatpush1.bf16.msra.mxu0 %v2442
  %2758 = vmatprep.subr.bf16.mxu0 %v2439
  %2759 = vmatpush1.bf16.msra.mxu0 %v2438
  %2760 = vmatprep.subr.bf16.mxu0 %v2435
  %2761 = vmatpush1.bf16.msra.mxu0 %v2434
  %2762 = vmatprep.subr.bf16.mxu0 %v2431
  %2763 = vmatpush1.bf16.msra.mxu0 %v2430
  %2764 = vmatprep.subr.bf16.mxu0 %v2427
  %2765 = vmatpush1.bf16.msra.mxu0 %v2426
  %2766 = vmatprep.subr.bf16.mxu0 %v2423
  %2767 = vmatpush1.bf16.msra.mxu0 %v2422
  %2768 = vmatprep.subr.bf16.mxu0 %v2419
  %2769 = vmatpush1.bf16.msra.mxu0 %v2418
  %2770 = vmatprep.subr.bf16.mxu0 %v2479
  %2771 = vmatpush2.bf16.msra.mxu0 %v2478
  %2772 = vmatprep.subr.bf16.mxu0 %v2475
  %2773 = vmatpush2.bf16.msra.mxu0 %v2474
  %2774 = vmatprep.subr.bf16.mxu0 %v2471
  %2775 = vmatpush2.bf16.msra.mxu0 %v2470
  %2776 = vmatprep.subr.bf16.mxu0 %v2467
  %2777 = vmatpush2.bf16.msra.mxu0 %v2466
  %2778 = vmatprep.subr.bf16.mxu0 %v2463
  %2779 = vmatpush2.bf16.msra.mxu0 %v2462
  %2780 = vmatprep.subr.bf16.mxu0 %v2459
  %2781 = vmatpush2.bf16.msra.mxu0 %v2458
  %2782 = vmatprep.subr.bf16.mxu0 %v2455
  %2783 = vmatpush2.bf16.msra.mxu0 %v2454
  %2784 = vmatprep.subr.bf16.mxu0 %v2451
  %2785 = vmatpush2.bf16.msra.mxu0 %v2450
  %2786 = vmatprep.mubr.bf16.mxu0 %v1880
  %2787 = vmatmul.mubr.bf16.gmra.mxu0 %v1879
  %v2788 = vpop.f32.mrf.mxu0
  %v2789 = vadd.f32 %v2023, %v2788
  %v2790 = vpop.f32.mrf.mxu0
  %v2791 = vadd.f32 %v2027, %v2790
  %v2792 = vpop.f32.mrf.mxu0
  %v2793 = vpop.f32.mrf.mxu0
  %2794 = vdwg.mxu0
  %2795 = vmatprep.subr.bf16.mxu0 %v2511
  %2796 = vmatpush1.bf16.msra.mxu0 %v2510
  %2797 = vmatprep.subr.bf16.mxu0 %v2507
  %2798 = vmatpush1.bf16.msra.mxu0 %v2506
  %2799 = vmatprep.subr.bf16.mxu0 %v2503
  %2800 = vmatpush1.bf16.msra.mxu0 %v2502
  %2801 = vmatprep.subr.bf16.mxu0 %v2499
  %2802 = vmatpush1.bf16.msra.mxu0 %v2498
  %2803 = vmatprep.subr.bf16.mxu0 %v2495
  %2804 = vmatpush1.bf16.msra.mxu0 %v2494
  %2805 = vmatprep.subr.bf16.mxu0 %v2491
  %2806 = vmatpush1.bf16.msra.mxu0 %v2490
  %2807 = vmatprep.subr.bf16.mxu0 %v2487
  %2808 = vmatpush1.bf16.msra.mxu0 %v2486
  %2809 = vmatprep.subr.bf16.mxu0 %v2483
  %2810 = vmatpush1.bf16.msra.mxu0 %v2482
  %2811 = vmatprep.subr.bf16.mxu0 %v2543
  %2812 = vmatpush2.bf16.msra.mxu0 %v2542
  %2813 = vmatprep.subr.bf16.mxu0 %v2539
  %2814 = vmatpush2.bf16.msra.mxu0 %v2538
  %2815 = vmatprep.subr.bf16.mxu0 %v2535
  %2816 = vmatpush2.bf16.msra.mxu0 %v2534
  %2817 = vmatprep.subr.bf16.mxu0 %v2531
  %2818 = vmatpush2.bf16.msra.mxu0 %v2530
  %2819 = vmatprep.subr.bf16.mxu0 %v2527
  %2820 = vmatpush2.bf16.msra.mxu0 %v2526
  %2821 = vmatprep.subr.bf16.mxu0 %v2523
  %2822 = vmatpush2.bf16.msra.mxu0 %v2522
  %2823 = vmatprep.subr.bf16.mxu0 %v2519
  %2824 = vmatpush2.bf16.msra.mxu0 %v2518
  %2825 = vmatprep.subr.bf16.mxu0 %v2515
  %2826 = vmatpush2.bf16.msra.mxu0 %v2514
  %2827 = vmatprep.mubr.bf16.mxu0 %v66
  %2828 = vmatmul.mubr.bf16.gmra.mxu0 %v1881
  %v2829 = vpop.f32.mrf.mxu0
  %v2830 = vadd.f32 %v2789, %v2829
  %v2831 = vpop.f32.mrf.mxu0
  %v2832 = vadd.f32 %v2791, %v2831
  %v2833 = vpop.f32.mrf.mxu0
  %v2834 = vpop.f32.mrf.mxu0
  %2835 = vdwg.mxu0
  %v2836 = vxor.u32 %v2748, 2147483648
  %v2837 = vmul.f32 %v2836, 1.442695
  %v2838 = vpow.pop %v2837
  %v2839 = vadd.f32 %v2838, 1.0
  %v2840 = vrcp.pop %v2839
  %v2841 = vmul.f32 1.0, %v2840
  %v2842 = vxor.u32 %v2750, 2147483648
  %v2843 = vmul.f32 %v2842, 1.442695
  %v2844 = vpow.pop %v2843
  %v2845 = vadd.f32 %v2844, 1.0
  %v2846 = vrcp.pop %v2845
  %v2847 = vmul.f32 1.0, %v2846
  %v2848 = vtanh.pop %v2830
  %v2849 = vxor.u32 %v2832, 2147483648
  %v2850 = vmul.f32 %v2849, 1.442695
  %v2851 = vpow.pop %v2850
  %v2852 = vadd.f32 %v2851, 1.0
  %v2853 = vrcp.pop %v2852
  %v2854 = vmul.f32 1.0, %v2853
  %v2855 = vmul.f32 %v2847, %v40
  %v2856 = vmul.f32 %v2841, %v2848
  %v2857 = vadd.f32 %v2855, %v2856
  %v2858 = vtanh.pop %v2857
  %v2859 = vmul.f32 %v2854, %v2858
  %v2860 = vpack.c.bf16 %v2859, %v2859
  %v2861 = vld [vmem:[%s8] sm:$0xf]
  %v2862 = vld [vmem:[%s8 + $0x4] sm:$0xf]
  %v2863 = vld [vmem:[%s8 + $0x8] sm:$0xf]
  %v2864 = vld [vmem:[%s8 + $0xc] sm:$0xf]
  %v2865 = vld [vmem:[%s8 + $0x10] sm:$0xf]
  %v2866 = vld [vmem:[%s8 + $0x14] sm:$0xf]
  %v2867 = vld [vmem:[%s8 + $0x18] sm:$0xf]
  %v2868 = vld [vmem:[%s8 + $0x1c] sm:$0xf]
  %v2869 = vld [vmem:[%s8 + $0x20] sm:$0xf]
  %v2870 = vld [vmem:[%s8 + $0x24] sm:$0xf]
  %v2871 = vld [vmem:[%s8 + $0x28] sm:$0xf]
  %v2872 = vld [vmem:[%s8 + $0x2c] sm:$0xf]
  %v2873 = vld [vmem:[%s8 + $0x30] sm:$0xf]
  %v2874 = vld [vmem:[%s8 + $0x34] sm:$0xf]
  %v2875 = vld [vmem:[%s8 + $0x38] sm:$0xf]
  %v2876 = vld [vmem:[%s8 + $0x3c] sm:$0xf]
  %v2877 = vld [vmem:[%s9] sm:$0x1]
  %v2879 = vlaneseq
  %v2880 = vshrl.u32 %v2879, 7
  %v2881 = vsub.s32 0, %v2880
  %v2882 = vrot.slane %v2877, %v2881
  %v2900 = vunpack.c.l.b16 %v2861
  %v2901 = vunpack.c.l.b16 %v2862
  %v2902 = vunpack.c.l.b16 %v2863
  %v2903 = vunpack.c.l.b16 %v2864
  %v2904 = vunpack.c.l.b16 %v2865
  %v2905 = vunpack.c.l.b16 %v2866
  %v2906 = vunpack.c.l.b16 %v2867
  %v2907 = vunpack.c.l.b16 %v2868
  %v2908 = vunpack.c.l.b16 %v2869
  %v2909 = vunpack.c.l.b16 %v2870
  %v2910 = vunpack.c.l.b16 %v2871
  %v2911 = vunpack.c.l.b16 %v2872
  %v2912 = vunpack.c.l.b16 %v2873
  %v2913 = vunpack.c.l.b16 %v2874
  %v2914 = vunpack.c.l.b16 %v2875
  %v2915 = vunpack.c.l.b16 %v2876
  %v2916 = vpack.c.b16 %v2901, %v2900
  %v2917 = vpack.c.b16 %v2903, %v2902
  %v2918 = vpack.c.b16 %v2905, %v2904
  %v2919 = vpack.c.b16 %v2907, %v2906
  %v2920 = vpack.c.b16 %v2909, %v2908
  %v2921 = vpack.c.b16 %v2911, %v2910
  %v2922 = vpack.c.b16 %v2913, %v2912
  %v2923 = vpack.c.b16 %v2915, %v2914
  %2932 = vmatprep.subr.bf16.mxu0 0
  %2933 = vmatpush1.bf16.msra.mxu0 %v2923
  %2934 = vmatprep.subr.bf16.mxu0 0
  %2935 = vmatpush1.bf16.msra.mxu0 %v2922
  %2936 = vmatprep.subr.bf16.mxu0 0
  %2937 = vmatpush1.bf16.msra.mxu0 %v2921
  %2938 = vmatprep.subr.bf16.mxu0 0
  %2939 = vmatpush1.bf16.msra.mxu0 %v2920
  %2940 = vmatprep.subr.bf16.mxu0 0
  %2941 = vmatpush1.bf16.msra.mxu0 %v2919
  %2942 = vmatprep.subr.bf16.mxu0 0
  %2943 = vmatpush1.bf16.msra.mxu0 %v2918
  %2944 = vmatprep.subr.bf16.mxu0 0
  %2945 = vmatpush1.bf16.msra.mxu0 %v2917
  %2946 = vmatprep.subr.bf16.mxu0 0
  %2947 = vmatpush1.bf16.msra.mxu0 %v2916
  %2948 = vmatprep.subr.bf16.mxu0 0
  %2949 = vmatpush2.bf16.msra.mxu0 0
  %2950 = vmatprep.subr.bf16.mxu0 0
  %2951 = vmatpush2.bf16.msra.mxu0 0
  %2952 = vmatprep.subr.bf16.mxu0 0
  %2953 = vmatpush2.bf16.msra.mxu0 0
  %2954 = vmatprep.subr.bf16.mxu0 0
  %2955 = vmatpush2.bf16.msra.mxu0 0
  %2956 = vmatprep.subr.bf16.mxu0 0
  %2957 = vmatpush2.bf16.msra.mxu0 0
  %2958 = vmatprep.subr.bf16.mxu0 0
  %2959 = vmatpush2.bf16.msra.mxu0 0
  %2960 = vmatprep.subr.bf16.mxu0 0
  %2961 = vmatpush2.bf16.msra.mxu0 0
  %2962 = vmatprep.subr.bf16.mxu0 0
  %2963 = vmatpush2.bf16.msra.mxu0 0
  %2964 = vmatprep.mubr.bf16.mxu0 0
  %2965 = vmatmul.mubr.bf16.gmra.mxu0 %v2860
  %v2966 = vpop.f32.mrf.mxu0
  %v2967 = vadd.f32 %v2882, %v2966
  %v2968 = vpop.f32.mrf.mxu0
  %v2969 = vpop.f32.mrf.mxu0
  %v2970 = vpop.f32.mrf.mxu0
  %2971 = vdwg.mxu0
  %2972 = vmax.xlane.f32.xlu0 %v2967
  %v2973 = vpop.xlane.xlu0 %2972
  %v2974 = vsub.f32 %v2967, %v2973
  %v2975 = vmul.f32 %v2974, 1.442695
  %v2976 = vpow.pop %v2975
  %2977 = vadd.xlane.f32.xlu0 %v2976
  %v2978 = vpop.xlane.xlu0 %2977
  %v2979 = vlog2.pop %v2978
  %v2980 = vmul.f32 %v2979, 0.6931472
  %v2981 = vadd.f32 %v2973, %v2980
  %v2982 = vsub.f32 %v2967, %v2981
  %2983 = vst [vmem:[%s10] sm:$0xff] %v2982
  %2984 = vst [vmem:[%s11] sm:$0xff] %v2859
  %2985 = vst [vmem:[%s12] sm:$0xff] %v2857
  // Predicated region
  $region42: #{_forward_impl.9} parent=0 // pred_check
    _
  $region43: #{_forward_impl.9} parent=0 // pred_check_branch
    %2987 = sbr.rel (0) target = $region45
  $region44: #{_forward_impl.9} parent=0 // pred_region
    _
  $region45: #{_forward_impl.9} parent=0 // pred_fallthru
    _
  // Predicated region
  $region46: #{_forward_impl.9} parent=0 // pred_check
    _
  $region47: #{_forward_impl.9} parent=0 // pred_check_branch
    %2989 = sbr.rel (0) target = $region49
  $region48: #{_forward_impl.9} parent=0 // pred_region
    _
  $region49: #{_forward_impl.9} parent=0 // pred_fallthru
    _
  // Predicated region
  $region50: #{_forward_impl.9} parent=0 // pred_check
    _
  $region51: #{_forward_impl.9} parent=0 // pred_check_branch
    %2991 = sbr.rel (0) target = $region53
  $region52: #{_forward_impl.9} parent=0 // pred_region
    _
  $region53: #{_forward_impl.9} parent=0 // pred_fallthru
    _
  // Predicated region
  $region54: #{_forward_impl.9} parent=0 // pred_check
    _
  $region55: #{_forward_impl.9} parent=0 // pred_check_branch
    %2993 = sbr.rel (0) target = $region57
  $region56: #{_forward_impl.9} parent=0 // pred_region
    _
  $region57: #{_forward_impl.9} parent=0 // pred_fallthru
    _
  // Predicated region
  $region58: #{_forward_impl.9} parent=0 // pred_check
    _
  $region59: #{_forward_impl.9} parent=0 // pred_check_branch
    %2995 = sbr.rel (0) target = $region61
  $region60: #{_forward_impl.9} parent=0 // pred_region
    _
  $region61: #{_forward_impl.9} parent=0 // pred_fallthru
    _
  // Predicated region
  $region62: #{_forward_impl.9} parent=0 // pred_check
    _
  $region63: #{_forward_impl.9} parent=0 // pred_check_branch
    %2997 = sbr.rel (0) target = $region65
  $region64: #{_forward_impl.9} parent=0 // pred_region
    _
  $region65: #{_forward_impl.9} parent=0 // pred_fallthru
    _

</llo_original>
